<compile_context>
chip_gen: v5e
topology: v5e:2x2
jax: 0.10.0
libtpu: 0.0.40
codegen_flags: <defaults>
</compile_context>

<pallas_src>
import numpy as np
import jax
import jax.numpy as jnp
from jax.experimental import pallas as pl
from jax.experimental.pallas import tpu as pltpu


def get_frequency_modes(seq_len, modes=4, mode_select_method='random'):
    modes = min(modes, seq_len // 2)
    if mode_select_method == 'random':
        index = list(range(0, seq_len // 2))
        np.random.shuffle(index)
        index = index[:modes]
    else:
        index = list(range(0, modes))
    index.sort()
    return index


def _analysis_basis_t(L, index):
    """(L, 2M) truncated-rfft basis: cols [0:M)=cos, [M:2M)=-sin ;  x @ basis = [Re | Im]."""
    l = np.arange(L, dtype=np.float64)[:, None]
    j = np.asarray(index, dtype=np.float64)[None, :]
    ang = 2.0 * np.pi * l * j / L
    return np.concatenate([np.cos(ang), -np.sin(ang)], axis=1).astype(np.float32)


def _synthesis_basis(L, index, scale):
    """(2M, L) truncated-irfft basis; folds 1/L, the 2x factor for non-DC/non-Nyquist
    bins and the module's 1/(in*out) scale.  Imag parts of DC/Nyquist bins are
    dropped automatically (their sin rows are identically zero), matching irfft."""
    l = np.arange(L, dtype=np.float64)[None, :]
    j = np.asarray(index, dtype=np.float64)[:, None]
    ang = 2.0 * np.pi * j * l / L
    idx = np.asarray(index)
    wgt = np.where((idx == 0) | (2 * idx == L), 1.0, 2.0)[:, None] * (scale / L)
    return np.concatenate([wgt * np.cos(ang), -(wgt * np.sin(ang))], axis=0).astype(np.float32)


def _pick_batch_tile(B, E, H, O, Lq, Lk, itemsize, budget=40 << 20, max_tile=8):
    """Largest divisor of B (<= max_tile) whose double-buffered blocks fit the budget."""
    best = 1
    for tb in range(1, min(B, max_tile) + 1):
        if B % tb:
            continue
        blocks = tb * H * (E * Lq + E * Lk + O * Lq) * itemsize
        if 2 * blocks <= budget:
            best = tb
    return best


def _make_kernel(TB, E, H, O, Mq, Mkv, Lq, Lk, out_dtype):
    f32 = jnp.float32
    bf16 = jnp.bfloat16

    def kernel(q_ref, k_ref, w_ref, fq_ref, fk_ref, syn_ref, o_ref,
               amr_ref, ami_ref, fr_ref, fi_ref, acc_ref):
        fq = fq_ref[...]           # (Lq, 2*Mq)  bf16, cols [cos | -sin]
        fk = fk_ref[...]           # (Lk, 2*Mkv) bf16
        syn = syn_ref[...]         # (2*Mq, Lq)  bf16 (scales folded)

        for h in range(H):
            # ---- truncated-mode DFT: one large MXU matmul per tensor (rows = TB*E)
            qh = q_ref[:, :, h, :].reshape(TB * E, Lq).astype(bf16)
            kh = k_ref[:, :, h, :].reshape(TB * E, Lk).astype(bf16)
            qf = jnp.dot(qh, fq, preferred_element_type=f32).reshape(TB, E, 2 * Mq)
            kf = jnp.dot(kh, fk, preferred_element_type=f32).reshape(TB, E, 2 * Mkv)

            # (TB, M, E): put the channel dim on lanes for the batched matmuls below
            qr = jnp.swapaxes(qf[:, :, :Mq], 1, 2)     # (TB, Mq,  E)
            qi = jnp.swapaxes(qf[:, :, Mq:], 1, 2)
            kr = jnp.swapaxes(kf[:, :, :Mkv], 1, 2)    # (TB, Mkv, E)
            ki = jnp.swapaxes(kf[:, :, Mkv:], 1, 2)

            # ---- complex scores s[b,x,y] = sum_e q[b,x,e] k[b,y,e]  (no conjugation)
            sr = (jnp.einsum('bxe,bye->bxy', qr, kr, preferred_element_type=f32)
                  - jnp.einsum('bxe,bye->bxy', qi, ki, preferred_element_type=f32))
            si = (jnp.einsum('bxe,bye->bxy', qr, ki, preferred_element_type=f32)
                  + jnp.einsum('bxe,bye->bxy', qi, kr, preferred_element_type=f32))

            # ---- numerically stable complex tanh (single exp; f32)
            en = jnp.exp(-2.0 * jnp.abs(sr))
            c2 = jnp.cos(2.0 * si)
            s2 = jnp.sin(2.0 * si)
            inv = pl.reciprocal(1.0 + en * en + 2.0 * en * c2, approx=True)
            sgn = jnp.where(sr >= 0.0, 1.0, -1.0)
            tr = sgn * (1.0 - en * en) * inv           # (TB, Mq, Mkv)
            ti = (2.0 * en * s2) * inv

            # ---- value contraction a[b,x,e] = sum_y t[b,x,y] k[b,y,e]
            ar = (jnp.einsum('bxy,bye->bxe', tr, kr, preferred_element_type=f32)
                  - jnp.einsum('bxy,bye->bxe', ti, ki, preferred_element_type=f32))
            ai = (jnp.einsum('bxy,bye->bxe', tr, ki, preferred_element_type=f32)
                  + jnp.einsum('bxy,bye->bxe', ti, kr, preferred_element_type=f32))

            # ---- (b, x, e) -> (x, b, e) relayout through VMEM scratch (safe ops only)
            for b in range(TB):
                amr_ref[:, b, :] = ar[b]
                ami_ref[:, b, :] = ai[b]
            amr = amr_ref[...]                          # (Mq, TB, E)
            ami = ami_ref[...]

            # ---- per-mode channel mix on the MXU (batch=Mq, M=TB, K=E, N=O)
            wr = w_ref[h, 0]                            # (Mq, E, O)
            wi = w_ref[h, 1]
            fr = (jnp.einsum('xbe,xeo->xbo', amr, wr, preferred_element_type=f32)
                  - jnp.einsum('xbe,xeo->xbo', ami, wi, preferred_element_type=f32))
            fi = (jnp.einsum('xbe,xeo->xbo', amr, wi, preferred_element_type=f32)
                  + jnp.einsum('xbe,xeo->xbo', ami, wr, preferred_element_type=f32))
            fr_ref[...] = fr                            # (Mq, TB, O)
            fi_ref[...] = fi

            # ---- assemble the (TB, O, 2*Mq) coefficient slab, then ONE big
            #      (TB*O, 2*Mq) x (2*Mq, Lq) synthesis matmul (scales already folded)
            for b in range(TB):
                acc_ref[b, :, :Mq] = fr_ref[:, b, :].T  # (O, Mq)
                acc_ref[b, :, Mq:] = fi_ref[:, b, :].T
            coeffs = acc_ref[...].reshape(TB * O, 2 * Mq).astype(bf16)
            res = jnp.dot(coeffs, syn, preferred_element_type=f32)   # (TB*O, Lq)
            o_ref[:, :, h, :] = res.reshape(TB, O, Lq).astype(out_dtype)

    return kernel


def fourier_sqe_attention(q, k, v, w_real, w_imag, index_q, index_kv,
                          in_channels, out_channels, activation='tanh'):
    """q, k, v: (B, E, H, L).  w_real/w_imag: (H, E, O, len(index_q)).
    Returns ((B, O, H, L), None), matching the PyTorch module's forward."""
    assert activation == 'tanh'  # TODO(synk): 'softmax' activation branch not implemented
    del v  # accepted but unused, exactly as in the PyTorch forward
    f32 = jnp.float32

    B, E, H, Lq = q.shape
    Lk = k.shape[-1]
    O = out_channels
    Mq, Mkv = len(index_q), len(index_kv)
    assert E == in_channels
    scale = 1.0 / (in_channels * out_channels)
    itemsize = jnp.dtype(q.dtype).itemsize

    # tiny host-side constants (read once): truncated DFT bases, bf16 for the MXU
    fq = jnp.asarray(_analysis_basis_t(Lq, index_q)).astype(jnp.bfloat16)      # (Lq, 2Mq)
    fk = jnp.asarray(_analysis_basis_t(Lk, index_kv)).astype(jnp.bfloat16)     # (Lk, 2Mkv)
    syn = jnp.asarray(_synthesis_basis(Lq, index_q, scale)).astype(jnp.bfloat16)  # (2Mq, Lq)

    # weights (tiny vs q/k): (H, E, O, Mq) -> (H, 2, Mq, E, O) for the mode-batched mix
    wp = jnp.stack([w_real, w_imag], axis=1).astype(f32)        # (H, 2, E, O, Mq)
    wp = jnp.transpose(wp, (0, 1, 4, 2, 3))                     # (H, 2, Mq, E, O)

    TB = _pick_batch_tile(B, E, H, O, Lq, Lk, itemsize)
    nb = B // TB

    # VMEM budget from the actual block sizes (+ headroom for body intermediates)
    blk = TB * H * (E * Lq + E * Lk + O * Lq) * itemsize
    const_b = wp.size * 4 + (fq.size + fk.size + syn.size) * 2
    scratch_b = 4 * (2 * Mq * TB * E + 2 * Mq * TB * O + TB * O * 2 * Mq)
    interm_b = 8 * TB * max(E, O) * max(Lq, Lk) * 4
    need = 2 * blk + const_b + scratch_b + interm_b
    vmem_limit = int(min(max(2 * need, 32 << 20), 48 << 20))

    flops = (2 * B * E * H * (Lq * 2 * Mq + Lk * 2 * Mkv)      # analysis DFTs
             + 8 * B * H * Mq * Mkv * E                        # complex scores
             + 8 * B * H * Mq * Mkv * E                        # value contraction
             + 8 * B * H * Mq * E * O                          # channel mix
             + 2 * B * O * H * 2 * Mq * Lq)                    # synthesis
    cost = pl.CostEstimate(
        flops=int(flops),
        transcendentals=int(4 * B * H * Mq * Mkv),
        bytes_accessed=int((B * E * H * (Lq + Lk) + B * O * H * Lq) * itemsize + const_b))

    kernel = _make_kernel(TB, E, H, O, Mq, Mkv, Lq, Lk, jnp.dtype(q.dtype))

    out = pl.pallas_call(
        kernel,
        out_shape=jax.ShapeDtypeStruct((B, O, H, Lq), q.dtype),
        grid=(nb,),
        in_specs=[
            pl.BlockSpec((TB, E, H, Lq), lambda b: (b, 0, 0, 0)),      # q (native layout)
            pl.BlockSpec((TB, E, H, Lk), lambda b: (b, 0, 0, 0)),      # k (native layout)
            pl.BlockSpec((H, 2, Mq, E, O), lambda b: (0, 0, 0, 0, 0)),  # weights, resident
            pl.BlockSpec((Lq, 2 * Mq), lambda b: (0, 0)),               # analysis basis q
            pl.BlockSpec((Lk, 2 * Mkv), lambda b: (0, 0)),              # analysis basis k
            pl.BlockSpec((2 * Mq, Lq), lambda b: (0, 0)),               # synthesis basis
        ],
        out_specs=pl.BlockSpec((TB, O, H, Lq), lambda b: (b, 0, 0, 0)),
        scratch_shapes=[
            pltpu.VMEM((Mq, TB, E), f32),        # mode-major value (real)
            pltpu.VMEM((Mq, TB, E), f32),        # mode-major value (imag)
            pltpu.VMEM((Mq, TB, O), f32),        # mix output staging (real)
            pltpu.VMEM((Mq, TB, O), f32),        # mix output staging (imag)
            pltpu.VMEM((TB, O, 2 * Mq), f32),    # assembled synthesis coefficients
        ],
        compiler_params=pltpu.CompilerParams(
            dimension_semantics=("parallel",),
            vmem_limit_bytes=vmem_limit),
        cost_estimate=cost,
    )(q, k, wp, fq, fk, syn)

    return out, None


def reference_forward(q, k, v, w_real, w_imag, index_q, index_kv,
                      in_channels, out_channels):
    """Pure-JAX mirror of the PyTorch forward (jnp.fft based), for checking.
    Assumes even L.  (The reference module implicitly assumes O == E.)"""
    del v
    B, E, H, L = q.shape
    iq = np.asarray(index_q)
    ikv = np.asarray(index_kv)
    xq = jnp.transpose(q, (0, 2, 1, 3)).astype(jnp.float32)
    xk = jnp.transpose(k, (0, 2, 1, 3)).astype(jnp.float32)
    xq_ft = jnp.fft.rfft(xq, axis=-1)[..., iq]                 # (B,H,E,Mq)
    xk_ft = jnp.fft.rfft(xk, axis=-1)[..., ikv]                # (B,H,E,Mkv)
    s = jnp.einsum('bhex,bhey->bhxy', xq_ft, xk_ft)
    t = jnp.tanh(s)
    a = jnp.einsum('bhxy,bhey->bhex', t, xk_ft)
    w = (w_real + 1j * w_imag).astype(jnp.complex64)
    ow = jnp.einsum('bhex,heox->bhox', a, w)                   # (B,H,O,Mq)
    out_ft = jnp.zeros((B, H, out_channels, L // 2 + 1), jnp.complex64)
    out_ft = out_ft.at[..., iq].set(ow)
    out_ft = out_ft / in_channels / out_channels
    # torch.fft.irfft semantics: imag parts of DC (and Nyquist) bins ignored
    out_ft = out_ft.at[..., 0].set(jnp.real(out_ft[..., 0]).astype(jnp.complex64))
    if L % 2 == 0:
        out_ft = out_ft.at[..., -1].set(
            jnp.real(out_ft[..., -1]).astype(jnp.complex64))
    full = jnp.concatenate([out_ft, jnp.conj(out_ft[..., -2:0:-1])], axis=-1)
    out = jnp.real(jnp.fft.ifft(full, axis=-1))                # (B,H,O,L)
    return jnp.transpose(out, (0, 2, 1, 3))


if __name__ == "__main__":
    np.random.seed(0)  # deterministic 'random' frequency-mode selection

    # small shapes consistent with the module's forward
    B, E, H, L = 2, 4, 2, 16        # batch, in_channels (E), heads (node), seq len
    node = H
    in_channels = E
    out_channels = 4                # reference module implicitly needs O == E
    modes = 4
    seq_len_q = seq_len_kv = L

    index_q = get_frequency_modes(seq_len_q, modes=modes, mode_select_method='random')
    index_kv = get_frequency_modes(seq_len_kv, modes=modes, mode_select_method='random')

    key = jax.random.PRNGKey(0)
    kq, kk, kv, kwr, kwi = jax.random.split(key, 5)
    q = 0.5 * jax.random.normal(kq, (B, E, H, L), jnp.float32)
    k = 0.5 * jax.random.normal(kk, (B, E, H, L), jnp.float32)
    v = 0.5 * jax.random.normal(kv, (B, E, H, L), jnp.float32)

    # weights1 ~ scale * rand(node, in_channels, out_channels, len(index_q)), cfloat
    w_scale = 1.0 / (in_channels * out_channels)
    w_shape = (node, in_channels, out_channels, len(index_q))
    w_real = w_scale * jax.random.uniform(kwr, w_shape, jnp.float32)
    w_imag = w_scale * jax.random.uniform(kwi, w_shape, jnp.float32)

    out, attn = fourier_sqe_attention(q, k, v, w_real, w_imag, index_q, index_kv,
                                      in_channels, out_channels, activation='tanh')
    out = jax.block_until_ready(out)
    assert out.shape == (B, out_channels, H, L), out.shape
    assert attn is None
    assert bool(jnp.all(jnp.isfinite(out)))

    # sanity check against a pure-JAX (jnp.fft) mirror of the PyTorch forward
    # (tolerance accounts for the bf16 operands of the in-kernel DFT/synthesis matmuls)
    with jax.default_matmul_precision("highest"):
        ref = reference_forward(q, k, v, w_real, w_imag, index_q, index_kv,
                                in_channels, out_channels)
    ref = jax.block_until_ready(ref)
    np.testing.assert_allclose(np.asarray(out), np.asarray(ref),
                               rtol=5e-2, atol=1e-2)

    print("KERNEL_OK")
</pallas_src>

<mosaic_0001>
module attributes {stable_mosaic.version = 11 : i64} {
  func.func @kernel(%arg0: i32, %arg1: memref<2x4x2x16xf32, #tpu.memory_space<vmem>>, %arg2: memref<2x4x2x16xf32, #tpu.memory_space<vmem>>, %arg3: memref<2x2x4x4x4xf32, #tpu.memory_space<vmem>>, %arg4: memref<16x8xbf16, #tpu.memory_space<vmem>>, %arg5: memref<16x8xbf16, #tpu.memory_space<vmem>>, %arg6: memref<8x16xbf16, #tpu.memory_space<vmem>>, %arg7: memref<2x4x2x16xf32, #tpu.memory_space<vmem>>, %arg8: memref<4x2x4xf32, #tpu.memory_space<vmem>>, %arg9: memref<4x2x4xf32, #tpu.memory_space<vmem>>, %arg10: memref<4x2x4xf32, #tpu.memory_space<vmem>>, %arg11: memref<4x2x4xf32, #tpu.memory_space<vmem>>, %arg12: memref<2x4x8xf32, #tpu.memory_space<vmem>>) attributes {dimension_semantics = [#tpu.dimension_semantics<parallel>], iteration_bounds = array<i64: 1>, scalar_prefetch = 0 : i64, scratch_operands = 5 : i64, tpu.core_type = #tpu.core_type<tc>, window_params = [{transform_indices = @transform_0, window_bounds = array<i64: 2, 4, 2, 16>}, {transform_indices = @transform_1, window_bounds = array<i64: 2, 4, 2, 16>}, {pipeline_mode = #tpu.pipeline_mode<synchronous>, transform_indices = @transform_2, window_bounds = array<i64: 2, 2, 4, 4, 4>}, {pipeline_mode = #tpu.pipeline_mode<synchronous>, transform_indices = @transform_3, window_bounds = array<i64: 16, 8>}, {pipeline_mode = #tpu.pipeline_mode<synchronous>, transform_indices = @transform_4, window_bounds = array<i64: 16, 8>}, {pipeline_mode = #tpu.pipeline_mode<synchronous>, transform_indices = @transform_5, window_bounds = array<i64: 8, 16>}, {transform_indices = @transform_6, window_bounds = array<i64: 2, 4, 2, 16>}]} {
    %c0 = arith.constant 0 : index
    %c0_0 = arith.constant 0 : index
    %0 = vector.load %arg4[%c0, %c0_0] : memref<16x8xbf16, #tpu.memory_space<vmem>>, vector<16x8xbf16>
    %c0_1 = arith.constant 0 : index
    %c0_2 = arith.constant 0 : index
    %1 = vector.load %arg5[%c0_1, %c0_2] : memref<16x8xbf16, #tpu.memory_space<vmem>>, vector<16x8xbf16>
    %c0_3 = arith.constant 0 : index
    %c0_4 = arith.constant 0 : index
    %2 = vector.load %arg6[%c0_3, %c0_4] : memref<8x16xbf16, #tpu.memory_space<vmem>>, vector<8x16xbf16>
    %c0_5 = arith.constant 0 : index
    %c0_6 = arith.constant 0 : index
    %c0_7 = arith.constant 0 : index
    %c0_8 = arith.constant 0 : index
    %3 = vector.load %arg1[%c0_5, %c0_6, %c0_7, %c0_8] : memref<2x4x2x16xf32, #tpu.memory_space<vmem>>, vector<2x4x1x16xf32>
    %4 = vector.shape_cast %3 : vector<2x4x1x16xf32> to vector<2x4x16xf32>
    %5 = vector.shape_cast %4 : vector<2x4x16xf32> to vector<8x16xf32>
    %6 = arith.truncf %5 : vector<8x16xf32> to vector<8x16xbf16>
    %c0_9 = arith.constant 0 : index
    %c0_10 = arith.constant 0 : index
    %c0_11 = arith.constant 0 : index
    %c0_12 = arith.constant 0 : index
    %7 = vector.load %arg2[%c0_9, %c0_10, %c0_11, %c0_12] : memref<2x4x2x16xf32, #tpu.memory_space<vmem>>, vector<2x4x1x16xf32>
    %8 = vector.shape_cast %7 : vector<2x4x1x16xf32> to vector<2x4x16xf32>
    %9 = vector.shape_cast %8 : vector<2x4x16xf32> to vector<8x16xf32>
    %10 = arith.truncf %9 : vector<8x16xf32> to vector<8x16xbf16>
    %cst = arith.constant dense<0.000000e+00> : vector<8x8xf32>
    %11 = tpu.matmul %6, %0, %cst {dimension_numbers = #tpu.dot_dimension_numbers<[1], [0], [0], [1], [0, 0, 1, 1], [], []>} : vector<8x16xbf16>, vector<16x8xbf16>, vector<8x8xf32> -> vector<8x8xf32>
    %12 = vector.shape_cast %11 : vector<8x8xf32> to vector<2x4x8xf32>
    %cst_13 = arith.constant dense<0.000000e+00> : vector<8x8xf32>
    %13 = tpu.matmul %10, %1, %cst_13 {dimension_numbers = #tpu.dot_dimension_numbers<[1], [0], [0], [1], [0, 0, 1, 1], [], []>} : vector<8x16xbf16>, vector<16x8xbf16>, vector<8x8xf32> -> vector<8x8xf32>
    %14 = vector.shape_cast %13 : vector<8x8xf32> to vector<2x4x8xf32>
    %15 = vector.extract_strided_slice %12 {offsets = [0, 0, 0], sizes = [2, 4, 4], strides = [1, 1, 1]} : vector<2x4x8xf32> to vector<2x4x4xf32>
    %16 = tpu.transpose %15, [0, 2, 1] : vector<2x4x4xf32> -> vector<2x4x4xf32>
    %17 = vector.extract_strided_slice %12 {offsets = [0, 0, 4], sizes = [2, 4, 4], strides = [1, 1, 1]} : vector<2x4x8xf32> to vector<2x4x4xf32>
    %18 = tpu.transpose %17, [0, 2, 1] : vector<2x4x4xf32> -> vector<2x4x4xf32>
    %19 = vector.extract_strided_slice %14 {offsets = [0, 0, 0], sizes = [2, 4, 4], strides = [1, 1, 1]} : vector<2x4x8xf32> to vector<2x4x4xf32>
    %20 = tpu.transpose %19, [0, 2, 1] : vector<2x4x4xf32> -> vector<2x4x4xf32>
    %21 = vector.extract_strided_slice %14 {offsets = [0, 0, 4], sizes = [2, 4, 4], strides = [1, 1, 1]} : vector<2x4x8xf32> to vector<2x4x4xf32>
    %22 = tpu.transpose %21, [0, 2, 1] : vector<2x4x4xf32> -> vector<2x4x4xf32>
    "tpu.trace_start"() <{level = 10 : i32, message = "bxe,bye->bxy"}> : () -> ()
    %cst_14 = arith.constant dense<0.000000e+00> : vector<2x4x4xf32>
    %23 = tpu.matmul %16, %20, %cst_14 {dimension_numbers = #tpu.dot_dimension_numbers<[2], [2], [1], [1], [0, 0, 0, 1, 1, 1], [0], [0]>} : vector<2x4x4xf32>, vector<2x4x4xf32>, vector<2x4x4xf32> -> vector<2x4x4xf32>
    %cst_15 = arith.constant dense<0.000000e+00> : vector<2x4x4xf32>
    %24 = tpu.matmul %18, %22, %cst_15 {dimension_numbers = #tpu.dot_dimension_numbers<[2], [2], [1], [1], [0, 0, 0, 1, 1, 1], [0], [0]>} : vector<2x4x4xf32>, vector<2x4x4xf32>, vector<2x4x4xf32> -> vector<2x4x4xf32>
    "tpu.trace_stop"() : () -> ()
    %25 = arith.subf %23, %24 : vector<2x4x4xf32>
    "tpu.trace_start"() <{level = 10 : i32, message = "bxe,bye->bxy"}> : () -> ()
    %cst_16 = arith.constant dense<0.000000e+00> : vector<2x4x4xf32>
    %26 = tpu.matmul %16, %22, %cst_16 {dimension_numbers = #tpu.dot_dimension_numbers<[2], [2], [1], [1], [0, 0, 0, 1, 1, 1], [0], [0]>} : vector<2x4x4xf32>, vector<2x4x4xf32>, vector<2x4x4xf32> -> vector<2x4x4xf32>
    %cst_17 = arith.constant dense<0.000000e+00> : vector<2x4x4xf32>
    %27 = tpu.matmul %18, %20, %cst_17 {dimension_numbers = #tpu.dot_dimension_numbers<[2], [2], [1], [1], [0, 0, 0, 1, 1, 1], [0], [0]>} : vector<2x4x4xf32>, vector<2x4x4xf32>, vector<2x4x4xf32> -> vector<2x4x4xf32>
    "tpu.trace_stop"() : () -> ()
    %28 = arith.addf %26, %27 : vector<2x4x4xf32>
    %29 = math.absf %25 : vector<2x4x4xf32>
    %cst_18 = arith.constant -2.000000e+00 : f32
    %30 = vector.broadcast %cst_18 : f32 to vector<2x4x4xf32>
    %31 = arith.mulf %30, %29 : vector<2x4x4xf32>
    %32 = math.exp %31 : vector<2x4x4xf32>
    %cst_19 = arith.constant 2.000000e+00 : f32
    %33 = vector.broadcast %cst_19 : f32 to vector<2x4x4xf32>
    %34 = arith.mulf %33, %28 : vector<2x4x4xf32>
    %35 = math.cos %34 : vector<2x4x4xf32>
    %cst_20 = arith.constant 2.000000e+00 : f32
    %36 = vector.broadcast %cst_20 : f32 to vector<2x4x4xf32>
    %37 = arith.mulf %36, %28 : vector<2x4x4xf32>
    %38 = math.sin %37 : vector<2x4x4xf32>
    %39 = arith.mulf %32, %32 : vector<2x4x4xf32>
    %cst_21 = arith.constant 1.000000e+00 : f32
    %40 = vector.broadcast %cst_21 : f32 to vector<2x4x4xf32>
    %41 = arith.addf %40, %39 : vector<2x4x4xf32>
    %cst_22 = arith.constant 2.000000e+00 : f32
    %42 = vector.broadcast %cst_22 : f32 to vector<2x4x4xf32>
    %43 = arith.mulf %42, %32 : vector<2x4x4xf32>
    %44 = arith.mulf %43, %35 : vector<2x4x4xf32>
    %45 = arith.addf %41, %44 : vector<2x4x4xf32>
    %46 = tpu.reciprocal %45 {approx = true} : vector<2x4x4xf32> -> vector<2x4x4xf32>
    %cst_23 = arith.constant 0.000000e+00 : f32
    %47 = vector.broadcast %cst_23 : f32 to vector<2x4x4xf32>
    %48 = arith.cmpf oge, %25, %47 : vector<2x4x4xf32>
    %cst_24 = arith.constant 1.000000e+00 : f32
    %cst_25 = arith.constant -1.000000e+00 : f32
    %49 = vector.broadcast %cst_24 : f32 to vector<2x4x4xf32>
    %50 = vector.broadcast %cst_25 : f32 to vector<2x4x4xf32>
    %51 = arith.select %48, %49, %50 : vector<2x4x4xi1>, vector<2x4x4xf32>
    %52 = arith.mulf %32, %32 : vector<2x4x4xf32>
    %cst_26 = arith.constant 1.000000e+00 : f32
    %53 = vector.broadcast %cst_26 : f32 to vector<2x4x4xf32>
    %54 = arith.subf %53, %52 : vector<2x4x4xf32>
    %55 = arith.mulf %51, %54 : vector<2x4x4xf32>
    %56 = arith.mulf %55, %46 : vector<2x4x4xf32>
    %cst_27 = arith.constant 2.000000e+00 : f32
    %57 = vector.broadcast %cst_27 : f32 to vector<2x4x4xf32>
    %58 = arith.mulf %57, %32 : vector<2x4x4xf32>
    %59 = arith.mulf %58, %38 : vector<2x4x4xf32>
    %60 = arith.mulf %59, %46 : vector<2x4x4xf32>
    "tpu.trace_start"() <{level = 10 : i32, message = "bxy,bye->bxe"}> : () -> ()
    %cst_28 = arith.constant dense<0.000000e+00> : vector<2x4x4xf32>
    %61 = tpu.matmul %56, %20, %cst_28 {dimension_numbers = #tpu.dot_dimension_numbers<[2], [1], [1], [2], [0, 0, 0, 1, 1, 2], [0], [0]>} : vector<2x4x4xf32>, vector<2x4x4xf32>, vector<2x4x4xf32> -> vector<2x4x4xf32>
    %cst_29 = arith.constant dense<0.000000e+00> : vector<2x4x4xf32>
    %62 = tpu.matmul %60, %22, %cst_29 {dimension_numbers = #tpu.dot_dimension_numbers<[2], [1], [1], [2], [0, 0, 0, 1, 1, 2], [0], [0]>} : vector<2x4x4xf32>, vector<2x4x4xf32>, vector<2x4x4xf32> -> vector<2x4x4xf32>
    "tpu.trace_stop"() : () -> ()
    %63 = arith.subf %61, %62 : vector<2x4x4xf32>
    "tpu.trace_start"() <{level = 10 : i32, message = "bxy,bye->bxe"}> : () -> ()
    %cst_30 = arith.constant dense<0.000000e+00> : vector<2x4x4xf32>
    %64 = tpu.matmul %56, %22, %cst_30 {dimension_numbers = #tpu.dot_dimension_numbers<[2], [1], [1], [2], [0, 0, 0, 1, 1, 2], [0], [0]>} : vector<2x4x4xf32>, vector<2x4x4xf32>, vector<2x4x4xf32> -> vector<2x4x4xf32>
    %cst_31 = arith.constant dense<0.000000e+00> : vector<2x4x4xf32>
    %65 = tpu.matmul %60, %20, %cst_31 {dimension_numbers = #tpu.dot_dimension_numbers<[2], [1], [1], [2], [0, 0, 0, 1, 1, 2], [0], [0]>} : vector<2x4x4xf32>, vector<2x4x4xf32>, vector<2x4x4xf32> -> vector<2x4x4xf32>
    "tpu.trace_stop"() : () -> ()
    %66 = arith.addf %64, %65 : vector<2x4x4xf32>
    %67 = vector.extract_strided_slice %63 {offsets = [0, 0, 0], sizes = [1, 4, 4], strides = [1, 1, 1]} : vector<2x4x4xf32> to vector<1x4x4xf32>
    %68 = vector.shape_cast %67 : vector<1x4x4xf32> to vector<4x4xf32>
    %c0_32 = arith.constant 0 : index
    %c0_33 = arith.constant 0 : index
    %c0_34 = arith.constant 0 : index
    %69 = vector.load %arg8[%c0_32, %c0_33, %c0_34] : memref<4x2x4xf32, #tpu.memory_space<vmem>>, vector<4x1x4xf32>
    %70 = vector.shape_cast %69 : vector<4x1x4xf32> to vector<4x4xf32>
    %71 = vector.shape_cast %68 : vector<4x4xf32> to vector<4x1x4xf32>
    tpu.vector_store %arg8[%c0_32, %c0_33, %c0_34], %71 {strides = array<i32>} : memref<4x2x4xf32, #tpu.memory_space<vmem>>, vector<4x1x4xf32>,
    %72 = vector.extract_strided_slice %66 {offsets = [0, 0, 0], sizes = [1, 4, 4], strides = [1, 1, 1]} : vector<2x4x4xf32> to vector<1x4x4xf32>
    %73 = vector.shape_cast %72 : vector<1x4x4xf32> to vector<4x4xf32>
    %c0_35 = arith.constant 0 : index
    %c0_36 = arith.constant 0 : index
    %c0_37 = arith.constant 0 : index
    %74 = vector.load %arg9[%c0_35, %c0_36, %c0_37] : memref<4x2x4xf32, #tpu.memory_space<vmem>>, vector<4x1x4xf32>
    %75 = vector.shape_cast %74 : vector<4x1x4xf32> to vector<4x4xf32>
    %76 = vector.shape_cast %73 : vector<4x4xf32> to vector<4x1x4xf32>
    tpu.vector_store %arg9[%c0_35, %c0_36, %c0_37], %76 {strides = array<i32>} : memref<4x2x4xf32, #tpu.memory_space<vmem>>, vector<4x1x4xf32>,
    %77 = vector.extract_strided_slice %63 {offsets = [1, 0, 0], sizes = [1, 4, 4], strides = [1, 1, 1]} : vector<2x4x4xf32> to vector<1x4x4xf32>
    %78 = vector.shape_cast %77 : vector<1x4x4xf32> to vector<4x4xf32>
    %c0_38 = arith.constant 0 : index
    %c1 = arith.constant 1 : index
    %c0_39 = arith.constant 0 : index
    %79 = vector.load %arg8[%c0_38, %c1, %c0_39] : memref<4x2x4xf32, #tpu.memory_space<vmem>>, vector<4x1x4xf32>
    %80 = vector.shape_cast %79 : vector<4x1x4xf32> to vector<4x4xf32>
    %81 = vector.shape_cast %78 : vector<4x4xf32> to vector<4x1x4xf32>
    tpu.vector_store %arg8[%c0_38, %c1, %c0_39], %81 {strides = array<i32>} : memref<4x2x4xf32, #tpu.memory_space<vmem>>, vector<4x1x4xf32>,
    %82 = vector.extract_strided_slice %66 {offsets = [1, 0, 0], sizes = [1, 4, 4], strides = [1, 1, 1]} : vector<2x4x4xf32> to vector<1x4x4xf32>
    %83 = vector.shape_cast %82 : vector<1x4x4xf32> to vector<4x4xf32>
    %c0_40 = arith.constant 0 : index
    %c1_41 = arith.constant 1 : index
    %c0_42 = arith.constant 0 : index
    %84 = vector.load %arg9[%c0_40, %c1_41, %c0_42] : memref<4x2x4xf32, #tpu.memory_space<vmem>>, vector<4x1x4xf32>
    %85 = vector.shape_cast %84 : vector<4x1x4xf32> to vector<4x4xf32>
    %86 = vector.shape_cast %83 : vector<4x4xf32> to vector<4x1x4xf32>
    tpu.vector_store %arg9[%c0_40, %c1_41, %c0_42], %86 {strides = array<i32>} : memref<4x2x4xf32, #tpu.memory_space<vmem>>, vector<4x1x4xf32>,
    %c0_43 = arith.constant 0 : index
    %c0_44 = arith.constant 0 : index
    %c0_45 = arith.constant 0 : index
    %87 = vector.load %arg8[%c0_43, %c0_44, %c0_45] : memref<4x2x4xf32, #tpu.memory_space<vmem>>, vector<4x2x4xf32>
    %c0_46 = arith.constant 0 : index
    %c0_47 = arith.constant 0 : index
    %c0_48 = arith.constant 0 : index
    %88 = vector.load %arg9[%c0_46, %c0_47, %c0_48] : memref<4x2x4xf32, #tpu.memory_space<vmem>>, vector<4x2x4xf32>
    %c0_49 = arith.constant 0 : index
    %c0_50 = arith.constant 0 : index
    %c0_51 = arith.constant 0 : index
    %c0_52 = arith.constant 0 : index
    %c0_53 = arith.constant 0 : index
    %89 = vector.load %arg3[%c0_49, %c0_50, %c0_51, %c0_52, %c0_53] : memref<2x2x4x4x4xf32, #tpu.memory_space<vmem>>, vector<1x1x4x4x4xf32>
    %90 = vector.shape_cast %89 : vector<1x1x4x4x4xf32> to vector<4x4x4xf32>
    %c0_54 = arith.constant 0 : index
    %c1_55 = arith.constant 1 : index
    %c0_56 = arith.constant 0 : index
    %c0_57 = arith.constant 0 : index
    %c0_58 = arith.constant 0 : index
    %91 = vector.load %arg3[%c0_54, %c1_55, %c0_56, %c0_57, %c0_58] : memref<2x2x4x4x4xf32, #tpu.memory_space<vmem>>, vector<1x1x4x4x4xf32>
    %92 = vector.shape_cast %91 : vector<1x1x4x4x4xf32> to vector<4x4x4xf32>
    "tpu.trace_start"() <{level = 10 : i32, message = "xbe,xeo->xbo"}> : () -> ()
    %cst_59 = arith.constant dense<0.000000e+00> : vector<4x2x4xf32>
    %93 = tpu.matmul %87, %90, %cst_59 {dimension_numbers = #tpu.dot_dimension_numbers<[2], [1], [1], [2], [0, 0, 0, 1, 1, 2], [0], [0]>} : vector<4x2x4xf32>, vector<4x4x4xf32>, vector<4x2x4xf32> -> vector<4x2x4xf32>
    %cst_60 = arith.constant dense<0.000000e+00> : vector<4x2x4xf32>
    %94 = tpu.matmul %88, %92, %cst_60 {dimension_numbers = #tpu.dot_dimension_numbers<[2], [1], [1], [2], [0, 0, 0, 1, 1, 2], [0], [0]>} : vector<4x2x4xf32>, vector<4x4x4xf32>, vector<4x2x4xf32> -> vector<4x2x4xf32>
    "tpu.trace_stop"() : () -> ()
    %95 = arith.subf %93, %94 : vector<4x2x4xf32>
    "tpu.trace_start"() <{level = 10 : i32, message = "xbe,xeo->xbo"}> : () -> ()
    %cst_61 = arith.constant dense<0.000000e+00> : vector<4x2x4xf32>
    %96 = tpu.matmul %87, %92, %cst_61 {dimension_numbers = #tpu.dot_dimension_numbers<[2], [1], [1], [2], [0, 0, 0, 1, 1, 2], [0], [0]>} : vector<4x2x4xf32>, vector<4x4x4xf32>, vector<4x2x4xf32> -> vector<4x2x4xf32>
    %cst_62 = arith.constant dense<0.000000e+00> : vector<4x2x4xf32>
    %97 = tpu.matmul %88, %90, %cst_62 {dimension_numbers = #tpu.dot_dimension_numbers<[2], [1], [1], [2], [0, 0, 0, 1, 1, 2], [0], [0]>} : vector<4x2x4xf32>, vector<4x4x4xf32>, vector<4x2x4xf32> -> vector<4x2x4xf32>
    "tpu.trace_stop"() : () -> ()
    %98 = arith.addf %96, %97 : vector<4x2x4xf32>
    %c0_63 = arith.constant 0 : index
    %c0_64 = arith.constant 0 : index
    %c0_65 = arith.constant 0 : index
    %99 = vector.load %arg10[%c0_63, %c0_64, %c0_65] : memref<4x2x4xf32, #tpu.memory_space<vmem>>, vector<4x2x4xf32>
    tpu.vector_store %arg10[%c0_63, %c0_64, %c0_65], %95 {strides = array<i32>} : memref<4x2x4xf32, #tpu.memory_space<vmem>>, vector<4x2x4xf32>,
    %c0_66 = arith.constant 0 : index
    %c0_67 = arith.constant 0 : index
    %c0_68 = arith.constant 0 : index
    %100 = vector.load %arg11[%c0_66, %c0_67, %c0_68] : memref<4x2x4xf32, #tpu.memory_space<vmem>>, vector<4x2x4xf32>
    tpu.vector_store %arg11[%c0_66, %c0_67, %c0_68], %98 {strides = array<i32>} : memref<4x2x4xf32, #tpu.memory_space<vmem>>, vector<4x2x4xf32>,
    %c0_69 = arith.constant 0 : index
    %c0_70 = arith.constant 0 : index
    %c0_71 = arith.constant 0 : index
    %101 = vector.load %arg10[%c0_69, %c0_70, %c0_71] : memref<4x2x4xf32, #tpu.memory_space<vmem>>, vector<4x1x4xf32>
    %102 = vector.shape_cast %101 : vector<4x1x4xf32> to vector<4x4xf32>
    %103 = tpu.transpose %102, [1, 0] : vector<4x4xf32> -> vector<4x4xf32>
    %c0_72 = arith.constant 0 : index
    %c0_73 = arith.constant 0 : index
    %c0_74 = arith.constant 0 : index
    %104 = vector.load %arg12[%c0_72, %c0_73, %c0_74] : memref<2x4x8xf32, #tpu.memory_space<vmem>>, vector<1x4x4xf32>
    %105 = vector.shape_cast %104 : vector<1x4x4xf32> to vector<4x4xf32>
    %106 = vector.shape_cast %103 : vector<4x4xf32> to vector<1x4x4xf32>
    tpu.vector_store %arg12[%c0_72, %c0_73, %c0_74], %106 {strides = array<i32>} : memref<2x4x8xf32, #tpu.memory_space<vmem>>, vector<1x4x4xf32>,
    %c0_75 = arith.constant 0 : index
    %c0_76 = arith.constant 0 : index
    %c0_77 = arith.constant 0 : index
    %107 = vector.load %arg11[%c0_75, %c0_76, %c0_77] : memref<4x2x4xf32, #tpu.memory_space<vmem>>, vector<4x1x4xf32>
    %108 = vector.shape_cast %107 : vector<4x1x4xf32> to vector<4x4xf32>
    %109 = tpu.transpose %108, [1, 0] : vector<4x4xf32> -> vector<4x4xf32>
    %c0_78 = arith.constant 0 : index
    %c0_79 = arith.constant 0 : index
    %c4 = arith.constant 4 : index
    %110 = vector.load %arg12[%c0_78, %c0_79, %c4] : memref<2x4x8xf32, #tpu.memory_space<vmem>>, vector<1x4x4xf32>
    %111 = vector.shape_cast %110 : vector<1x4x4xf32> to vector<4x4xf32>
    %112 = vector.shape_cast %109 : vector<4x4xf32> to vector<1x4x4xf32>
    tpu.vector_store %arg12[%c0_78, %c0_79, %c4], %112 {strides = array<i32>} : memref<2x4x8xf32, #tpu.memory_space<vmem>>, vector<1x4x4xf32>,
    %c0_80 = arith.constant 0 : index
    %c1_81 = arith.constant 1 : index
    %c0_82 = arith.constant 0 : index
    %113 = vector.load %arg10[%c0_80, %c1_81, %c0_82] : memref<4x2x4xf32, #tpu.memory_space<vmem>>, vector<4x1x4xf32>
    %114 = vector.shape_cast %113 : vector<4x1x4xf32> to vector<4x4xf32>
    %115 = tpu.transpose %114, [1, 0] : vector<4x4xf32> -> vector<4x4xf32>
    %c1_83 = arith.constant 1 : index
    %c0_84 = arith.constant 0 : index
    %c0_85 = arith.constant 0 : index
    %116 = vector.load %arg12[%c1_83, %c0_84, %c0_85] : memref<2x4x8xf32, #tpu.memory_space<vmem>>, vector<1x4x4xf32>
    %117 = vector.shape_cast %116 : vector<1x4x4xf32> to vector<4x4xf32>
    %118 = vector.shape_cast %115 : vector<4x4xf32> to vector<1x4x4xf32>
    tpu.vector_store %arg12[%c1_83, %c0_84, %c0_85], %118 {strides = array<i32>} : memref<2x4x8xf32, #tpu.memory_space<vmem>>, vector<1x4x4xf32>,
    %c0_86 = arith.constant 0 : index
    %c1_87 = arith.constant 1 : index
    %c0_88 = arith.constant 0 : index
    %119 = vector.load %arg11[%c0_86, %c1_87, %c0_88] : memref<4x2x4xf32, #tpu.memory_space<vmem>>, vector<4x1x4xf32>
    %120 = vector.shape_cast %119 : vector<4x1x4xf32> to vector<4x4xf32>
    %121 = tpu.transpose %120, [1, 0] : vector<4x4xf32> -> vector<4x4xf32>
    %c1_89 = arith.constant 1 : index
    %c0_90 = arith.constant 0 : index
    %c4_91 = arith.constant 4 : index
    %122 = vector.load %arg12[%c1_89, %c0_90, %c4_91] : memref<2x4x8xf32, #tpu.memory_space<vmem>>, vector<1x4x4xf32>
    %123 = vector.shape_cast %122 : vector<1x4x4xf32> to vector<4x4xf32>
    %124 = vector.shape_cast %121 : vector<4x4xf32> to vector<1x4x4xf32>
    tpu.vector_store %arg12[%c1_89, %c0_90, %c4_91], %124 {strides = array<i32>} : memref<2x4x8xf32, #tpu.memory_space<vmem>>, vector<1x4x4xf32>,
    %c0_92 = arith.constant 0 : index
    %c0_93 = arith.constant 0 : index
    %c0_94 = arith.constant 0 : index
    %125 = vector.load %arg12[%c0_92, %c0_93, %c0_94] : memref<2x4x8xf32, #tpu.memory_space<vmem>>, vector<2x4x8xf32>
    %126 = vector.shape_cast %125 : vector<2x4x8xf32> to vector<8x8xf32>
    %127 = arith.truncf %126 : vector<8x8xf32> to vector<8x8xbf16>
    %cst_95 = arith.constant dense<0.000000e+00> : vector<8x16xf32>
    %128 = tpu.matmul %127, %2, %cst_95 {dimension_numbers = #tpu.dot_dimension_numbers<[1], [0], [0], [1], [0, 0, 1, 1], [], []>} : vector<8x8xbf16>, vector<8x16xbf16>, vector<8x16xf32> -> vector<8x16xf32>
    %129 = vector.shape_cast %128 : vector<8x16xf32> to vector<2x4x16xf32>
    %c0_96 = arith.constant 0 : index
    %c0_97 = arith.constant 0 : index
    %c0_98 = arith.constant 0 : index
    %c0_99 = arith.constant 0 : index
    %130 = vector.load %arg7[%c0_96, %c0_97, %c0_98, %c0_99] : memref<2x4x2x16xf32, #tpu.memory_space<vmem>>, vector<2x4x1x16xf32>
    %131 = vector.shape_cast %130 : vector<2x4x1x16xf32> to vector<2x4x16xf32>
    %132 = vector.shape_cast %129 : vector<2x4x16xf32> to vector<2x4x1x16xf32>
    tpu.vector_store %arg7[%c0_96, %c0_97, %c0_98, %c0_99], %132 {strides = array<i32>} : memref<2x4x2x16xf32, #tpu.memory_space<vmem>>, vector<2x4x1x16xf32>,
    %c0_100 = arith.constant 0 : index
    %c0_101 = arith.constant 0 : index
    %c1_102 = arith.constant 1 : index
    %c0_103 = arith.constant 0 : index
    %133 = vector.load %arg1[%c0_100, %c0_101, %c1_102, %c0_103] : memref<2x4x2x16xf32, #tpu.memory_space<vmem>>, vector<2x4x1x16xf32>
    %134 = vector.shape_cast %133 : vector<2x4x1x16xf32> to vector<2x4x16xf32>
    %135 = vector.shape_cast %134 : vector<2x4x16xf32> to vector<8x16xf32>
    %136 = arith.truncf %135 : vector<8x16xf32> to vector<8x16xbf16>
    %c0_104 = arith.constant 0 : index
    %c0_105 = arith.constant 0 : index
    %c1_106 = arith.constant 1 : index
    %c0_107 = arith.constant 0 : index
    %137 = vector.load %arg2[%c0_104, %c0_105, %c1_106, %c0_107] : memref<2x4x2x16xf32, #tpu.memory_space<vmem>>, vector<2x4x1x16xf32>
    %138 = vector.shape_cast %137 : vector<2x4x1x16xf32> to vector<2x4x16xf32>
    %139 = vector.shape_cast %138 : vector<2x4x16xf32> to vector<8x16xf32>
    %140 = arith.truncf %139 : vector<8x16xf32> to vector<8x16xbf16>
    %cst_108 = arith.constant dense<0.000000e+00> : vector<8x8xf32>
    %141 = tpu.matmul %136, %0, %cst_108 {dimension_numbers = #tpu.dot_dimension_numbers<[1], [0], [0], [1], [0, 0, 1, 1], [], []>} : vector<8x16xbf16>, vector<16x8xbf16>, vector<8x8xf32> -> vector<8x8xf32>
    %142 = vector.shape_cast %141 : vector<8x8xf32> to vector<2x4x8xf32>
    %cst_109 = arith.constant dense<0.000000e+00> : vector<8x8xf32>
    %143 = tpu.matmul %140, %1, %cst_109 {dimension_numbers = #tpu.dot_dimension_numbers<[1], [0], [0], [1], [0, 0, 1, 1], [], []>} : vector<8x16xbf16>, vector<16x8xbf16>, vector<8x8xf32> -> vector<8x8xf32>
    %144 = vector.shape_cast %143 : vector<8x8xf32> to vector<2x4x8xf32>
    %145 = vector.extract_strided_slice %142 {offsets = [0, 0, 0], sizes = [2, 4, 4], strides = [1, 1, 1]} : vector<2x4x8xf32> to vector<2x4x4xf32>
    %146 = tpu.transpose %145, [0, 2, 1] : vector<2x4x4xf32> -> vector<2x4x4xf32>
    %147 = vector.extract_strided_slice %142 {offsets = [0, 0, 4], sizes = [2, 4, 4], strides = [1, 1, 1]} : vector<2x4x8xf32> to vector<2x4x4xf32>
    %148 = tpu.transpose %147, [0, 2, 1] : vector<2x4x4xf32> -> vector<2x4x4xf32>
    %149 = vector.extract_strided_slice %144 {offsets = [0, 0, 0], sizes = [2, 4, 4], strides = [1, 1, 1]} : vector<2x4x8xf32> to vector<2x4x4xf32>
    %150 = tpu.transpose %149, [0, 2, 1] : vector<2x4x4xf32> -> vector<2x4x4xf32>
    %151 = vector.extract_strided_slice %144 {offsets = [0, 0, 4], sizes = [2, 4, 4], strides = [1, 1, 1]} : vector<2x4x8xf32> to vector<2x4x4xf32>
    %152 = tpu.transpose %151, [0, 2, 1] : vector<2x4x4xf32> -> vector<2x4x4xf32>
    "tpu.trace_start"() <{level = 10 : i32, message = "bxe,bye->bxy"}> : () -> ()
    %cst_110 = arith.constant dense<0.000000e+00> : vector<2x4x4xf32>
    %153 = tpu.matmul %146, %150, %cst_110 {dimension_numbers = #tpu.dot_dimension_numbers<[2], [2], [1], [1], [0, 0, 0, 1, 1, 1], [0], [0]>} : vector<2x4x4xf32>, vector<2x4x4xf32>, vector<2x4x4xf32> -> vector<2x4x4xf32>
    %cst_111 = arith.constant dense<0.000000e+00> : vector<2x4x4xf32>
    %154 = tpu.matmul %148, %152, %cst_111 {dimension_numbers = #tpu.dot_dimension_numbers<[2], [2], [1], [1], [0, 0, 0, 1, 1, 1], [0], [0]>} : vector<2x4x4xf32>, vector<2x4x4xf32>, vector<2x4x4xf32> -> vector<2x4x4xf32>
    "tpu.trace_stop"() : () -> ()
    %155 = arith.subf %153, %154 : vector<2x4x4xf32>
    "tpu.trace_start"() <{level = 10 : i32, message = "bxe,bye->bxy"}> : () -> ()
    %cst_112 = arith.constant dense<0.000000e+00> : vector<2x4x4xf32>
    %156 = tpu.matmul %146, %152, %cst_112 {dimension_numbers = #tpu.dot_dimension_numbers<[2], [2], [1], [1], [0, 0, 0, 1, 1, 1], [0], [0]>} : vector<2x4x4xf32>, vector<2x4x4xf32>, vector<2x4x4xf32> -> vector<2x4x4xf32>
    %cst_113 = arith.constant dense<0.000000e+00> : vector<2x4x4xf32>
    %157 = tpu.matmul %148, %150, %cst_113 {dimension_numbers = #tpu.dot_dimension_numbers<[2], [2], [1], [1], [0, 0, 0, 1, 1, 1], [0], [0]>} : vector<2x4x4xf32>, vector<2x4x4xf32>, vector<2x4x4xf32> -> vector<2x4x4xf32>
    "tpu.trace_stop"() : () -> ()
    %158 = arith.addf %156, %157 : vector<2x4x4xf32>
    %159 = math.absf %155 : vector<2x4x4xf32>
    %cst_114 = arith.constant -2.000000e+00 : f32
    %160 = vector.broadcast %cst_114 : f32 to vector<2x4x4xf32>
    %161 = arith.mulf %160, %159 : vector<2x4x4xf32>
    %162 = math.exp %161 : vector<2x4x4xf32>
    %cst_115 = arith.constant 2.000000e+00 : f32
    %163 = vector.broadcast %cst_115 : f32 to vector<2x4x4xf32>
    %164 = arith.mulf %163, %158 : vector<2x4x4xf32>
    %165 = math.cos %164 : vector<2x4x4xf32>
    %cst_116 = arith.constant 2.000000e+00 : f32
    %166 = vector.broadcast %cst_116 : f32 to vector<2x4x4xf32>
    %167 = arith.mulf %166, %158 : vector<2x4x4xf32>
    %168 = math.sin %167 : vector<2x4x4xf32>
    %169 = arith.mulf %162, %162 : vector<2x4x4xf32>
    %cst_117 = arith.constant 1.000000e+00 : f32
    %170 = vector.broadcast %cst_117 : f32 to vector<2x4x4xf32>
    %171 = arith.addf %170, %169 : vector<2x4x4xf32>
    %cst_118 = arith.constant 2.000000e+00 : f32
    %172 = vector.broadcast %cst_118 : f32 to vector<2x4x4xf32>
    %173 = arith.mulf %172, %162 : vector<2x4x4xf32>
    %174 = arith.mulf %173, %165 : vector<2x4x4xf32>
    %175 = arith.addf %171, %174 : vector<2x4x4xf32>
    %176 = tpu.reciprocal %175 {approx = true} : vector<2x4x4xf32> -> vector<2x4x4xf32>
    %cst_119 = arith.constant 0.000000e+00 : f32
    %177 = vector.broadcast %cst_119 : f32 to vector<2x4x4xf32>
    %178 = arith.cmpf oge, %155, %177 : vector<2x4x4xf32>
    %cst_120 = arith.constant 1.000000e+00 : f32
    %cst_121 = arith.constant -1.000000e+00 : f32
    %179 = vector.broadcast %cst_120 : f32 to vector<2x4x4xf32>
    %180 = vector.broadcast %cst_121 : f32 to vector<2x4x4xf32>
    %181 = arith.select %178, %179, %180 : vector<2x4x4xi1>, vector<2x4x4xf32>
    %182 = arith.mulf %162, %162 : vector<2x4x4xf32>
    %cst_122 = arith.constant 1.000000e+00 : f32
    %183 = vector.broadcast %cst_122 : f32 to vector<2x4x4xf32>
    %184 = arith.subf %183, %182 : vector<2x4x4xf32>
    %185 = arith.mulf %181, %184 : vector<2x4x4xf32>
    %186 = arith.mulf %185, %176 : vector<2x4x4xf32>
    %cst_123 = arith.constant 2.000000e+00 : f32
    %187 = vector.broadcast %cst_123 : f32 to vector<2x4x4xf32>
    %188 = arith.mulf %187, %162 : vector<2x4x4xf32>
    %189 = arith.mulf %188, %168 : vector<2x4x4xf32>
    %190 = arith.mulf %189, %176 : vector<2x4x4xf32>
    "tpu.trace_start"() <{level = 10 : i32, message = "bxy,bye->bxe"}> : () -> ()
    %cst_124 = arith.constant dense<0.000000e+00> : vector<2x4x4xf32>
    %191 = tpu.matmul %186, %150, %cst_124 {dimension_numbers = #tpu.dot_dimension_numbers<[2], [1], [1], [2], [0, 0, 0, 1, 1, 2], [0], [0]>} : vector<2x4x4xf32>, vector<2x4x4xf32>, vector<2x4x4xf32> -> vector<2x4x4xf32>
    %cst_125 = arith.constant dense<0.000000e+00> : vector<2x4x4xf32>
    %192 = tpu.matmul %190, %152, %cst_125 {dimension_numbers = #tpu.dot_dimension_numbers<[2], [1], [1], [2], [0, 0, 0, 1, 1, 2], [0], [0]>} : vector<2x4x4xf32>, vector<2x4x4xf32>, vector<2x4x4xf32> -> vector<2x4x4xf32>
    "tpu.trace_stop"() : () -> ()
    %193 = arith.subf %191, %192 : vector<2x4x4xf32>
    "tpu.trace_start"() <{level = 10 : i32, message = "bxy,bye->bxe"}> : () -> ()
    %cst_126 = arith.constant dense<0.000000e+00> : vector<2x4x4xf32>
    %194 = tpu.matmul %186, %152, %cst_126 {dimension_numbers = #tpu.dot_dimension_numbers<[2], [1], [1], [2], [0, 0, 0, 1, 1, 2], [0], [0]>} : vector<2x4x4xf32>, vector<2x4x4xf32>, vector<2x4x4xf32> -> vector<2x4x4xf32>
    %cst_127 = arith.constant dense<0.000000e+00> : vector<2x4x4xf32>
    %195 = tpu.matmul %190, %150, %cst_127 {dimension_numbers = #tpu.dot_dimension_numbers<[2], [1], [1], [2], [0, 0, 0, 1, 1, 2], [0], [0]>} : vector<2x4x4xf32>, vector<2x4x4xf32>, vector<2x4x4xf32> -> vector<2x4x4xf32>
    "tpu.trace_stop"() : () -> ()
    %196 = arith.addf %194, %195 : vector<2x4x4xf32>
    %197 = vector.extract_strided_slice %193 {offsets = [0, 0, 0], sizes = [1, 4, 4], strides = [1, 1, 1]} : vector<2x4x4xf32> to vector<1x4x4xf32>
    %198 = vector.shape_cast %197 : vector<1x4x4xf32> to vector<4x4xf32>
    %c0_128 = arith.constant 0 : index
    %c0_129 = arith.constant 0 : index
    %c0_130 = arith.constant 0 : index
    %199 = vector.load %arg8[%c0_128, %c0_129, %c0_130] : memref<4x2x4xf32, #tpu.memory_space<vmem>>, vector<4x1x4xf32>
    %200 = vector.shape_cast %199 : vector<4x1x4xf32> to vector<4x4xf32>
    %201 = vector.shape_cast %198 : vector<4x4xf32> to vector<4x1x4xf32>
    tpu.vector_store %arg8[%c0_128, %c0_129, %c0_130], %201 {strides = array<i32>} : memref<4x2x4xf32, #tpu.memory_space<vmem>>, vector<4x1x4xf32>,
    %202 = vector.extract_strided_slice %196 {offsets = [0, 0, 0], sizes = [1, 4, 4], strides = [1, 1, 1]} : vector<2x4x4xf32> to vector<1x4x4xf32>
    %203 = vector.shape_cast %202 : vector<1x4x4xf32> to vector<4x4xf32>
    %c0_131 = arith.constant 0 : index
    %c0_132 = arith.constant 0 : index
    %c0_133 = arith.constant 0 : index
    %204 = vector.load %arg9[%c0_131, %c0_132, %c0_133] : memref<4x2x4xf32, #tpu.memory_space<vmem>>, vector<4x1x4xf32>
    %205 = vector.shape_cast %204 : vector<4x1x4xf32> to vector<4x4xf32>
    %206 = vector.shape_cast %203 : vector<4x4xf32> to vector<4x1x4xf32>
    tpu.vector_store %arg9[%c0_131, %c0_132, %c0_133], %206 {strides = array<i32>} : memref<4x2x4xf32, #tpu.memory_space<vmem>>, vector<4x1x4xf32>,
    %207 = vector.extract_strided_slice %193 {offsets = [1, 0, 0], sizes = [1, 4, 4], strides = [1, 1, 1]} : vector<2x4x4xf32> to vector<1x4x4xf32>
    %208 = vector.shape_cast %207 : vector<1x4x4xf32> to vector<4x4xf32>
    %c0_134 = arith.constant 0 : index
    %c1_135 = arith.constant 1 : index
    %c0_136 = arith.constant 0 : index
    %209 = vector.load %arg8[%c0_134, %c1_135, %c0_136] : memref<4x2x4xf32, #tpu.memory_space<vmem>>, vector<4x1x4xf32>
    %210 = vector.shape_cast %209 : vector<4x1x4xf32> to vector<4x4xf32>
    %211 = vector.shape_cast %208 : vector<4x4xf32> to vector<4x1x4xf32>
    tpu.vector_store %arg8[%c0_134, %c1_135, %c0_136], %211 {strides = array<i32>} : memref<4x2x4xf32, #tpu.memory_space<vmem>>, vector<4x1x4xf32>,
    %212 = vector.extract_strided_slice %196 {offsets = [1, 0, 0], sizes = [1, 4, 4], strides = [1, 1, 1]} : vector<2x4x4xf32> to vector<1x4x4xf32>
    %213 = vector.shape_cast %212 : vector<1x4x4xf32> to vector<4x4xf32>
    %c0_137 = arith.constant 0 : index
    %c1_138 = arith.constant 1 : index
    %c0_139 = arith.constant 0 : index
    %214 = vector.load %arg9[%c0_137, %c1_138, %c0_139] : memref<4x2x4xf32, #tpu.memory_space<vmem>>, vector<4x1x4xf32>
    %215 = vector.shape_cast %214 : vector<4x1x4xf32> to vector<4x4xf32>
    %216 = vector.shape_cast %213 : vector<4x4xf32> to vector<4x1x4xf32>
    tpu.vector_store %arg9[%c0_137, %c1_138, %c0_139], %216 {strides = array<i32>} : memref<4x2x4xf32, #tpu.memory_space<vmem>>, vector<4x1x4xf32>,
    %c0_140 = arith.constant 0 : index
    %c0_141 = arith.constant 0 : index
    %c0_142 = arith.constant 0 : index
    %217 = vector.load %arg8[%c0_140, %c0_141, %c0_142] : memref<4x2x4xf32, #tpu.memory_space<vmem>>, vector<4x2x4xf32>
    %c0_143 = arith.constant 0 : index
    %c0_144 = arith.constant 0 : index
    %c0_145 = arith.constant 0 : index
    %218 = vector.load %arg9[%c0_143, %c0_144, %c0_145] : memref<4x2x4xf32, #tpu.memory_space<vmem>>, vector<4x2x4xf32>
    %c1_146 = arith.constant 1 : index
    %c0_147 = arith.constant 0 : index
    %c0_148 = arith.constant 0 : index
    %c0_149 = arith.constant 0 : index
    %c0_150 = arith.constant 0 : index
    %219 = vector.load %arg3[%c1_146, %c0_147, %c0_148, %c0_149, %c0_150] : memref<2x2x4x4x4xf32, #tpu.memory_space<vmem>>, vector<1x1x4x4x4xf32>
    %220 = vector.shape_cast %219 : vector<1x1x4x4x4xf32> to vector<4x4x4xf32>
    %c1_151 = arith.constant 1 : index
    %c1_152 = arith.constant 1 : index
    %c0_153 = arith.constant 0 : index
    %c0_154 = arith.constant 0 : index
    %c0_155 = arith.constant 0 : index
    %221 = vector.load %arg3[%c1_151, %c1_152, %c0_153, %c0_154, %c0_155] : memref<2x2x4x4x4xf32, #tpu.memory_space<vmem>>, vector<1x1x4x4x4xf32>
    %222 = vector.shape_cast %221 : vector<1x1x4x4x4xf32> to vector<4x4x4xf32>
    "tpu.trace_start"() <{level = 10 : i32, message = "xbe,xeo->xbo"}> : () -> ()
    %cst_156 = arith.constant dense<0.000000e+00> : vector<4x2x4xf32>
    %223 = tpu.matmul %217, %220, %cst_156 {dimension_numbers = #tpu.dot_dimension_numbers<[2], [1], [1], [2], [0, 0, 0, 1, 1, 2], [0], [0]>} : vector<4x2x4xf32>, vector<4x4x4xf32>, vector<4x2x4xf32> -> vector<4x2x4xf32>
    %cst_157 = arith.constant dense<0.000000e+00> : vector<4x2x4xf32>
    %224 = tpu.matmul %218, %222, %cst_157 {dimension_numbers = #tpu.dot_dimension_numbers<[2], [1], [1], [2], [0, 0, 0, 1, 1, 2], [0], [0]>} : vector<4x2x4xf32>, vector<4x4x4xf32>, vector<4x2x4xf32> -> vector<4x2x4xf32>
    "tpu.trace_stop"() : () -> ()
    %225 = arith.subf %223, %224 : vector<4x2x4xf32>
    "tpu.trace_start"() <{level = 10 : i32, message = "xbe,xeo->xbo"}> : () -> ()
    %cst_158 = arith.constant dense<0.000000e+00> : vector<4x2x4xf32>
    %226 = tpu.matmul %217, %222, %cst_158 {dimension_numbers = #tpu.dot_dimension_numbers<[2], [1], [1], [2], [0, 0, 0, 1, 1, 2], [0], [0]>} : vector<4x2x4xf32>, vector<4x4x4xf32>, vector<4x2x4xf32> -> vector<4x2x4xf32>
    %cst_159 = arith.constant dense<0.000000e+00> : vector<4x2x4xf32>
    %227 = tpu.matmul %218, %220, %cst_159 {dimension_numbers = #tpu.dot_dimension_numbers<[2], [1], [1], [2], [0, 0, 0, 1, 1, 2], [0], [0]>} : vector<4x2x4xf32>, vector<4x4x4xf32>, vector<4x2x4xf32> -> vector<4x2x4xf32>
    "tpu.trace_stop"() : () -> ()
    %228 = arith.addf %226, %227 : vector<4x2x4xf32>
    %c0_160 = arith.constant 0 : index
    %c0_161 = arith.constant 0 : index
    %c0_162 = arith.constant 0 : index
    %229 = vector.load %arg10[%c0_160, %c0_161, %c0_162] : memref<4x2x4xf32, #tpu.memory_space<vmem>>, vector<4x2x4xf32>
    tpu.vector_store %arg10[%c0_160, %c0_161, %c0_162], %225 {strides = array<i32>} : memref<4x2x4xf32, #tpu.memory_space<vmem>>, vector<4x2x4xf32>,
    %c0_163 = arith.constant 0 : index
    %c0_164 = arith.constant 0 : index
    %c0_165 = arith.constant 0 : index
    %230 = vector.load %arg11[%c0_163, %c0_164, %c0_165] : memref<4x2x4xf32, #tpu.memory_space<vmem>>, vector<4x2x4xf32>
    tpu.vector_store %arg11[%c0_163, %c0_164, %c0_165], %228 {strides = array<i32>} : memref<4x2x4xf32, #tpu.memory_space<vmem>>, vector<4x2x4xf32>,
    %c0_166 = arith.constant 0 : index
    %c0_167 = arith.constant 0 : index
    %c0_168 = arith.constant 0 : index
    %231 = vector.load %arg10[%c0_166, %c0_167, %c0_168] : memref<4x2x4xf32, #tpu.memory_space<vmem>>, vector<4x1x4xf32>
    %232 = vector.shape_cast %231 : vector<4x1x4xf32> to vector<4x4xf32>
    %233 = tpu.transpose %232, [1, 0] : vector<4x4xf32> -> vector<4x4xf32>
    %c0_169 = arith.constant 0 : index
    %c0_170 = arith.constant 0 : index
    %c0_171 = arith.constant 0 : index
    %234 = vector.load %arg12[%c0_169, %c0_170, %c0_171] : memref<2x4x8xf32, #tpu.memory_space<vmem>>, vector<1x4x4xf32>
    %235 = vector.shape_cast %234 : vector<1x4x4xf32> to vector<4x4xf32>
    %236 = vector.shape_cast %233 : vector<4x4xf32> to vector<1x4x4xf32>
    tpu.vector_store %arg12[%c0_169, %c0_170, %c0_171], %236 {strides = array<i32>} : memref<2x4x8xf32, #tpu.memory_space<vmem>>, vector<1x4x4xf32>,
    %c0_172 = arith.constant 0 : index
    %c0_173 = arith.constant 0 : index
    %c0_174 = arith.constant 0 : index
    %237 = vector.load %arg11[%c0_172, %c0_173, %c0_174] : memref<4x2x4xf32, #tpu.memory_space<vmem>>, vector<4x1x4xf32>
    %238 = vector.shape_cast %237 : vector<4x1x4xf32> to vector<4x4xf32>
    %239 = tpu.transpose %238, [1, 0] : vector<4x4xf32> -> vector<4x4xf32>
    %c0_175 = arith.constant 0 : index
    %c0_176 = arith.constant 0 : index
    %c4_177 = arith.constant 4 : index
    %240 = vector.load %arg12[%c0_175, %c0_176, %c4_177] : memref<2x4x8xf32, #tpu.memory_space<vmem>>, vector<1x4x4xf32>
    %241 = vector.shape_cast %240 : vector<1x4x4xf32> to vector<4x4xf32>
    %242 = vector.shape_cast %239 : vector<4x4xf32> to vector<1x4x4xf32>
    tpu.vector_store %arg12[%c0_175, %c0_176, %c4_177], %242 {strides = array<i32>} : memref<2x4x8xf32, #tpu.memory_space<vmem>>, vector<1x4x4xf32>,
    %c0_178 = arith.constant 0 : index
    %c1_179 = arith.constant 1 : index
    %c0_180 = arith.constant 0 : index
    %243 = vector.load %arg10[%c0_178, %c1_179, %c0_180] : memref<4x2x4xf32, #tpu.memory_space<vmem>>, vector<4x1x4xf32>
    %244 = vector.shape_cast %243 : vector<4x1x4xf32> to vector<4x4xf32>
    %245 = tpu.transpose %244, [1, 0] : vector<4x4xf32> -> vector<4x4xf32>
    %c1_181 = arith.constant 1 : index
    %c0_182 = arith.constant 0 : index
    %c0_183 = arith.constant 0 : index
    %246 = vector.load %arg12[%c1_181, %c0_182, %c0_183] : memref<2x4x8xf32, #tpu.memory_space<vmem>>, vector<1x4x4xf32>
    %247 = vector.shape_cast %246 : vector<1x4x4xf32> to vector<4x4xf32>
    %248 = vector.shape_cast %245 : vector<4x4xf32> to vector<1x4x4xf32>
    tpu.vector_store %arg12[%c1_181, %c0_182, %c0_183], %248 {strides = array<i32>} : memref<2x4x8xf32, #tpu.memory_space<vmem>>, vector<1x4x4xf32>,
    %c0_184 = arith.constant 0 : index
    %c1_185 = arith.constant 1 : index
    %c0_186 = arith.constant 0 : index
    %249 = vector.load %arg11[%c0_184, %c1_185, %c0_186] : memref<4x2x4xf32, #tpu.memory_space<vmem>>, vector<4x1x4xf32>
    %250 = vector.shape_cast %249 : vector<4x1x4xf32> to vector<4x4xf32>
    %251 = tpu.transpose %250, [1, 0] : vector<4x4xf32> -> vector<4x4xf32>
    %c1_187 = arith.constant 1 : index
    %c0_188 = arith.constant 0 : index
    %c4_189 = arith.constant 4 : index
    %252 = vector.load %arg12[%c1_187, %c0_188, %c4_189] : memref<2x4x8xf32, #tpu.memory_space<vmem>>, vector<1x4x4xf32>
    %253 = vector.shape_cast %252 : vector<1x4x4xf32> to vector<4x4xf32>
    %254 = vector.shape_cast %251 : vector<4x4xf32> to vector<1x4x4xf32>
    tpu.vector_store %arg12[%c1_187, %c0_188, %c4_189], %254 {strides = array<i32>} : memref<2x4x8xf32, #tpu.memory_space<vmem>>, vector<1x4x4xf32>,
    %c0_190 = arith.constant 0 : index
    %c0_191 = arith.constant 0 : index
    %c0_192 = arith.constant 0 : index
    %255 = vector.load %arg12[%c0_190, %c0_191, %c0_192] : memref<2x4x8xf32, #tpu.memory_space<vmem>>, vector<2x4x8xf32>
    %256 = vector.shape_cast %255 : vector<2x4x8xf32> to vector<8x8xf32>
    %257 = arith.truncf %256 : vector<8x8xf32> to vector<8x8xbf16>
    %cst_193 = arith.constant dense<0.000000e+00> : vector<8x16xf32>
    %258 = tpu.matmul %257, %2, %cst_193 {dimension_numbers = #tpu.dot_dimension_numbers<[1], [0], [0], [1], [0, 0, 1, 1], [], []>} : vector<8x8xbf16>, vector<8x16xbf16>, vector<8x16xf32> -> vector<8x16xf32>
    %259 = vector.shape_cast %258 : vector<8x16xf32> to vector<2x4x16xf32>
    %c0_194 = arith.constant 0 : index
    %c0_195 = arith.constant 0 : index
    %c1_196 = arith.constant 1 : index
    %c0_197 = arith.constant 0 : index
    %260 = vector.load %arg7[%c0_194, %c0_195, %c1_196, %c0_197] : memref<2x4x2x16xf32, #tpu.memory_space<vmem>>, vector<2x4x1x16xf32>
    %261 = vector.shape_cast %260 : vector<2x4x1x16xf32> to vector<2x4x16xf32>
    %262 = vector.shape_cast %259 : vector<2x4x16xf32> to vector<2x4x1x16xf32>
    tpu.vector_store %arg7[%c0_194, %c0_195, %c1_196, %c0_197], %262 {strides = array<i32>} : memref<2x4x2x16xf32, #tpu.memory_space<vmem>>, vector<2x4x1x16xf32>,
    return
  }
  func.func @transform_0(%arg0: i32) -> (i32, i32, i32, i32) {
    %c0_i32 = arith.constant 0 : i32
    %c0_i32_0 = arith.constant 0 : i32
    %c0_i32_1 = arith.constant 0 : i32
    %c0_i32_2 = arith.constant 0 : i32
    return %arg0, %c0_i32, %c0_i32_0, %c0_i32_1 : i32, i32, i32, i32
  }
  func.func @transform_1(%arg0: i32) -> (i32, i32, i32, i32) {
    %c0_i32 = arith.constant 0 : i32
    %c0_i32_0 = arith.constant 0 : i32
    %c0_i32_1 = arith.constant 0 : i32
    %c0_i32_2 = arith.constant 0 : i32
    return %arg0, %c0_i32, %c0_i32_0, %c0_i32_1 : i32, i32, i32, i32
  }
  func.func @transform_2(%arg0: i32) -> (i32, i32, i32, i32, i32) {
    %c0_i32 = arith.constant 0 : i32
    %c0_i32_0 = arith.constant 0 : i32
    %c0_i32_1 = arith.constant 0 : i32
    %c0_i32_2 = arith.constant 0 : i32
    %c0_i32_3 = arith.constant 0 : i32
    %c0_i32_4 = arith.constant 0 : i32
    return %c0_i32, %c0_i32_0, %c0_i32_1, %c0_i32_2, %c0_i32_3 : i32, i32, i32, i32, i32
  }
  func.func @transform_3(%arg0: i32) -> (i32, i32) {
    %c0_i32 = arith.constant 0 : i32
    %c0_i32_0 = arith.constant 0 : i32
    %c0_i32_1 = arith.constant 0 : i32
    return %c0_i32, %c0_i32_0 : i32, i32
  }
  func.func @transform_4(%arg0: i32) -> (i32, i32) {
    %c0_i32 = arith.constant 0 : i32
    %c0_i32_0 = arith.constant 0 : i32
    %c0_i32_1 = arith.constant 0 : i32
    return %c0_i32, %c0_i32_0 : i32, i32
  }
  func.func @transform_5(%arg0: i32) -> (i32, i32) {
    %c0_i32 = arith.constant 0 : i32
    %c0_i32_0 = arith.constant 0 : i32
    %c0_i32_1 = arith.constant 0 : i32
    return %c0_i32, %c0_i32_0 : i32, i32
  }
  func.func @transform_6(%arg0: i32) -> (i32, i32, i32, i32) {
    %c0_i32 = arith.constant 0 : i32
    %c0_i32_0 = arith.constant 0 : i32
    %c0_i32_1 = arith.constant 0 : i32
    %c0_i32_2 = arith.constant 0 : i32
    return %arg0, %c0_i32, %c0_i32_0, %c0_i32_1 : i32, i32, i32, i32
  }
}

</mosaic_0001>

<llo_original>
// kernel: tpu_custom_call.1
$region0: #{tpu_custom_call.1}
  #allocation0 [shape = 'u32[]', space=smem, size = 0x4, offset = 0x4, fixed_abs, tag = 'smem constant byte address 0x4 - core index']
  #allocation1 [shape = 'u32[72,128]{1,0:T(1,128)}', space=vmem, size = 0x9000, scoped, tag = 'internal scratch']
  #allocation2 [shape = 'f32[4,2,4]{2,1,0:T(2,128)}', space=vmem, size = 0x1000, scoped, tag = 'scratch operand']
  #allocation3 [shape = 'f32[4,2,4]{2,1,0:T(2,128)}', space=vmem, size = 0x1000, scoped, tag = 'scratch operand']
  #allocation4 [shape = 'f32[4,2,4]{2,1,0:T(2,128)}', space=vmem, size = 0x1000, scoped, tag = 'scratch operand']
  #allocation5 [shape = 'f32[4,2,4]{2,1,0:T(2,128)}', space=vmem, size = 0x1000, scoped, tag = 'scratch operand']
  #allocation6 [shape = 'f32[2,4,8]{2,1,0:T(4,128)}', space=vmem, size = 0x1000, scoped, tag = 'scratch operand']
  %s0 = inlined_call_operand.vmem [shape: f32[2,4,2,16], index: 0, kind: input, shape index: {}]
  %s1 = inlined_call_operand.hbm [shape: f32[2,4,2,16], index: 1, kind: input, shape index: {}]
  %s2 = inlined_call_operand.hbm [shape: f32[2,2,4,4,4], index: 2, kind: input, shape index: {}]
  %s3 = inlined_call_operand.vmem [shape: bf16[16,8], index: 3, kind: input, shape index: {}]
  %s4 = inlined_call_operand.vmem [shape: bf16[16,8], index: 4, kind: input, shape index: {}]
  %s5 = inlined_call_operand.vmem [shape: bf16[8,16], index: 5, kind: input, shape index: {}]
  %s6 = inlined_call_operand.hbm [shape: f32[2,4,2,16], index: 6, kind: output, shape index: {}]
  %s7 = sld [smem:[#allocation0]]
  $region42: #{tpu_custom_call.1} parent=0
    _
  %s9 = ssub.s32 1, %s7
  %s10 = scalar_select 0, %s9, %s7
  $region1: #{tpu_custom_call.1} parent=0
    #allocation7 [shape = 'u8[8192]{0}', space=vmem, size = 0x2000, scoped, tag = 'input window, operand 1, single buffered']
    #allocation8 [shape = 's32[1]{0}', space=sflag, size = 0x4, scoped, tag = 'scoped memory for tpu_custom_call.1']
    #allocation9 [shape = 's32[1]{0}', space=sflag, size = 0x4, scoped, tag = 'scoped memory for tpu_custom_call.1']
    #allocation10 [shape = 'u8[32768]{0}', space=vmem, size = 0x8000, scoped, tag = 'input window, operand 2, single buffered']
    #allocation11 [shape = 's32[1]{0}', space=sflag, size = 0x4, scoped, tag = 'scoped memory for tpu_custom_call.1']
    #allocation12 [shape = 'u8[8192]{0}', space=vmem, size = 0x2000, scoped, tag = 'output window, operand 0, single buffered']
    %11 = vsyncpa [#allocation8], 0
    %12 = vsyncpa [#allocation11], 0
    %13 = vsyncpa [#allocation9], 0
    // Predicated region
    $region2: #{tpu_custom_call.1} parent=1 // pred_check
      _
    $region3: #{tpu_custom_call.1} parent=1 // pred_check_branch
      %15 = sbr.rel (0) target = $region5
    $region4: #{tpu_custom_call.1} parent=1 // pred_region
      _
    $region5: #{tpu_custom_call.1} parent=1 // pred_fallthru
      _
    // Predicated region
    $region6: #{tpu_custom_call.1} parent=1 // pred_check
      _
    $region7: #{tpu_custom_call.1} parent=1 // pred_check_branch
      %17 = sbr.rel (0) target = $region9
    $region8: #{tpu_custom_call.1} parent=1 // pred_region
      %19 = vsyncadd [#allocation8], 0
      %s20 = sshll.u32 %s1, 4
      %s21 = int_to_ptr.hbm [resolvable:$true] %s20
      %s22 = sshll.u32 [#allocation7], 4
      %s23 = int_to_ptr.vmem [resolvable:$true] %s22
      %28 = dma.hbm_to_vmem [thread:$0]  %s21, 256, %s23, [#allocation8], 32, 32, 2
    $region9: #{tpu_custom_call.1} parent=1 // pred_fallthru
      _
    // Predicated region
    $region10: #{tpu_custom_call.1} parent=1 // pred_check
      _
    $region11: #{tpu_custom_call.1} parent=1 // pred_check_branch
      %30 = sbr.rel (0) target = $region13
    $region12: #{tpu_custom_call.1} parent=1 // pred_region
      %32 = vsyncadd [#allocation11], 0
      %s33 = sshll.u32 %s2, 4
      %s34 = int_to_ptr.hbm [resolvable:$true] %s33
      %s35 = sshll.u32 [#allocation10], 4
      %s36 = int_to_ptr.vmem [resolvable:$true] %s35
      %41 = dma.hbm_to_vmem [thread:$0]  %s34, 1024, %s36, [#allocation11], 64, 64, 4
    $region13: #{tpu_custom_call.1} parent=1 // pred_fallthru
      _
    // Predicated region
    $region14: #{tpu_custom_call.1} parent=1 // pred_check
      _
    $region15: #{tpu_custom_call.1} parent=1 // pred_check_branch
      %43 = sbr.rel (0) target = $region17
    $region16: #{tpu_custom_call.1} parent=1 // pred_region
      _
    $region17: #{tpu_custom_call.1} parent=1 // pred_fallthru
      _
    // Predicated region
    $region18: #{tpu_custom_call.1} parent=1 // pred_check
      _
    $region19: #{tpu_custom_call.1} parent=1 // pred_check_branch
      %45 = sbr.rel (0) target = $region21
    $region20: #{tpu_custom_call.1} parent=1 // pred_region
      _
    $region21: #{tpu_custom_call.1} parent=1 // pred_fallthru
      _
    // Predicated region
    $region22: #{tpu_custom_call.1} parent=1 // pred_check
      _
    $region23: #{tpu_custom_call.1} parent=1 // pred_check_branch
      %47 = sbr.rel (0) target = $region25
    $region24: #{tpu_custom_call.1} parent=1 // pred_region
      _
    $region25: #{tpu_custom_call.1} parent=1 // pred_fallthru
      _
    // Predicated region
    $region26: #{tpu_custom_call.1} parent=1 // pred_check
      _
    $region27: #{tpu_custom_call.1} parent=1 // pred_check_branch
      %49 = sbr.rel (0) target = $region29
    $region28: #{tpu_custom_call.1} parent=1 // pred_region
      %51 = dma.done [#allocation8], 256
    $region29: #{tpu_custom_call.1} parent=1 // pred_fallthru
      _
    // Predicated region
    $region30: #{tpu_custom_call.1} parent=1 // pred_check
      _
    $region31: #{tpu_custom_call.1} parent=1 // pred_check_branch
      %53 = sbr.rel (0) target = $region33
    $region32: #{tpu_custom_call.1} parent=1 // pred_region
      %55 = dma.done [#allocation11], 1024
    $region33: #{tpu_custom_call.1} parent=1 // pred_fallthru
      _
    %v57 = vld [vmem:[%s3] sm:$0xf]
    %v58 = vld [vmem:[%s3 + $0x4] sm:$0xf]
    %v59 = vld [vmem:[%s4] sm:$0xf]
    %v60 = vld [vmem:[%s4 + $0x4] sm:$0xf]
    %v61 = vld [vmem:[%s5] sm:$0xf]
    %v62 = vld [vmem:[%s0] sm:$0x1]
    %v63 = vld [vmem:[%s0 + $0x2] sm:$0x1]
    %v64 = vld [vmem:[%s0 + $0x4] sm:$0x1]
    %v65 = vld [vmem:[%s0 + $0x6] sm:$0x1]
    %v66 = vld [vmem:[%s0 + $0x8] sm:$0x1]
    %v67 = vld [vmem:[%s0 + $0xa] sm:$0x1]
    %v68 = vld [vmem:[%s0 + $0xc] sm:$0x1]
    %v69 = vld [vmem:[%s0 + $0xe] sm:$0x1]
    %v70 = vpack.c.bf16 %v62, %v62
    %v71 = vpack.c.bf16 %v63, %v63
    %v72 = vpack.c.bf16 %v64, %v64
    %v73 = vpack.c.bf16 %v65, %v65
    %v74 = vpack.c.bf16 %v66, %v66
    %v75 = vpack.c.bf16 %v67, %v67
    %v76 = vpack.c.bf16 %v68, %v68
    %v77 = vpack.c.bf16 %v69, %v69
    %v78 = vld [vmem:[#allocation7] sm:$0x1]
    %v79 = vld [vmem:[#allocation7 + $0x2] sm:$0x1]
    %v80 = vld [vmem:[#allocation7 + $0x4] sm:$0x1]
    %v81 = vld [vmem:[#allocation7 + $0x6] sm:$0x1]
    %v82 = vld [vmem:[#allocation7 + $0x8] sm:$0x1]
    %v83 = vld [vmem:[#allocation7 + $0xa] sm:$0x1]
    %v84 = vld [vmem:[#allocation7 + $0xc] sm:$0x1]
    %v85 = vld [vmem:[#allocation7 + $0xe] sm:$0x1]
    %v86 = vpack.c.bf16 %v78, %v78
    %v87 = vpack.c.bf16 %v79, %v79
    %v88 = vpack.c.bf16 %v80, %v80
    %v89 = vpack.c.bf16 %v81, %v81
    %v90 = vpack.c.bf16 %v82, %v82
    %v91 = vpack.c.bf16 %v83, %v83
    %v92 = vpack.c.bf16 %v84, %v84
    %v93 = vpack.c.bf16 %v85, %v85
    %v102 = vunpack.c.l.b16 %v70
    %v103 = vunpack.c.l.b16 %v71
    %v104 = vunpack.c.l.b16 %v72
    %v105 = vunpack.c.l.b16 %v73
    %v106 = vunpack.c.l.b16 %v74
    %v107 = vunpack.c.l.b16 %v75
    %v108 = vunpack.c.l.b16 %v76
    %v109 = vunpack.c.l.b16 %v77
    %v110 = vrot.slane %v103, 7
    %vm111 = vcmask 1041409
    %v112 = vsel %vm111, %v110, %v102
    %v113 = vrot.slane %v104, 6
    %vm114 = vcmask 1042434
    %v115 = vsel %vm114, %v113, %v112
    %v116 = vrot.slane %v105, 5
    %vm117 = vcmask 1043459
    %v118 = vsel %vm117, %v116, %v115
    %v119 = vrot.slane %v106, 4
    %vm120 = vcmask 1044484
    %v121 = vsel %vm120, %v119, %v118
    %v122 = vrot.slane %v107, 3
    %vm123 = vcmask 1045509
    %v124 = vsel %vm123, %v122, %v121
    %v125 = vrot.slane %v108, 2
    %vm126 = vcmask 1046534
    %v127 = vsel %vm126, %v125, %v124
    %v128 = vrot.slane %v109, 1
    %vm129 = vcmask 1047559
    %v130 = vsel %vm129, %v128, %v127
    %v131 = vpack.c.b16 %v130, %v130
    %v134 = vunpack.c.l.b16 %v57
    %v135 = vunpack.c.l.b16 %v58
    %v136 = vpack.c.b16 %v135, %v134
    %vm138 = vcmask 130048
    %v140 = vsel %vm138, %v131, 0
    %142 = vmatpush.bf16.msra.mxu0 0
    %143 = vmatpush.bf16.msra.mxu0 0
    %144 = vmatpush.bf16.msra.mxu0 0
    %145 = vmatpush.bf16.msra.mxu0 0
    %146 = vmatpush.bf16.msra.mxu0 0
    %147 = vmatpush.bf16.msra.mxu0 0
    %148 = vmatpush.bf16.msra.mxu0 0
    %149 = vmatpush.bf16.msra.mxu0 %v136
    %150 = vmatmul.bf16.gmra.mxu0 %v140
    %v151 = vpop.f32.mrf.mxu0
    %v152 = vadd.f32 0.0, %v151
    %v153 = vpop.f32.mrf.mxu0
    %154 = vdwg.mxu0
    %v156 = vrot.slane %v152, 4
    %v166 = vunpack.c.l.b16 %v86
    %v167 = vunpack.c.l.b16 %v87
    %v168 = vunpack.c.l.b16 %v88
    %v169 = vunpack.c.l.b16 %v89
    %v170 = vunpack.c.l.b16 %v90
    %v171 = vunpack.c.l.b16 %v91
    %v172 = vunpack.c.l.b16 %v92
    %v173 = vunpack.c.l.b16 %v93
    %v174 = vrot.slane %v167, 7
    %v175 = vsel %vm111, %v174, %v166
    %v176 = vrot.slane %v168, 6
    %v177 = vsel %vm114, %v176, %v175
    %v178 = vrot.slane %v169, 5
    %v179 = vsel %vm117, %v178, %v177
    %v180 = vrot.slane %v170, 4
    %v181 = vsel %vm120, %v180, %v179
    %v182 = vrot.slane %v171, 3
    %v183 = vsel %vm123, %v182, %v181
    %v184 = vrot.slane %v172, 2
    %v185 = vsel %vm126, %v184, %v183
    %v186 = vrot.slane %v173, 1
    %v187 = vsel %vm129, %v186, %v185
    %v188 = vpack.c.b16 %v187, %v187
    %v191 = vunpack.c.l.b16 %v59
    %v192 = vunpack.c.l.b16 %v60
    %v193 = vpack.c.b16 %v192, %v191
    %v196 = vsel %vm138, %v188, 0
    %198 = vmatpush.bf16.msra.mxu0 0
    %199 = vmatpush.bf16.msra.mxu0 0
    %200 = vmatpush.bf16.msra.mxu0 0
    %201 = vmatpush.bf16.msra.mxu0 0
    %202 = vmatpush.bf16.msra.mxu0 0
    %203 = vmatpush.bf16.msra.mxu0 0
    %204 = vmatpush.bf16.msra.mxu0 0
    %205 = vmatpush.bf16.msra.mxu0 %v193
    %206 = vmatmul.bf16.gmra.mxu0 %v196
    %v207 = vpop.f32.mrf.mxu0
    %v208 = vadd.f32 0.0, %v207
    %v209 = vpop.f32.mrf.mxu0
    %210 = vdwg.mxu0
    %v212 = vrot.slane %v208, 4
    %213 = vxpose.xlu0.b32.start [1/16] %v152, 128
    %214 = vxpose.xlu0.b32.cont [2/16] 0.0, 128
    %215 = vxpose.xlu0.b32.cont [3/16] 0.0, 128
    %216 = vxpose.xlu0.b32.cont [4/16] 0.0, 128
    %217 = vxpose.xlu0.b32.cont [5/16] 0.0, 128
    %218 = vxpose.xlu0.b32.cont [6/16] 0.0, 128
    %219 = vxpose.xlu0.b32.cont [7/16] 0.0, 128
    %220 = vxpose.xlu0.b32.cont [8/16] 0.0, 128
    %221 = vxpose.xlu0.b32.cont [9/16] 0.0, 128
    %222 = vxpose.xlu0.b32.cont [10/16] 0.0, 128
    %223 = vxpose.xlu0.b32.cont [11/16] 0.0, 128
    %224 = vxpose.xlu0.b32.cont [12/16] 0.0, 128
    %225 = vxpose.xlu0.b32.cont [13/16] 0.0, 128
    %226 = vxpose.xlu0.b32.cont [14/16] 0.0, 128
    %227 = vxpose.xlu0.b32.cont [15/16] 0.0, 128
    %228 = vxpose.xlu0.b32.end [16/16] 0.0, 128
    %v229 = vpop.trf.xlu0
    %v230 = vpop.trf.xlu0
    %v231 = vpop.trf.xlu0
    %v232 = vpop.trf.xlu0
    %v233 = vpop.trf.xlu0
    %v234 = vpop.trf.xlu0
    %v235 = vpop.trf.xlu0
    %v236 = vpop.trf.xlu0
    %v237 = vpop.trf.xlu0
    %v238 = vpop.trf.xlu0
    %v239 = vpop.trf.xlu0
    %v240 = vpop.trf.xlu0
    %v241 = vpop.trf.xlu0
    %v242 = vpop.trf.xlu0
    %v243 = vpop.trf.xlu0
    %v244 = vpop.trf.xlu0
    %245 = vxpose.xlu0.b32.start [1/16] %v156, 128
    %246 = vxpose.xlu0.b32.cont [2/16] 0.0, 128
    %247 = vxpose.xlu0.b32.cont [3/16] 0.0, 128
    %248 = vxpose.xlu0.b32.cont [4/16] 0.0, 128
    %249 = vxpose.xlu0.b32.cont [5/16] 0.0, 128
    %250 = vxpose.xlu0.b32.cont [6/16] 0.0, 128
    %251 = vxpose.xlu0.b32.cont [7/16] 0.0, 128
    %252 = vxpose.xlu0.b32.cont [8/16] 0.0, 128
    %253 = vxpose.xlu0.b32.cont [9/16] 0.0, 128
    %254 = vxpose.xlu0.b32.cont [10/16] 0.0, 128
    %255 = vxpose.xlu0.b32.cont [11/16] 0.0, 128
    %256 = vxpose.xlu0.b32.cont [12/16] 0.0, 128
    %257 = vxpose.xlu0.b32.cont [13/16] 0.0, 128
    %258 = vxpose.xlu0.b32.cont [14/16] 0.0, 128
    %259 = vxpose.xlu0.b32.cont [15/16] 0.0, 128
    %260 = vxpose.xlu0.b32.end [16/16] 0.0, 128
    %v261 = vpop.trf.xlu0
    %v262 = vpop.trf.xlu0
    %v263 = vpop.trf.xlu0
    %v264 = vpop.trf.xlu0
    %v265 = vpop.trf.xlu0
    %v266 = vpop.trf.xlu0
    %v267 = vpop.trf.xlu0
    %v268 = vpop.trf.xlu0
    %v269 = vpop.trf.xlu0
    %v270 = vpop.trf.xlu0
    %v271 = vpop.trf.xlu0
    %v272 = vpop.trf.xlu0
    %v273 = vpop.trf.xlu0
    %v274 = vpop.trf.xlu0
    %v275 = vpop.trf.xlu0
    %v276 = vpop.trf.xlu0
    %277 = vst [vmem:[#allocation1] ss:$2 sm:$0xff] %v152
    %v278 = vld.sshfl [vmem:[#allocation1] sm:$0xff pattern:$0x75316420]
    %s279 = scalar_lea.vmem [#allocation1], 16
    %280 = vst [vmem:[%s279] ss:$2 sm:$0xff] %v156
    %v281 = vld.sshfl [vmem:[#allocation1 + $0x10] sm:$0xff pattern:$0x75316420]
    %282 = vrot.lane.b32.xlu0 %v278, 124
    %v283 = vpop.permute.xlu0 %282
    %284 = vrot.lane.b32.xlu0 %v281, 124
    %v285 = vpop.permute.xlu0 %284
    %288 = vxpose.xlu0.b32.start [1/16] %v283, 128
    %289 = vxpose.xlu0.b32.cont [2/16] 0.0, 128
    %290 = vxpose.xlu0.b32.cont [3/16] 0.0, 128
    %291 = vxpose.xlu0.b32.cont [4/16] 0.0, 128
    %292 = vxpose.xlu0.b32.cont [5/16] 0.0, 128
    %293 = vxpose.xlu0.b32.cont [6/16] 0.0, 128
    %294 = vxpose.xlu0.b32.cont [7/16] 0.0, 128
    %295 = vxpose.xlu0.b32.cont [8/16] 0.0, 128
    %296 = vxpose.xlu0.b32.cont [9/16] 0.0, 128
    %297 = vxpose.xlu0.b32.cont [10/16] 0.0, 128
    %298 = vxpose.xlu0.b32.cont [11/16] 0.0, 128
    %299 = vxpose.xlu0.b32.cont [12/16] 0.0, 128
    %300 = vxpose.xlu0.b32.cont [13/16] 0.0, 128
    %301 = vxpose.xlu0.b32.cont [14/16] 0.0, 128
    %302 = vxpose.xlu0.b32.cont [15/16] 0.0, 128
    %303 = vxpose.xlu0.b32.end [16/16] 0.0, 128
    %v304 = vpop.trf.xlu0
    %v305 = vpop.trf.xlu0
    %v306 = vpop.trf.xlu0
    %v307 = vpop.trf.xlu0
    %v308 = vpop.trf.xlu0
    %v309 = vpop.trf.xlu0
    %v310 = vpop.trf.xlu0
    %v311 = vpop.trf.xlu0
    %v312 = vpop.trf.xlu0
    %v313 = vpop.trf.xlu0
    %v314 = vpop.trf.xlu0
    %v315 = vpop.trf.xlu0
    %v316 = vpop.trf.xlu0
    %v317 = vpop.trf.xlu0
    %v318 = vpop.trf.xlu0
    %v319 = vpop.trf.xlu0
    %320 = vxpose.xlu0.b32.start [1/16] %v285, 128
    %321 = vxpose.xlu0.b32.cont [2/16] 0.0, 128
    %322 = vxpose.xlu0.b32.cont [3/16] 0.0, 128
    %323 = vxpose.xlu0.b32.cont [4/16] 0.0, 128
    %324 = vxpose.xlu0.b32.cont [5/16] 0.0, 128
    %325 = vxpose.xlu0.b32.cont [6/16] 0.0, 128
    %326 = vxpose.xlu0.b32.cont [7/16] 0.0, 128
    %327 = vxpose.xlu0.b32.cont [8/16] 0.0, 128
    %328 = vxpose.xlu0.b32.cont [9/16] 0.0, 128
    %329 = vxpose.xlu0.b32.cont [10/16] 0.0, 128
    %330 = vxpose.xlu0.b32.cont [11/16] 0.0, 128
    %331 = vxpose.xlu0.b32.cont [12/16] 0.0, 128
    %332 = vxpose.xlu0.b32.cont [13/16] 0.0, 128
    %333 = vxpose.xlu0.b32.cont [14/16] 0.0, 128
    %334 = vxpose.xlu0.b32.cont [15/16] 0.0, 128
    %335 = vxpose.xlu0.b32.end [16/16] 0.0, 128
    %v336 = vpop.trf.xlu0
    %v337 = vpop.trf.xlu0
    %v338 = vpop.trf.xlu0
    %v339 = vpop.trf.xlu0
    %v340 = vpop.trf.xlu0
    %v341 = vpop.trf.xlu0
    %v342 = vpop.trf.xlu0
    %v343 = vpop.trf.xlu0
    %v344 = vpop.trf.xlu0
    %v345 = vpop.trf.xlu0
    %v346 = vpop.trf.xlu0
    %v347 = vpop.trf.xlu0
    %v348 = vpop.trf.xlu0
    %v349 = vpop.trf.xlu0
    %v350 = vpop.trf.xlu0
    %v351 = vpop.trf.xlu0
    %vm352 = vcmask 31744
    %v354 = vsel %vm352, %v229, 0
    %vm356 = vcmask 1043456
    %v357 = vsel %vm356, %v208, 0
    %359 = vmatpush.msra.mxu0 0.0
    %360 = vmatpush.msra.mxu0 0.0
    %361 = vmatpush.msra.mxu0 0.0
    %362 = vmatpush.msra.mxu0 0.0
    %363 = vmatpush.msra.mxu0 0.0
    %364 = vmatpush.msra.mxu0 0.0
    %365 = vmatpush.msra.mxu0 0.0
    %366 = vmatpush.msra.mxu0 0.0
    %367 = vmatpush.msra.mxu0 0.0
    %368 = vmatpush.msra.mxu0 0.0
    %369 = vmatpush.msra.mxu0 0.0
    %370 = vmatpush.msra.mxu0 0.0
    %371 = vmatpush.msra.mxu0 0.0
    %372 = vmatpush.msra.mxu0 0.0
    %373 = vmatpush.msra.mxu0 0.0
    %374 = vmatpush.msra.mxu0 %v357
    %375 = vmatmul.f32.gmra.mxu0 %v354
    %v376 = vpop.f32.mrf.mxu0
    %v377 = vadd.f32 0.0, %v376
    %378 = vdwg.mxu0
    %v380 = vsel %vm352, %v261, 0
    %v382 = vsel %vm356, %v212, 0
    %384 = vmatpush.msra.mxu0 0.0
    %385 = vmatpush.msra.mxu0 0.0
    %386 = vmatpush.msra.mxu0 0.0
    %387 = vmatpush.msra.mxu0 0.0
    %388 = vmatpush.msra.mxu0 0.0
    %389 = vmatpush.msra.mxu0 0.0
    %390 = vmatpush.msra.mxu0 0.0
    %391 = vmatpush.msra.mxu0 0.0
    %392 = vmatpush.msra.mxu0 0.0
    %393 = vmatpush.msra.mxu0 0.0
    %394 = vmatpush.msra.mxu0 0.0
    %395 = vmatpush.msra.mxu0 0.0
    %396 = vmatpush.msra.mxu0 0.0
    %397 = vmatpush.msra.mxu0 0.0
    %398 = vmatpush.msra.mxu0 0.0
    %399 = vmatpush.msra.mxu0 %v382
    %400 = vmatmul.f32.gmra.mxu0 %v380
    %v401 = vpop.f32.mrf.mxu0
    %v402 = vadd.f32 0.0, %v401
    %403 = vdwg.mxu0
    %404 = vst [vmem:[#allocation1] ss:$2 sm:$0xff] %v208
    %v405 = vld.sshfl [vmem:[#allocation1] sm:$0xff pattern:$0x75316420]
    %406 = vrot.lane.b32.xlu0 %v405, 124
    %v407 = vpop.permute.xlu0 %406
    %v409 = vsel %vm352, %v304, 0
    %v411 = vsel %vm356, %v407, 0
    %413 = vmatpush.msra.mxu0 0.0
    %414 = vmatpush.msra.mxu0 0.0
    %415 = vmatpush.msra.mxu0 0.0
    %416 = vmatpush.msra.mxu0 0.0
    %417 = vmatpush.msra.mxu0 0.0
    %418 = vmatpush.msra.mxu0 0.0
    %419 = vmatpush.msra.mxu0 0.0
    %420 = vmatpush.msra.mxu0 0.0
    %421 = vmatpush.msra.mxu0 0.0
    %422 = vmatpush.msra.mxu0 0.0
    %423 = vmatpush.msra.mxu0 0.0
    %424 = vmatpush.msra.mxu0 0.0
    %425 = vmatpush.msra.mxu0 0.0
    %426 = vmatpush.msra.mxu0 0.0
    %427 = vmatpush.msra.mxu0 0.0
    %428 = vmatpush.msra.mxu0 %v411
    %429 = vmatmul.f32.gmra.mxu0 %v409
    %v430 = vpop.f32.mrf.mxu0
    %v431 = vadd.f32 0.0, %v430
    %432 = vdwg.mxu0
    %433 = vst [vmem:[#allocation1] ss:$2 sm:$0xff] %v212
    %v434 = vld.sshfl [vmem:[#allocation1] sm:$0xff pattern:$0x75316420]
    %435 = vrot.lane.b32.xlu0 %v434, 124
    %v436 = vpop.permute.xlu0 %435
    %v438 = vsel %vm352, %v336, 0
    %v440 = vsel %vm356, %v436, 0
    %442 = vmatpush.msra.mxu0 0.0
    %443 = vmatpush.msra.mxu0 0.0
    %444 = vmatpush.msra.mxu0 0.0
    %445 = vmatpush.msra.mxu0 0.0
    %446 = vmatpush.msra.mxu0 0.0
    %447 = vmatpush.msra.mxu0 0.0
    %448 = vmatpush.msra.mxu0 0.0
    %449 = vmatpush.msra.mxu0 0.0
    %450 = vmatpush.msra.mxu0 0.0
    %451 = vmatpush.msra.mxu0 0.0
    %452 = vmatpush.msra.mxu0 0.0
    %453 = vmatpush.msra.mxu0 0.0
    %454 = vmatpush.msra.mxu0 0.0
    %455 = vmatpush.msra.mxu0 0.0
    %456 = vmatpush.msra.mxu0 0.0
    %457 = vmatpush.msra.mxu0 %v440
    %458 = vmatmul.f32.gmra.mxu0 %v438
    %v459 = vpop.f32.mrf.mxu0
    %v460 = vadd.f32 0.0, %v459
    %461 = vdwg.mxu0
    %v462 = vsub.f32 %v377, %v431
    %v463 = vsub.f32 %v402, %v460
    %464 = vmatpush.msra.mxu0 0.0
    %465 = vmatpush.msra.mxu0 0.0
    %466 = vmatpush.msra.mxu0 0.0
    %467 = vmatpush.msra.mxu0 0.0
    %468 = vmatpush.msra.mxu0 0.0
    %469 = vmatpush.msra.mxu0 0.0
    %470 = vmatpush.msra.mxu0 0.0
    %471 = vmatpush.msra.mxu0 0.0
    %472 = vmatpush.msra.mxu0 0.0
    %473 = vmatpush.msra.mxu0 0.0
    %474 = vmatpush.msra.mxu0 0.0
    %475 = vmatpush.msra.mxu0 0.0
    %476 = vmatpush.msra.mxu0 0.0
    %477 = vmatpush.msra.mxu0 0.0
    %478 = vmatpush.msra.mxu0 0.0
    %479 = vmatpush.msra.mxu0 %v357
    %480 = vmatmul.f32.gmra.mxu0 %v409
    %v481 = vpop.f32.mrf.mxu0
    %v482 = vadd.f32 0.0, %v481
    %483 = vdwg.mxu0
    %484 = vmatpush.msra.mxu0 0.0
    %485 = vmatpush.msra.mxu0 0.0
    %486 = vmatpush.msra.mxu0 0.0
    %487 = vmatpush.msra.mxu0 0.0
    %488 = vmatpush.msra.mxu0 0.0
    %489 = vmatpush.msra.mxu0 0.0
    %490 = vmatpush.msra.mxu0 0.0
    %491 = vmatpush.msra.mxu0 0.0
    %492 = vmatpush.msra.mxu0 0.0
    %493 = vmatpush.msra.mxu0 0.0
    %494 = vmatpush.msra.mxu0 0.0
    %495 = vmatpush.msra.mxu0 0.0
    %496 = vmatpush.msra.mxu0 0.0
    %497 = vmatpush.msra.mxu0 0.0
    %498 = vmatpush.msra.mxu0 0.0
    %499 = vmatpush.msra.mxu0 %v382
    %500 = vmatmul.f32.gmra.mxu0 %v438
    %v501 = vpop.f32.mrf.mxu0
    %v502 = vadd.f32 0.0, %v501
    %503 = vdwg.mxu0
    %504 = vst [vmem:[#allocation1] ss:$2 sm:$0xff] %v208
    %v505 = vld.sshfl [vmem:[#allocation1] sm:$0xff pattern:$0x75316420]
    %506 = vrot.lane.b32.xlu0 %v505, 124
    %v507 = vpop.permute.xlu0 %506
    %v508 = vsel %vm356, %v507, 0
    %510 = vmatpush.msra.mxu0 0.0
    %511 = vmatpush.msra.mxu0 0.0
    %512 = vmatpush.msra.mxu0 0.0
    %513 = vmatpush.msra.mxu0 0.0
    %514 = vmatpush.msra.mxu0 0.0
    %515 = vmatpush.msra.mxu0 0.0
    %516 = vmatpush.msra.mxu0 0.0
    %517 = vmatpush.msra.mxu0 0.0
    %518 = vmatpush.msra.mxu0 0.0
    %519 = vmatpush.msra.mxu0 0.0
    %520 = vmatpush.msra.mxu0 0.0
    %521 = vmatpush.msra.mxu0 0.0
    %522 = vmatpush.msra.mxu0 0.0
    %523 = vmatpush.msra.mxu0 0.0
    %524 = vmatpush.msra.mxu0 0.0
    %525 = vmatpush.msra.mxu0 %v508
    %526 = vmatmul.f32.gmra.mxu0 %v354
    %v527 = vpop.f32.mrf.mxu0
    %v528 = vadd.f32 %v482, %v527
    %529 = vdwg.mxu0
    %530 = vst [vmem:[#allocation1] ss:$2 sm:$0xff] %v212
    %v531 = vld.sshfl [vmem:[#allocation1] sm:$0xff pattern:$0x75316420]
    %532 = vrot.lane.b32.xlu0 %v531, 124
    %v533 = vpop.permute.xlu0 %532
    %v534 = vsel %vm356, %v533, 0
    %536 = vmatpush.msra.mxu0 0.0
    %537 = vmatpush.msra.mxu0 0.0
    %538 = vmatpush.msra.mxu0 0.0
    %539 = vmatpush.msra.mxu0 0.0
    %540 = vmatpush.msra.mxu0 0.0
    %541 = vmatpush.msra.mxu0 0.0
    %542 = vmatpush.msra.mxu0 0.0
    %543 = vmatpush.msra.mxu0 0.0
    %544 = vmatpush.msra.mxu0 0.0
    %545 = vmatpush.msra.mxu0 0.0
    %546 = vmatpush.msra.mxu0 0.0
    %547 = vmatpush.msra.mxu0 0.0
    %548 = vmatpush.msra.mxu0 0.0
    %549 = vmatpush.msra.mxu0 0.0
    %550 = vmatpush.msra.mxu0 0.0
    %551 = vmatpush.msra.mxu0 %v534
    %552 = vmatmul.f32.gmra.mxu0 %v380
    %v553 = vpop.f32.mrf.mxu0
    %v554 = vadd.f32 %v502, %v553
    %555 = vdwg.mxu0
    %v556 = vand.u32 2147483647, %v462
    %v557 = vand.u32 2147483647, %v463
    %v558 = vmul.f32 %v556, -2.0
    %v559 = vmul.f32 %v557, -2.0
    %v560 = vmul.f32 %v558, 1.442695
    %v561 = vpow.pop %v560
    %v562 = vmul.f32 %v559, 1.442695
    %v563 = vpow.pop %v562
    %v564 = vmul.f32 %v528, 2.0
    %v565 = vmul.f32 %v554, 2.0
    %v566 = vand.u32 2147483647, %v564
    %vm567 = vcmp.le.f32.partialorder %v566, 0.7853982
    %vm568 = vcmp.lt.s32.totalorder %v564, 0
    %v569 = vand.u32 %v564, 2139095040
    %v570 = vshrl.u32 %v569, 23
    %v571 = vsub.s32 %v570, 127
    %v572 = vand.u32 2147483647, %v564
    %v573 = vand.u32 %v572, 8388607
    %v574 = vor.u32 %v573, 8388608
    %v575 = vsub.s32 0, %v574
    %v576 = vadd.s32 %v571, 1
    %vm577 = vcmp.gt.s32.totalorder %v576, 0
    %v578 = vsel %vm577, %v576, 0
    %v579 = vshrl.u32 %v578, 5
    %v580 = vand.u32 %v578, 31
    %v581 = vsub.s32 32, %v580
    %v582 = vshrl.u32 683565275, %v581
    %v583 = vshll.u32 683565275, %v580
    %v584 = vshrl.u32 2475754826, %v581
    %v585 = vor.u32 %v583, %v584
    %v586 = vshll.u32 2475754826, %v580
    %v587 = vshrl.u32 2131351028, %v581
    %v588 = vor.u32 %v586, %v587
    %v589 = vshll.u32 2131351028, %v580
    %v590 = vshrl.u32 2102212464, %v581
    %v591 = vor.u32 %v589, %v590
    %v592 = vshll.u32 2102212464, %v580
    %v593 = vshrl.u32 920167782, %v581
    %v594 = vor.u32 %v592, %v593
    %v595 = vshll.u32 920167782, %v580
    %v596 = vshrl.u32 1326507024, %v581
    %v597 = vor.u32 %v595, %v596
    %vm598 = vcmp.lt.s32.totalorder %v579, 1
    %vm599 = vcmp.lt.s32.totalorder %v579, 2
    %vm600 = vcmp.lt.s32.totalorder %v579, 3
    %vm601 = vcmp.lt.s32.totalorder %v579, 4
    %v602 = vsel %vm598, %v582, %v585
    %v603 = vsel %vm601, %v591, 2102212464
    %v604 = vsel %vm600, %v588, %v603
    %v605 = vsel %vm599, %v602, %v604
    %v606 = vsel %vm598, %v585, %v588
    %v607 = vsel %vm601, %v594, 920167782
    %v608 = vsel %vm600, %v591, %v607
    %v609 = vsel %vm599, %v606, %v608
    %v610 = vsel %vm598, %v588, %v591
    %v611 = vsel %vm601, %v597, 1326507024
    %v612 = vsel %vm600, %v594, %v611
    %v613 = vsel %vm599, %v610, %v612
    %v614 = vshll.u32 %v574, 8
    %v615 = vand.u32 %v614, 65535
    %v616 = vshrl.u32 %v614, 16
    %v617 = vand.u32 %v613, 65535
    %v618 = vshrl.u32 %v613, 16
    %v619 = vmul.u32 %v615, %v617
    %v620 = vmul.u32 %v615, %v618
    %v621 = vmul.u32 %v616, %v617
    %v622 = vmul.u32 %v616, %v618
    %v623 = vshll.u32 %v620, 16
    %v624 = vshrl.u32 %v620, 16
    %v625 = vshll.u32 %v621, 16
    %v626 = vshrl.u32 %v621, 16
    %vm627 = vc.u32 %v619, %v623
    %v628 = vsel %vm627, 1, 0
    %v629 = vadd.s32 %v619, %v623
    %v630 = vadd.s32 %v622, %v628
    %vm631 = vc.u32 %v629, %v625
    %v632 = vsel %vm631, 1, 0
    %v633 = vadd.s32 %v629, %v625
    %v634 = vadd.s32 %v630, %v632
    %v635 = vadd.s32 %v634, %v624
    %v636 = vadd.s32 %v635, %v626
    %v637 = vand.u32 %v614, 65535
    %v638 = vshrl.u32 %v614, 16
    %v639 = vand.u32 %v609, 65535
    %v640 = vshrl.u32 %v609, 16
    %v641 = vmul.u32 %v637, %v639
    %v642 = vmul.u32 %v637, %v640
    %v643 = vmul.u32 %v638, %v639
    %v644 = vmul.u32 %v638, %v640
    %v645 = vshll.u32 %v642, 16
    %v646 = vshrl.u32 %v642, 16
    %v647 = vshll.u32 %v643, 16
    %v648 = vshrl.u32 %v643, 16
    %vm649 = vc.u32 %v641, %v645
    %v650 = vsel %vm649, 1, 0
    %v651 = vadd.s32 %v641, %v645
    %v652 = vadd.s32 %v644, %v650
    %vm653 = vc.u32 %v651, %v647
    %v654 = vsel %vm653, 1, 0
    %v655 = vadd.s32 %v651, %v647
    %v656 = vadd.s32 %v652, %v654
    %v657 = vadd.s32 %v656, %v646
    %v658 = vadd.s32 %v657, %v648
    %v659 = vmul.u32 %v614, %v605
    %v660 = vadd.s32 %v636, %v655
    %vm661 = vc.u32 %v636, %v655
    %v662 = vadd.s32 %v658, 1
    %v663 = vsel %vm661, %v662, %v658
    %v664 = vadd.s32 %v659, %v663
    %v665 = vadd.s32 %v664, 536870912
    %v666 = vshrl.u32 %v665, 30
    %v667 = vshll.u32 %v666, 30
    %v668 = vsub.s32 %v664, %v667
    %vm669 = vcmp.lt.s32.totalorder %v668, 0
    %v670 = vsub.s32 0, %v668
    %v671 = vsel %vm669, %v670, %v668
    %v672 = vclz %v671
    %v673 = vsub.s32 %v672, 2
    %vm674 = vcmp.gt.s32.totalorder 0, %v673
    %v675 = vsel %vm674, 0, %v673
    %v676 = vsub.s32 32, %v675
    %v677 = vshll.u32 %v668, %v675
    %v678 = vshrl.u32 %v660, %v676
    %v679 = vor.u32 %v677, %v678
    %v680 = vsub.s32 4294967266, %v675
    %v681 = vadd.s32 %v680, 127
    %v682 = vshll.u32 %v681, 23
    %v683 = vor.u32 4788187, %v682
    %v684 = vand.u32 2147483647, %v683
    %v686 = vcvt.s32.f32 %v679
    %v687 = vmul.f32 %v686, %v684
    %v688 = vxor.u32 %v687, 2147483648
    %v689 = vsel %vm568, %v688, %v687
    %v690 = vsub.s32 4, %v666
    %v691 = vsel %vm568, %v690, %v666
    %v692 = vsel %vm567, %v564, %v689
    %v693 = vsel %vm567, 0, %v691
    %v694 = vmul.f32 %v692, %v692
    %v695 = vmul.f32 %v694, -0.001358992
    %v696 = vadd.f32 %v695, 0.041655596
    %v697 = vmul.f32 %v694, %v696
    %v698 = vadd.f32 %v697, -0.4999988
    %v699 = vmul.f32 %v694, %v698
    %v700 = vadd.f32 1.0, %v699
    %v701 = vmul.f32 %v692, %v692
    %v702 = vmul.f32 %v701, -0.00019511016
    %v703 = vadd.f32 %v702, 0.008332121
    %v704 = vmul.f32 %v701, %v703
    %v705 = vadd.f32 %v704, -0.16666654
    %v706 = vmul.f32 %v701, %v705
    %v707 = vadd.f32 %v706, 1.0
    %v708 = vmul.f32 %v707, %v692
    %vm709 = vweird.f32 %v564
    %v710 = vand.u32 %v693, 3
    %vm711 = vcmp.lt.s32.totalorder %v710, 2
    %vm712 = vcmp.eq.s32.totalorder %v710, 0
    %v713 = vxor.u32 %v708, 2147483648
    %v714 = vsel %vm712, %v700, %v713
    %vm715 = vcmp.eq.s32.totalorder %v710, 2
    %v716 = vxor.u32 %v700, 2147483648
    %v717 = vsel %vm715, %v716, %v708
    %v718 = vsel %vm711, %v714, %v717
    %v719 = vsel %vm709, nan, %v718
    %v720 = vand.u32 2147483647, %v565
    %vm721 = vcmp.le.f32.partialorder %v720, 0.7853982
    %vm722 = vcmp.lt.s32.totalorder %v565, 0
    %v723 = vand.u32 %v565, 2139095040
    %v724 = vshrl.u32 %v723, 23
    %v725 = vsub.s32 %v724, 127
    %v726 = vand.u32 2147483647, %v565
    %v727 = vand.u32 %v726, 8388607
    %v728 = vor.u32 %v727, 8388608
    %v729 = vsub.s32 0, %v728
    %v730 = vadd.s32 %v725, 1
    %vm731 = vcmp.gt.s32.totalorder %v730, 0
    %v732 = vsel %vm731, %v730, 0
    %v733 = vshrl.u32 %v732, 5
    %v734 = vand.u32 %v732, 31
    %v735 = vsub.s32 32, %v734
    %v736 = vshrl.u32 683565275, %v735
    %v737 = vshll.u32 683565275, %v734
    %v738 = vshrl.u32 2475754826, %v735
    %v739 = vor.u32 %v737, %v738
    %v740 = vshll.u32 2475754826, %v734
    %v741 = vshrl.u32 2131351028, %v735
    %v742 = vor.u32 %v740, %v741
    %v743 = vshll.u32 2131351028, %v734
    %v744 = vshrl.u32 2102212464, %v735
    %v745 = vor.u32 %v743, %v744
    %v746 = vshll.u32 2102212464, %v734
    %v747 = vshrl.u32 920167782, %v735
    %v748 = vor.u32 %v746, %v747
    %v749 = vshll.u32 920167782, %v734
    %v750 = vshrl.u32 1326507024, %v735
    %v751 = vor.u32 %v749, %v750
    %vm752 = vcmp.lt.s32.totalorder %v733, 1
    %vm753 = vcmp.lt.s32.totalorder %v733, 2
    %vm754 = vcmp.lt.s32.totalorder %v733, 3
    %vm755 = vcmp.lt.s32.totalorder %v733, 4
    %v756 = vsel %vm752, %v736, %v739
    %v757 = vsel %vm755, %v745, 2102212464
    %v758 = vsel %vm754, %v742, %v757
    %v759 = vsel %vm753, %v756, %v758
    %v760 = vsel %vm752, %v739, %v742
    %v761 = vsel %vm755, %v748, 920167782
    %v762 = vsel %vm754, %v745, %v761
    %v763 = vsel %vm753, %v760, %v762
    %v764 = vsel %vm752, %v742, %v745
    %v765 = vsel %vm755, %v751, 1326507024
    %v766 = vsel %vm754, %v748, %v765
    %v767 = vsel %vm753, %v764, %v766
    %v768 = vshll.u32 %v728, 8
    %v769 = vand.u32 %v768, 65535
    %v770 = vshrl.u32 %v768, 16
    %v771 = vand.u32 %v767, 65535
    %v772 = vshrl.u32 %v767, 16
    %v773 = vmul.u32 %v769, %v771
    %v774 = vmul.u32 %v769, %v772
    %v775 = vmul.u32 %v770, %v771
    %v776 = vmul.u32 %v770, %v772
    %v777 = vshll.u32 %v774, 16
    %v778 = vshrl.u32 %v774, 16
    %v779 = vshll.u32 %v775, 16
    %v780 = vshrl.u32 %v775, 16
    %vm781 = vc.u32 %v773, %v777
    %v782 = vsel %vm781, 1, 0
    %v783 = vadd.s32 %v773, %v777
    %v784 = vadd.s32 %v776, %v782
    %vm785 = vc.u32 %v783, %v779
    %v786 = vsel %vm785, 1, 0
    %v787 = vadd.s32 %v783, %v779
    %v788 = vadd.s32 %v784, %v786
    %v789 = vadd.s32 %v788, %v778
    %v790 = vadd.s32 %v789, %v780
    %v791 = vand.u32 %v768, 65535
    %v792 = vshrl.u32 %v768, 16
    %v793 = vand.u32 %v763, 65535
    %v794 = vshrl.u32 %v763, 16
    %v795 = vmul.u32 %v791, %v793
    %v796 = vmul.u32 %v791, %v794
    %v797 = vmul.u32 %v792, %v793
    %v798 = vmul.u32 %v792, %v794
    %v799 = vshll.u32 %v796, 16
    %v800 = vshrl.u32 %v796, 16
    %v801 = vshll.u32 %v797, 16
    %v802 = vshrl.u32 %v797, 16
    %vm803 = vc.u32 %v795, %v799
    %v804 = vsel %vm803, 1, 0
    %v805 = vadd.s32 %v795, %v799
    %v806 = vadd.s32 %v798, %v804
    %vm807 = vc.u32 %v805, %v801
    %v808 = vsel %vm807, 1, 0
    %v809 = vadd.s32 %v805, %v801
    %v810 = vadd.s32 %v806, %v808
    %v811 = vadd.s32 %v810, %v800
    %v812 = vadd.s32 %v811, %v802
    %v813 = vmul.u32 %v768, %v759
    %v814 = vadd.s32 %v790, %v809
    %vm815 = vc.u32 %v790, %v809
    %v816 = vadd.s32 %v812, 1
    %v817 = vsel %vm815, %v816, %v812
    %v818 = vadd.s32 %v813, %v817
    %v819 = vadd.s32 %v818, 536870912
    %v820 = vshrl.u32 %v819, 30
    %v821 = vshll.u32 %v820, 30
    %v822 = vsub.s32 %v818, %v821
    %vm823 = vcmp.lt.s32.totalorder %v822, 0
    %v824 = vsub.s32 0, %v822
    %v825 = vsel %vm823, %v824, %v822
    %v826 = vclz %v825
    %v827 = vsub.s32 %v826, 2
    %vm828 = vcmp.gt.s32.totalorder 0, %v827
    %v829 = vsel %vm828, 0, %v827
    %v830 = vsub.s32 32, %v829
    %v831 = vshll.u32 %v822, %v829
    %v832 = vshrl.u32 %v814, %v830
    %v833 = vor.u32 %v831, %v832
    %v834 = vsub.s32 4294967266, %v829
    %v835 = vadd.s32 %v834, 127
    %v836 = vshll.u32 %v835, 23
    %v837 = vor.u32 4788187, %v836
    %v838 = vand.u32 2147483647, %v837
    %v840 = vcvt.s32.f32 %v833
    %v841 = vmul.f32 %v840, %v838
    %v842 = vxor.u32 %v841, 2147483648
    %v843 = vsel %vm722, %v842, %v841
    %v844 = vsub.s32 4, %v820
    %v845 = vsel %vm722, %v844, %v820
    %v846 = vsel %vm721, %v565, %v843
    %v847 = vsel %vm721, 0, %v845
    %v848 = vmul.f32 %v846, %v846
    %v849 = vmul.f32 %v848, -0.001358992
    %v850 = vadd.f32 %v849, 0.041655596
    %v851 = vmul.f32 %v848, %v850
    %v852 = vadd.f32 %v851, -0.4999988
    %v853 = vmul.f32 %v848, %v852
    %v854 = vadd.f32 1.0, %v853
    %v855 = vmul.f32 %v846, %v846
    %v856 = vmul.f32 %v855, -0.00019511016
    %v857 = vadd.f32 %v856, 0.008332121
    %v858 = vmul.f32 %v855, %v857
    %v859 = vadd.f32 %v858, -0.16666654
    %v860 = vmul.f32 %v855, %v859
    %v861 = vadd.f32 %v860, 1.0
    %v862 = vmul.f32 %v861, %v846
    %vm863 = vweird.f32 %v565
    %v864 = vand.u32 %v847, 3
    %vm865 = vcmp.lt.s32.totalorder %v864, 2
    %vm866 = vcmp.eq.s32.totalorder %v864, 0
    %v867 = vxor.u32 %v862, 2147483648
    %v868 = vsel %vm866, %v854, %v867
    %vm869 = vcmp.eq.s32.totalorder %v864, 2
    %v870 = vxor.u32 %v854, 2147483648
    %v871 = vsel %vm869, %v870, %v862
    %v872 = vsel %vm865, %v868, %v871
    %v873 = vsel %vm863, nan, %v872
    %v874 = vand.u32 2147483647, %v564
    %vm875 = vcmp.le.f32.partialorder %v874, 0.7853982
    %vm876 = vcmp.lt.s32.totalorder %v564, 0
    %v877 = vand.u32 %v564, 2139095040
    %v878 = vshrl.u32 %v877, 23
    %v879 = vsub.s32 %v878, 127
    %v880 = vand.u32 2147483647, %v564
    %v881 = vand.u32 %v880, 8388607
    %v882 = vor.u32 %v881, 8388608
    %v883 = vsub.s32 0, %v882
    %v884 = vadd.s32 %v879, 1
    %vm885 = vcmp.gt.s32.totalorder %v884, 0
    %v886 = vsel %vm885, %v884, 0
    %v887 = vshrl.u32 %v886, 5
    %v888 = vand.u32 %v886, 31
    %v889 = vsub.s32 32, %v888
    %v890 = vshrl.u32 683565275, %v889
    %v891 = vshll.u32 683565275, %v888
    %v892 = vshrl.u32 2475754826, %v889
    %v893 = vor.u32 %v891, %v892
    %v894 = vshll.u32 2475754826, %v888
    %v895 = vshrl.u32 2131351028, %v889
    %v896 = vor.u32 %v894, %v895
    %v897 = vshll.u32 2131351028, %v888
    %v898 = vshrl.u32 2102212464, %v889
    %v899 = vor.u32 %v897, %v898
    %v900 = vshll.u32 2102212464, %v888
    %v901 = vshrl.u32 920167782, %v889
    %v902 = vor.u32 %v900, %v901
    %v903 = vshll.u32 920167782, %v888
    %v904 = vshrl.u32 1326507024, %v889
    %v905 = vor.u32 %v903, %v904
    %vm906 = vcmp.lt.s32.totalorder %v887, 1
    %vm907 = vcmp.lt.s32.totalorder %v887, 2
    %vm908 = vcmp.lt.s32.totalorder %v887, 3
    %vm909 = vcmp.lt.s32.totalorder %v887, 4
    %v910 = vsel %vm906, %v890, %v893
    %v911 = vsel %vm909, %v899, 2102212464
    %v912 = vsel %vm908, %v896, %v911
    %v913 = vsel %vm907, %v910, %v912
    %v914 = vsel %vm906, %v893, %v896
    %v915 = vsel %vm909, %v902, 920167782
    %v916 = vsel %vm908, %v899, %v915
    %v917 = vsel %vm907, %v914, %v916
    %v918 = vsel %vm906, %v896, %v899
    %v919 = vsel %vm909, %v905, 1326507024
    %v920 = vsel %vm908, %v902, %v919
    %v921 = vsel %vm907, %v918, %v920
    %v922 = vshll.u32 %v882, 8
    %v923 = vand.u32 %v922, 65535
    %v924 = vshrl.u32 %v922, 16
    %v925 = vand.u32 %v921, 65535
    %v926 = vshrl.u32 %v921, 16
    %v927 = vmul.u32 %v923, %v925
    %v928 = vmul.u32 %v923, %v926
    %v929 = vmul.u32 %v924, %v925
    %v930 = vmul.u32 %v924, %v926
    %v931 = vshll.u32 %v928, 16
    %v932 = vshrl.u32 %v928, 16
    %v933 = vshll.u32 %v929, 16
    %v934 = vshrl.u32 %v929, 16
    %vm935 = vc.u32 %v927, %v931
    %v936 = vsel %vm935, 1, 0
    %v937 = vadd.s32 %v927, %v931
    %v938 = vadd.s32 %v930, %v936
    %vm939 = vc.u32 %v937, %v933
    %v940 = vsel %vm939, 1, 0
    %v941 = vadd.s32 %v937, %v933
    %v942 = vadd.s32 %v938, %v940
    %v943 = vadd.s32 %v942, %v932
    %v944 = vadd.s32 %v943, %v934
    %v945 = vand.u32 %v922, 65535
    %v946 = vshrl.u32 %v922, 16
    %v947 = vand.u32 %v917, 65535
    %v948 = vshrl.u32 %v917, 16
    %v949 = vmul.u32 %v945, %v947
    %v950 = vmul.u32 %v945, %v948
    %v951 = vmul.u32 %v946, %v947
    %v952 = vmul.u32 %v946, %v948
    %v953 = vshll.u32 %v950, 16
    %v954 = vshrl.u32 %v950, 16
    %v955 = vshll.u32 %v951, 16
    %v956 = vshrl.u32 %v951, 16
    %vm957 = vc.u32 %v949, %v953
    %v958 = vsel %vm957, 1, 0
    %v959 = vadd.s32 %v949, %v953
    %v960 = vadd.s32 %v952, %v958
    %vm961 = vc.u32 %v959, %v955
    %v962 = vsel %vm961, 1, 0
    %v963 = vadd.s32 %v959, %v955
    %v964 = vadd.s32 %v960, %v962
    %v965 = vadd.s32 %v964, %v954
    %v966 = vadd.s32 %v965, %v956
    %v967 = vmul.u32 %v922, %v913
    %v968 = vadd.s32 %v944, %v963
    %vm969 = vc.u32 %v944, %v963
    %v970 = vadd.s32 %v966, 1
    %v971 = vsel %vm969, %v970, %v966
    %v972 = vadd.s32 %v967, %v971
    %v973 = vadd.s32 %v972, 536870912
    %v974 = vshrl.u32 %v973, 30
    %v975 = vshll.u32 %v974, 30
    %v976 = vsub.s32 %v972, %v975
    %vm977 = vcmp.lt.s32.totalorder %v976, 0
    %v978 = vsub.s32 0, %v976
    %v979 = vsel %vm977, %v978, %v976
    %v980 = vclz %v979
    %v981 = vsub.s32 %v980, 2
    %vm982 = vcmp.gt.s32.totalorder 0, %v981
    %v983 = vsel %vm982, 0, %v981
    %v984 = vsub.s32 32, %v983
    %v985 = vshll.u32 %v976, %v983
    %v986 = vshrl.u32 %v968, %v984
    %v987 = vor.u32 %v985, %v986
    %v988 = vsub.s32 4294967266, %v983
    %v989 = vadd.s32 %v988, 127
    %v990 = vshll.u32 %v989, 23
    %v991 = vor.u32 4788187, %v990
    %v992 = vand.u32 2147483647, %v991
    %v994 = vcvt.s32.f32 %v987
    %v995 = vmul.f32 %v994, %v992
    %v996 = vxor.u32 %v995, 2147483648
    %v997 = vsel %vm876, %v996, %v995
    %v998 = vsub.s32 4, %v974
    %v999 = vsel %vm876, %v998, %v974
    %v1000 = vsel %vm875, %v564, %v997
    %v1001 = vsel %vm875, 0, %v999
    %v1002 = vmul.f32 %v1000, %v1000
    %v1003 = vmul.f32 %v1002, -0.001358992
    %v1004 = vadd.f32 %v1003, 0.041655596
    %v1005 = vmul.f32 %v1002, %v1004
    %v1006 = vadd.f32 %v1005, -0.4999988
    %v1007 = vmul.f32 %v1002, %v1006
    %v1008 = vadd.f32 1.0, %v1007
    %v1009 = vmul.f32 %v1000, %v1000
    %v1010 = vmul.f32 %v1009, -0.00019511016
    %v1011 = vadd.f32 %v1010, 0.008332121
    %v1012 = vmul.f32 %v1009, %v1011
    %v1013 = vadd.f32 %v1012, -0.16666654
    %v1014 = vmul.f32 %v1009, %v1013
    %v1015 = vadd.f32 %v1014, 1.0
    %v1016 = vmul.f32 %v1015, %v1000
    %vm1017 = vweird.f32 %v564
    %v1018 = vadd.s32 %v1001, 3
    %v1019 = vand.u32 %v1018, 3
    %vm1020 = vcmp.lt.s32.totalorder %v1019, 2
    %vm1021 = vcmp.eq.s32.totalorder %v1019, 0
    %v1022 = vxor.u32 %v1016, 2147483648
    %v1023 = vsel %vm1021, %v1008, %v1022
    %vm1024 = vcmp.eq.s32.totalorder %v1019, 2
    %v1025 = vxor.u32 %v1008, 2147483648
    %v1026 = vsel %vm1024, %v1025, %v1016
    %v1027 = vsel %vm1020, %v1023, %v1026
    %v1028 = vsel %vm1017, nan, %v1027
    %v1029 = vand.u32 2147483647, %v565
    %vm1030 = vcmp.le.f32.partialorder %v1029, 0.7853982
    %vm1031 = vcmp.lt.s32.totalorder %v565, 0
    %v1032 = vand.u32 %v565, 2139095040
    %v1033 = vshrl.u32 %v1032, 23
    %v1034 = vsub.s32 %v1033, 127
    %v1035 = vand.u32 2147483647, %v565
    %v1036 = vand.u32 %v1035, 8388607
    %v1037 = vor.u32 %v1036, 8388608
    %v1038 = vsub.s32 0, %v1037
    %v1039 = vadd.s32 %v1034, 1
    %vm1040 = vcmp.gt.s32.totalorder %v1039, 0
    %v1041 = vsel %vm1040, %v1039, 0
    %v1042 = vshrl.u32 %v1041, 5
    %v1043 = vand.u32 %v1041, 31
    %v1044 = vsub.s32 32, %v1043
    %v1045 = vshrl.u32 683565275, %v1044
    %v1046 = vshll.u32 683565275, %v1043
    %v1047 = vshrl.u32 2475754826, %v1044
    %v1048 = vor.u32 %v1046, %v1047
    %v1049 = vshll.u32 2475754826, %v1043
    %v1050 = vshrl.u32 2131351028, %v1044
    %v1051 = vor.u32 %v1049, %v1050
    %v1052 = vshll.u32 2131351028, %v1043
    %v1053 = vshrl.u32 2102212464, %v1044
    %v1054 = vor.u32 %v1052, %v1053
    %v1055 = vshll.u32 2102212464, %v1043
    %v1056 = vshrl.u32 920167782, %v1044
    %v1057 = vor.u32 %v1055, %v1056
    %v1058 = vshll.u32 920167782, %v1043
    %v1059 = vshrl.u32 1326507024, %v1044
    %v1060 = vor.u32 %v1058, %v1059
    %vm1061 = vcmp.lt.s32.totalorder %v1042, 1
    %vm1062 = vcmp.lt.s32.totalorder %v1042, 2
    %vm1063 = vcmp.lt.s32.totalorder %v1042, 3
    %vm1064 = vcmp.lt.s32.totalorder %v1042, 4
    %v1065 = vsel %vm1061, %v1045, %v1048
    %v1066 = vsel %vm1064, %v1054, 2102212464
    %v1067 = vsel %vm1063, %v1051, %v1066
    %v1068 = vsel %vm1062, %v1065, %v1067
    %v1069 = vsel %vm1061, %v1048, %v1051
    %v1070 = vsel %vm1064, %v1057, 920167782
    %v1071 = vsel %vm1063, %v1054, %v1070
    %v1072 = vsel %vm1062, %v1069, %v1071
    %v1073 = vsel %vm1061, %v1051, %v1054
    %v1074 = vsel %vm1064, %v1060, 1326507024
    %v1075 = vsel %vm1063, %v1057, %v1074
    %v1076 = vsel %vm1062, %v1073, %v1075
    %v1077 = vshll.u32 %v1037, 8
    %v1078 = vand.u32 %v1077, 65535
    %v1079 = vshrl.u32 %v1077, 16
    %v1080 = vand.u32 %v1076, 65535
    %v1081 = vshrl.u32 %v1076, 16
    %v1082 = vmul.u32 %v1078, %v1080
    %v1083 = vmul.u32 %v1078, %v1081
    %v1084 = vmul.u32 %v1079, %v1080
    %v1085 = vmul.u32 %v1079, %v1081
    %v1086 = vshll.u32 %v1083, 16
    %v1087 = vshrl.u32 %v1083, 16
    %v1088 = vshll.u32 %v1084, 16
    %v1089 = vshrl.u32 %v1084, 16
    %vm1090 = vc.u32 %v1082, %v1086
    %v1091 = vsel %vm1090, 1, 0
    %v1092 = vadd.s32 %v1082, %v1086
    %v1093 = vadd.s32 %v1085, %v1091
    %vm1094 = vc.u32 %v1092, %v1088
    %v1095 = vsel %vm1094, 1, 0
    %v1096 = vadd.s32 %v1092, %v1088
    %v1097 = vadd.s32 %v1093, %v1095
    %v1098 = vadd.s32 %v1097, %v1087
    %v1099 = vadd.s32 %v1098, %v1089
    %v1100 = vand.u32 %v1077, 65535
    %v1101 = vshrl.u32 %v1077, 16
    %v1102 = vand.u32 %v1072, 65535
    %v1103 = vshrl.u32 %v1072, 16
    %v1104 = vmul.u32 %v1100, %v1102
    %v1105 = vmul.u32 %v1100, %v1103
    %v1106 = vmul.u32 %v1101, %v1102
    %v1107 = vmul.u32 %v1101, %v1103
    %v1108 = vshll.u32 %v1105, 16
    %v1109 = vshrl.u32 %v1105, 16
    %v1110 = vshll.u32 %v1106, 16
    %v1111 = vshrl.u32 %v1106, 16
    %vm1112 = vc.u32 %v1104, %v1108
    %v1113 = vsel %vm1112, 1, 0
    %v1114 = vadd.s32 %v1104, %v1108
    %v1115 = vadd.s32 %v1107, %v1113
    %vm1116 = vc.u32 %v1114, %v1110
    %v1117 = vsel %vm1116, 1, 0
    %v1118 = vadd.s32 %v1114, %v1110
    %v1119 = vadd.s32 %v1115, %v1117
    %v1120 = vadd.s32 %v1119, %v1109
    %v1121 = vadd.s32 %v1120, %v1111
    %v1122 = vmul.u32 %v1077, %v1068
    %v1123 = vadd.s32 %v1099, %v1118
    %vm1124 = vc.u32 %v1099, %v1118
    %v1125 = vadd.s32 %v1121, 1
    %v1126 = vsel %vm1124, %v1125, %v1121
    %v1127 = vadd.s32 %v1122, %v1126
    %v1128 = vadd.s32 %v1127, 536870912
    %v1129 = vshrl.u32 %v1128, 30
    %v1130 = vshll.u32 %v1129, 30
    %v1131 = vsub.s32 %v1127, %v1130
    %vm1132 = vcmp.lt.s32.totalorder %v1131, 0
    %v1133 = vsub.s32 0, %v1131
    %v1134 = vsel %vm1132, %v1133, %v1131
    %v1135 = vclz %v1134
    %v1136 = vsub.s32 %v1135, 2
    %vm1137 = vcmp.gt.s32.totalorder 0, %v1136
    %v1138 = vsel %vm1137, 0, %v1136
    %v1139 = vsub.s32 32, %v1138
    %v1140 = vshll.u32 %v1131, %v1138
    %v1141 = vshrl.u32 %v1123, %v1139
    %v1142 = vor.u32 %v1140, %v1141
    %v1143 = vsub.s32 4294967266, %v1138
    %v1144 = vadd.s32 %v1143, 127
    %v1145 = vshll.u32 %v1144, 23
    %v1146 = vor.u32 4788187, %v1145
    %v1147 = vand.u32 2147483647, %v1146
    %v1149 = vcvt.s32.f32 %v1142
    %v1150 = vmul.f32 %v1149, %v1147
    %v1151 = vxor.u32 %v1150, 2147483648
    %v1152 = vsel %vm1031, %v1151, %v1150
    %v1153 = vsub.s32 4, %v1129
    %v1154 = vsel %vm1031, %v1153, %v1129
    %v1155 = vsel %vm1030, %v565, %v1152
    %v1156 = vsel %vm1030, 0, %v1154
    %v1157 = vmul.f32 %v1155, %v1155
    %v1158 = vmul.f32 %v1157, -0.001358992
    %v1159 = vadd.f32 %v1158, 0.041655596
    %v1160 = vmul.f32 %v1157, %v1159
    %v1161 = vadd.f32 %v1160, -0.4999988
    %v1162 = vmul.f32 %v1157, %v1161
    %v1163 = vadd.f32 1.0, %v1162
    %v1164 = vmul.f32 %v1155, %v1155
    %v1165 = vmul.f32 %v1164, -0.00019511016
    %v1166 = vadd.f32 %v1165, 0.008332121
    %v1167 = vmul.f32 %v1164, %v1166
    %v1168 = vadd.f32 %v1167, -0.16666654
    %v1169 = vmul.f32 %v1164, %v1168
    %v1170 = vadd.f32 %v1169, 1.0
    %v1171 = vmul.f32 %v1170, %v1155
    %vm1172 = vweird.f32 %v565
    %v1173 = vadd.s32 %v1156, 3
    %v1174 = vand.u32 %v1173, 3
    %vm1175 = vcmp.lt.s32.totalorder %v1174, 2
    %vm1176 = vcmp.eq.s32.totalorder %v1174, 0
    %v1177 = vxor.u32 %v1171, 2147483648
    %v1178 = vsel %vm1176, %v1163, %v1177
    %vm1179 = vcmp.eq.s32.totalorder %v1174, 2
    %v1180 = vxor.u32 %v1163, 2147483648
    %v1181 = vsel %vm1179, %v1180, %v1171
    %v1182 = vsel %vm1175, %v1178, %v1181
    %v1183 = vsel %vm1172, nan, %v1182
    %v1184 = vmul.f32 %v561, %v561
    %v1185 = vmul.f32 %v563, %v563
    %v1186 = vadd.f32 %v1184, 1.0
    %v1187 = vadd.f32 %v1185, 1.0
    %v1188 = vmul.f32 %v561, 2.0
    %v1189 = vmul.f32 %v563, 2.0
    %v1190 = vmul.f32 %v1188, %v719
    %v1191 = vmul.f32 %v1189, %v873
    %v1192 = vadd.f32 %v1186, %v1190
    %v1193 = vadd.f32 %v1187, %v1191
    %v1194 = vrcp.pop %v1192
    %v1195 = vrcp.pop %v1193
    %vm1196 = vcmp.ge.f32.partialorder %v462, 0.0
    %vm1197 = vcmp.ge.f32.partialorder %v463, 0.0
    %v1198 = vsel %vm1196, 1.0, -1.0
    %v1199 = vsel %vm1197, 1.0, -1.0
    %v1200 = vsub.f32 1.0, %v1184
    %v1201 = vsub.f32 1.0, %v1185
    %v1202 = vmul.f32 %v1198, %v1200
    %v1203 = vmul.f32 %v1199, %v1201
    %v1204 = vmul.f32 %v1202, %v1194
    %v1205 = vmul.f32 %v1203, %v1195
    %v1206 = vmul.f32 %v1188, %v1028
    %v1207 = vmul.f32 %v1189, %v1183
    %v1208 = vmul.f32 %v1206, %v1194
    %v1209 = vmul.f32 %v1207, %v1195
    %v1211 = vsel %vm352, %v1204, 0
    %v1213 = vsel %vm352, %v208, 0
    %1215 = vmatpush.xpose.msra.mxu0 0.0
    %1216 = vmatpush.xpose.msra.mxu0 0.0
    %1217 = vmatpush.xpose.msra.mxu0 0.0
    %1218 = vmatpush.xpose.msra.mxu0 0.0
    %1219 = vmatpush.xpose.msra.mxu0 0.0
    %1220 = vmatpush.xpose.msra.mxu0 0.0
    %1221 = vmatpush.xpose.msra.mxu0 0.0
    %1222 = vmatpush.xpose.msra.mxu0 0.0
    %1223 = vmatpush.xpose.msra.mxu0 0.0
    %1224 = vmatpush.xpose.msra.mxu0 0.0
    %1225 = vmatpush.xpose.msra.mxu0 0.0
    %1226 = vmatpush.xpose.msra.mxu0 0.0
    %1227 = vmatpush.xpose.msra.mxu0 0.0
    %1228 = vmatpush.xpose.msra.mxu0 0.0
    %1229 = vmatpush.xpose.msra.mxu0 0.0
    %1230 = vmatpush.xpose.msra.mxu0 %v1213
    %1231 = vmatmul.f32.gmra.mxu0 %v1211
    %v1232 = vpop.f32.mrf.mxu0
    %v1233 = vadd.f32 0.0, %v1232
    %1234 = vdwg.mxu0
    %v1236 = vsel %vm352, %v1205, 0
    %v1238 = vsel %vm352, %v212, 0
    %1240 = vmatpush.xpose.msra.mxu0 0.0
    %1241 = vmatpush.xpose.msra.mxu0 0.0
    %1242 = vmatpush.xpose.msra.mxu0 0.0
    %1243 = vmatpush.xpose.msra.mxu0 0.0
    %1244 = vmatpush.xpose.msra.mxu0 0.0
    %1245 = vmatpush.xpose.msra.mxu0 0.0
    %1246 = vmatpush.xpose.msra.mxu0 0.0
    %1247 = vmatpush.xpose.msra.mxu0 0.0
    %1248 = vmatpush.xpose.msra.mxu0 0.0
    %1249 = vmatpush.xpose.msra.mxu0 0.0
    %1250 = vmatpush.xpose.msra.mxu0 0.0
    %1251 = vmatpush.xpose.msra.mxu0 0.0
    %1252 = vmatpush.xpose.msra.mxu0 0.0
    %1253 = vmatpush.xpose.msra.mxu0 0.0
    %1254 = vmatpush.xpose.msra.mxu0 0.0
    %1255 = vmatpush.xpose.msra.mxu0 %v1238
    %1256 = vmatmul.f32.gmra.mxu0 %v1236
    %v1257 = vpop.f32.mrf.mxu0
    %v1258 = vadd.f32 0.0, %v1257
    %1259 = vdwg.mxu0
    %1260 = vst [vmem:[#allocation1] ss:$2 sm:$0xff] %v208
    %v1261 = vld.sshfl [vmem:[#allocation1] sm:$0xff pattern:$0x75316420]
    %1262 = vrot.lane.b32.xlu0 %v1261, 124
    %v1263 = vpop.permute.xlu0 %1262
    %v1265 = vsel %vm352, %v1208, 0
    %v1267 = vsel %vm352, %v1263, 0
    %1269 = vmatpush.xpose.msra.mxu0 0.0
    %1270 = vmatpush.xpose.msra.mxu0 0.0
    %1271 = vmatpush.xpose.msra.mxu0 0.0
    %1272 = vmatpush.xpose.msra.mxu0 0.0
    %1273 = vmatpush.xpose.msra.mxu0 0.0
    %1274 = vmatpush.xpose.msra.mxu0 0.0
    %1275 = vmatpush.xpose.msra.mxu0 0.0
    %1276 = vmatpush.xpose.msra.mxu0 0.0
    %1277 = vmatpush.xpose.msra.mxu0 0.0
    %1278 = vmatpush.xpose.msra.mxu0 0.0
    %1279 = vmatpush.xpose.msra.mxu0 0.0
    %1280 = vmatpush.xpose.msra.mxu0 0.0
    %1281 = vmatpush.xpose.msra.mxu0 0.0
    %1282 = vmatpush.xpose.msra.mxu0 0.0
    %1283 = vmatpush.xpose.msra.mxu0 0.0
    %1284 = vmatpush.xpose.msra.mxu0 %v1267
    %1285 = vmatmul.f32.gmra.mxu0 %v1265
    %v1286 = vpop.f32.mrf.mxu0
    %v1287 = vadd.f32 0.0, %v1286
    %1288 = vdwg.mxu0
    %1289 = vst [vmem:[#allocation1] ss:$2 sm:$0xff] %v212
    %v1290 = vld.sshfl [vmem:[#allocation1] sm:$0xff pattern:$0x75316420]
    %1291 = vrot.lane.b32.xlu0 %v1290, 124
    %v1292 = vpop.permute.xlu0 %1291
    %v1294 = vsel %vm352, %v1209, 0
    %v1296 = vsel %vm352, %v1292, 0
    %1298 = vmatpush.xpose.msra.mxu0 0.0
    %1299 = vmatpush.xpose.msra.mxu0 0.0
    %1300 = vmatpush.xpose.msra.mxu0 0.0
    %1301 = vmatpush.xpose.msra.mxu0 0.0
    %1302 = vmatpush.xpose.msra.mxu0 0.0
    %1303 = vmatpush.xpose.msra.mxu0 0.0
    %1304 = vmatpush.xpose.msra.mxu0 0.0
    %1305 = vmatpush.xpose.msra.mxu0 0.0
    %1306 = vmatpush.xpose.msra.mxu0 0.0
    %1307 = vmatpush.xpose.msra.mxu0 0.0
    %1308 = vmatpush.xpose.msra.mxu0 0.0
    %1309 = vmatpush.xpose.msra.mxu0 0.0
    %1310 = vmatpush.xpose.msra.mxu0 0.0
    %1311 = vmatpush.xpose.msra.mxu0 0.0
    %1312 = vmatpush.xpose.msra.mxu0 0.0
    %1313 = vmatpush.xpose.msra.mxu0 %v1296
    %1314 = vmatmul.f32.gmra.mxu0 %v1294
    %v1315 = vpop.f32.mrf.mxu0
    %v1316 = vadd.f32 0.0, %v1315
    %1317 = vdwg.mxu0
    %v1318 = vsub.f32 %v1233, %v1287
    %v1319 = vsub.f32 %v1258, %v1316
    %1320 = vmatpush.xpose.msra.mxu0 0.0
    %1321 = vmatpush.xpose.msra.mxu0 0.0
    %1322 = vmatpush.xpose.msra.mxu0 0.0
    %1323 = vmatpush.xpose.msra.mxu0 0.0
    %1324 = vmatpush.xpose.msra.mxu0 0.0
    %1325 = vmatpush.xpose.msra.mxu0 0.0
    %1326 = vmatpush.xpose.msra.mxu0 0.0
    %1327 = vmatpush.xpose.msra.mxu0 0.0
    %1328 = vmatpush.xpose.msra.mxu0 0.0
    %1329 = vmatpush.xpose.msra.mxu0 0.0
    %1330 = vmatpush.xpose.msra.mxu0 0.0
    %1331 = vmatpush.xpose.msra.mxu0 0.0
    %1332 = vmatpush.xpose.msra.mxu0 0.0
    %1333 = vmatpush.xpose.msra.mxu0 0.0
    %1334 = vmatpush.xpose.msra.mxu0 0.0
    %1335 = vmatpush.xpose.msra.mxu0 %v1213
    %1336 = vmatmul.f32.gmra.mxu0 %v1265
    %v1337 = vpop.f32.mrf.mxu0
    %v1338 = vadd.f32 0.0, %v1337
    %1339 = vdwg.mxu0
    %1340 = vmatpush.xpose.msra.mxu0 0.0
    %1341 = vmatpush.xpose.msra.mxu0 0.0
    %1342 = vmatpush.xpose.msra.mxu0 0.0
    %1343 = vmatpush.xpose.msra.mxu0 0.0
    %1344 = vmatpush.xpose.msra.mxu0 0.0
    %1345 = vmatpush.xpose.msra.mxu0 0.0
    %1346 = vmatpush.xpose.msra.mxu0 0.0
    %1347 = vmatpush.xpose.msra.mxu0 0.0
    %1348 = vmatpush.xpose.msra.mxu0 0.0
    %1349 = vmatpush.xpose.msra.mxu0 0.0
    %1350 = vmatpush.xpose.msra.mxu0 0.0
    %1351 = vmatpush.xpose.msra.mxu0 0.0
    %1352 = vmatpush.xpose.msra.mxu0 0.0
    %1353 = vmatpush.xpose.msra.mxu0 0.0
    %1354 = vmatpush.xpose.msra.mxu0 0.0
    %1355 = vmatpush.xpose.msra.mxu0 %v1238
    %1356 = vmatmul.f32.gmra.mxu0 %v1294
    %v1357 = vpop.f32.mrf.mxu0
    %v1358 = vadd.f32 0.0, %v1357
    %1359 = vdwg.mxu0
    %1360 = vst [vmem:[#allocation1] ss:$2 sm:$0xff] %v208
    %v1361 = vld.sshfl [vmem:[#allocation1] sm:$0xff pattern:$0x75316420]
    %1362 = vrot.lane.b32.xlu0 %v1361, 124
    %v1363 = vpop.permute.xlu0 %1362
    %v1364 = vsel %vm352, %v1363, 0
    %1366 = vmatpush.xpose.msra.mxu0 0.0
    %1367 = vmatpush.xpose.msra.mxu0 0.0
    %1368 = vmatpush.xpose.msra.mxu0 0.0
    %1369 = vmatpush.xpose.msra.mxu0 0.0
    %1370 = vmatpush.xpose.msra.mxu0 0.0
    %1371 = vmatpush.xpose.msra.mxu0 0.0
    %1372 = vmatpush.xpose.msra.mxu0 0.0
    %1373 = vmatpush.xpose.msra.mxu0 0.0
    %1374 = vmatpush.xpose.msra.mxu0 0.0
    %1375 = vmatpush.xpose.msra.mxu0 0.0
    %1376 = vmatpush.xpose.msra.mxu0 0.0
    %1377 = vmatpush.xpose.msra.mxu0 0.0
    %1378 = vmatpush.xpose.msra.mxu0 0.0
    %1379 = vmatpush.xpose.msra.mxu0 0.0
    %1380 = vmatpush.xpose.msra.mxu0 0.0
    %1381 = vmatpush.xpose.msra.mxu0 %v1364
    %1382 = vmatmul.f32.gmra.mxu0 %v1211
    %v1383 = vpop.f32.mrf.mxu0
    %v1384 = vadd.f32 %v1338, %v1383
    %1385 = vdwg.mxu0
    %1386 = vst [vmem:[#allocation1] ss:$2 sm:$0xff] %v212
    %v1387 = vld.sshfl [vmem:[#allocation1] sm:$0xff pattern:$0x75316420]
    %1388 = vrot.lane.b32.xlu0 %v1387, 124
    %v1389 = vpop.permute.xlu0 %1388
    %v1390 = vsel %vm352, %v1389, 0
    %1392 = vmatpush.xpose.msra.mxu0 0.0
    %1393 = vmatpush.xpose.msra.mxu0 0.0
    %1394 = vmatpush.xpose.msra.mxu0 0.0
    %1395 = vmatpush.xpose.msra.mxu0 0.0
    %1396 = vmatpush.xpose.msra.mxu0 0.0
    %1397 = vmatpush.xpose.msra.mxu0 0.0
    %1398 = vmatpush.xpose.msra.mxu0 0.0
    %1399 = vmatpush.xpose.msra.mxu0 0.0
    %1400 = vmatpush.xpose.msra.mxu0 0.0
    %1401 = vmatpush.xpose.msra.mxu0 0.0
    %1402 = vmatpush.xpose.msra.mxu0 0.0
    %1403 = vmatpush.xpose.msra.mxu0 0.0
    %1404 = vmatpush.xpose.msra.mxu0 0.0
    %1405 = vmatpush.xpose.msra.mxu0 0.0
    %1406 = vmatpush.xpose.msra.mxu0 0.0
    %1407 = vmatpush.xpose.msra.mxu0 %v1390
    %1408 = vmatmul.f32.gmra.mxu0 %v1236
    %v1409 = vpop.f32.mrf.mxu0
    %v1410 = vadd.f32 %v1358, %v1409
    %1411 = vdwg.mxu0
    %v1413 = vrot.slane %v1318, 1
    %v1414 = vrot.slane %v1318, 2
    %v1415 = vrot.slane %v1318, 3
    %vm1419 = vcmask 24576
    %1420 = vst.msk [vmem:[#allocation2] sm:$0x1] %vm1419, %v1318
    %1421 = vst.msk [vmem:[#allocation2 + $0x2] sm:$0x1] %vm1419, %v1413
    %1422 = vst.msk [vmem:[#allocation2 + $0x4] sm:$0x1] %vm1419, %v1414
    %1423 = vst.msk [vmem:[#allocation2 + $0x6] sm:$0x1] %vm1419, %v1415
    %v1425 = vrot.slane %v1384, 1
    %v1426 = vrot.slane %v1384, 2
    %v1427 = vrot.slane %v1384, 3
    %1431 = vst.msk [vmem:[#allocation3] sm:$0x1] %vm1419, %v1384
    %1432 = vst.msk [vmem:[#allocation3 + $0x2] sm:$0x1] %vm1419, %v1425
    %1433 = vst.msk [vmem:[#allocation3 + $0x4] sm:$0x1] %vm1419, %v1426
    %1434 = vst.msk [vmem:[#allocation3 + $0x6] sm:$0x1] %vm1419, %v1427
    %v1436 = vrot.slane %v1319, 1
    %v1437 = vrot.slane %v1319, 2
    %v1438 = vrot.slane %v1319, 3
    %1442 = vst.msk [vmem:[#allocation2 + $0x1] sm:$0x1] %vm1419, %v1319
    %1443 = vst.msk [vmem:[#allocation2 + $0x3] sm:$0x1] %vm1419, %v1436
    %1444 = vst.msk [vmem:[#allocation2 + $0x5] sm:$0x1] %vm1419, %v1437
    %1445 = vst.msk [vmem:[#allocation2 + $0x7] sm:$0x1] %vm1419, %v1438
    %v1447 = vrot.slane %v1410, 1
    %v1448 = vrot.slane %v1410, 2
    %v1449 = vrot.slane %v1410, 3
    %1453 = vst.msk [vmem:[#allocation3 + $0x1] sm:$0x1] %vm1419, %v1410
    %1454 = vst.msk [vmem:[#allocation3 + $0x3] sm:$0x1] %vm1419, %v1447
    %1455 = vst.msk [vmem:[#allocation3 + $0x5] sm:$0x1] %vm1419, %v1448
    %1456 = vst.msk [vmem:[#allocation3 + $0x7] sm:$0x1] %vm1419, %v1449
    %v1457 = vld [vmem:[#allocation2] sm:$0x3]
    %v1458 = vld [vmem:[#allocation2 + $0x2] sm:$0x3]
    %v1459 = vld [vmem:[#allocation2 + $0x4] sm:$0x3]
    %v1460 = vld [vmem:[#allocation2 + $0x6] sm:$0x3]
    %v1461 = vld [vmem:[#allocation3] sm:$0x3]
    %v1462 = vld [vmem:[#allocation3 + $0x2] sm:$0x3]
    %v1463 = vld [vmem:[#allocation3 + $0x4] sm:$0x3]
    %v1464 = vld [vmem:[#allocation3 + $0x6] sm:$0x3]
    %v1465 = vld [vmem:[#allocation10] sm:$0xf]
    %v1466 = vld [vmem:[#allocation10 + $0x4] sm:$0xf]
    %v1467 = vld [vmem:[#allocation10 + $0x8] sm:$0xf]
    %v1468 = vld [vmem:[#allocation10 + $0xc] sm:$0xf]
    %s1469 = scalar_lea.vmem [#allocation10], 16
    %v1470 = vld [vmem:[%s1469] sm:$0xf]
    %v1471 = vld [vmem:[%s1469 + $0x4] sm:$0xf]
    %v1472 = vld [vmem:[%s1469 + $0x8] sm:$0xf]
    %v1473 = vld [vmem:[%s1469 + $0xc] sm:$0xf]
    %v1475 = vsel %vm352, %v1457, 0
    %v1478 = vsel %vm356, %v1465, 0
    %1480 = vmatpush.msra.mxu0 0.0
    %1481 = vmatpush.msra.mxu0 0.0
    %1482 = vmatpush.msra.mxu0 0.0
    %1483 = vmatpush.msra.mxu0 0.0
    %1484 = vmatpush.msra.mxu0 0.0
    %1485 = vmatpush.msra.mxu0 0.0
    %1486 = vmatpush.msra.mxu0 0.0
    %1487 = vmatpush.msra.mxu0 0.0
    %1488 = vmatpush.msra.mxu0 0.0
    %1489 = vmatpush.msra.mxu0 0.0
    %1490 = vmatpush.msra.mxu0 0.0
    %1491 = vmatpush.msra.mxu0 0.0
    %1492 = vmatpush.msra.mxu0 0.0
    %1493 = vmatpush.msra.mxu0 0.0
    %1494 = vmatpush.msra.mxu0 0.0
    %1495 = vmatpush.msra.mxu0 %v1478
    %1496 = vmatmul.f32.gmra.mxu0 %v1475
    %v1497 = vpop.f32.mrf.mxu0
    %v1498 = vadd.f32 0.0, %v1497
    %1499 = vdwg.mxu0
    %v1501 = vsel %vm352, %v1458, 0
    %v1504 = vsel %vm356, %v1466, 0
    %1506 = vmatpush.msra.mxu0 0.0
    %1507 = vmatpush.msra.mxu0 0.0
    %1508 = vmatpush.msra.mxu0 0.0
    %1509 = vmatpush.msra.mxu0 0.0
    %1510 = vmatpush.msra.mxu0 0.0
    %1511 = vmatpush.msra.mxu0 0.0
    %1512 = vmatpush.msra.mxu0 0.0
    %1513 = vmatpush.msra.mxu0 0.0
    %1514 = vmatpush.msra.mxu0 0.0
    %1515 = vmatpush.msra.mxu0 0.0
    %1516 = vmatpush.msra.mxu0 0.0
    %1517 = vmatpush.msra.mxu0 0.0
    %1518 = vmatpush.msra.mxu0 0.0
    %1519 = vmatpush.msra.mxu0 0.0
    %1520 = vmatpush.msra.mxu0 0.0
    %1521 = vmatpush.msra.mxu0 %v1504
    %1522 = vmatmul.f32.gmra.mxu0 %v1501
    %v1523 = vpop.f32.mrf.mxu0
    %v1524 = vadd.f32 0.0, %v1523
    %1525 = vdwg.mxu0
    %v1527 = vsel %vm352, %v1459, 0
    %v1530 = vsel %vm356, %v1467, 0
    %1532 = vmatpush.msra.mxu0 0.0
    %1533 = vmatpush.msra.mxu0 0.0
    %1534 = vmatpush.msra.mxu0 0.0
    %1535 = vmatpush.msra.mxu0 0.0
    %1536 = vmatpush.msra.mxu0 0.0
    %1537 = vmatpush.msra.mxu0 0.0
    %1538 = vmatpush.msra.mxu0 0.0
    %1539 = vmatpush.msra.mxu0 0.0
    %1540 = vmatpush.msra.mxu0 0.0
    %1541 = vmatpush.msra.mxu0 0.0
    %1542 = vmatpush.msra.mxu0 0.0
    %1543 = vmatpush.msra.mxu0 0.0
    %1544 = vmatpush.msra.mxu0 0.0
    %1545 = vmatpush.msra.mxu0 0.0
    %1546 = vmatpush.msra.mxu0 0.0
    %1547 = vmatpush.msra.mxu0 %v1530
    %1548 = vmatmul.f32.gmra.mxu0 %v1527
    %v1549 = vpop.f32.mrf.mxu0
    %v1550 = vadd.f32 0.0, %v1549
    %1551 = vdwg.mxu0
    %v1553 = vsel %vm352, %v1460, 0
    %v1556 = vsel %vm356, %v1468, 0
    %1558 = vmatpush.msra.mxu0 0.0
    %1559 = vmatpush.msra.mxu0 0.0
    %1560 = vmatpush.msra.mxu0 0.0
    %1561 = vmatpush.msra.mxu0 0.0
    %1562 = vmatpush.msra.mxu0 0.0
    %1563 = vmatpush.msra.mxu0 0.0
    %1564 = vmatpush.msra.mxu0 0.0
    %1565 = vmatpush.msra.mxu0 0.0
    %1566 = vmatpush.msra.mxu0 0.0
    %1567 = vmatpush.msra.mxu0 0.0
    %1568 = vmatpush.msra.mxu0 0.0
    %1569 = vmatpush.msra.mxu0 0.0
    %1570 = vmatpush.msra.mxu0 0.0
    %1571 = vmatpush.msra.mxu0 0.0
    %1572 = vmatpush.msra.mxu0 0.0
    %1573 = vmatpush.msra.mxu0 %v1556
    %1574 = vmatmul.f32.gmra.mxu0 %v1553
    %v1575 = vpop.f32.mrf.mxu0
    %v1576 = vadd.f32 0.0, %v1575
    %1577 = vdwg.mxu0
    %v1579 = vsel %vm352, %v1461, 0
    %v1582 = vsel %vm356, %v1470, 0
    %1584 = vmatpush.msra.mxu0 0.0
    %1585 = vmatpush.msra.mxu0 0.0
    %1586 = vmatpush.msra.mxu0 0.0
    %1587 = vmatpush.msra.mxu0 0.0
    %1588 = vmatpush.msra.mxu0 0.0
    %1589 = vmatpush.msra.mxu0 0.0
    %1590 = vmatpush.msra.mxu0 0.0
    %1591 = vmatpush.msra.mxu0 0.0
    %1592 = vmatpush.msra.mxu0 0.0
    %1593 = vmatpush.msra.mxu0 0.0
    %1594 = vmatpush.msra.mxu0 0.0
    %1595 = vmatpush.msra.mxu0 0.0
    %1596 = vmatpush.msra.mxu0 0.0
    %1597 = vmatpush.msra.mxu0 0.0
    %1598 = vmatpush.msra.mxu0 0.0
    %1599 = vmatpush.msra.mxu0 %v1582
    %1600 = vmatmul.f32.gmra.mxu0 %v1579
    %v1601 = vpop.f32.mrf.mxu0
    %v1602 = vadd.f32 0.0, %v1601
    %1603 = vdwg.mxu0
    %v1605 = vsel %vm352, %v1462, 0
    %v1608 = vsel %vm356, %v1471, 0
    %1610 = vmatpush.msra.mxu0 0.0
    %1611 = vmatpush.msra.mxu0 0.0
    %1612 = vmatpush.msra.mxu0 0.0
    %1613 = vmatpush.msra.mxu0 0.0
    %1614 = vmatpush.msra.mxu0 0.0
    %1615 = vmatpush.msra.mxu0 0.0
    %1616 = vmatpush.msra.mxu0 0.0
    %1617 = vmatpush.msra.mxu0 0.0
    %1618 = vmatpush.msra.mxu0 0.0
    %1619 = vmatpush.msra.mxu0 0.0
    %1620 = vmatpush.msra.mxu0 0.0
    %1621 = vmatpush.msra.mxu0 0.0
    %1622 = vmatpush.msra.mxu0 0.0
    %1623 = vmatpush.msra.mxu0 0.0
    %1624 = vmatpush.msra.mxu0 0.0
    %1625 = vmatpush.msra.mxu0 %v1608
    %1626 = vmatmul.f32.gmra.mxu0 %v1605
    %v1627 = vpop.f32.mrf.mxu0
    %v1628 = vadd.f32 0.0, %v1627
    %1629 = vdwg.mxu0
    %v1631 = vsel %vm352, %v1463, 0
    %v1634 = vsel %vm356, %v1472, 0
    %1636 = vmatpush.msra.mxu0 0.0
    %1637 = vmatpush.msra.mxu0 0.0
    %1638 = vmatpush.msra.mxu0 0.0
    %1639 = vmatpush.msra.mxu0 0.0
    %1640 = vmatpush.msra.mxu0 0.0
    %1641 = vmatpush.msra.mxu0 0.0
    %1642 = vmatpush.msra.mxu0 0.0
    %1643 = vmatpush.msra.mxu0 0.0
    %1644 = vmatpush.msra.mxu0 0.0
    %1645 = vmatpush.msra.mxu0 0.0
    %1646 = vmatpush.msra.mxu0 0.0
    %1647 = vmatpush.msra.mxu0 0.0
    %1648 = vmatpush.msra.mxu0 0.0
    %1649 = vmatpush.msra.mxu0 0.0
    %1650 = vmatpush.msra.mxu0 0.0
    %1651 = vmatpush.msra.mxu0 %v1634
    %1652 = vmatmul.f32.gmra.mxu0 %v1631
    %v1653 = vpop.f32.mrf.mxu0
    %v1654 = vadd.f32 0.0, %v1653
    %1655 = vdwg.mxu0
    %v1657 = vsel %vm352, %v1464, 0
    %v1660 = vsel %vm356, %v1473, 0
    %1662 = vmatpush.msra.mxu0 0.0
    %1663 = vmatpush.msra.mxu0 0.0
    %1664 = vmatpush.msra.mxu0 0.0
    %1665 = vmatpush.msra.mxu0 0.0
    %1666 = vmatpush.msra.mxu0 0.0
    %1667 = vmatpush.msra.mxu0 0.0
    %1668 = vmatpush.msra.mxu0 0.0
    %1669 = vmatpush.msra.mxu0 0.0
    %1670 = vmatpush.msra.mxu0 0.0
    %1671 = vmatpush.msra.mxu0 0.0
    %1672 = vmatpush.msra.mxu0 0.0
    %1673 = vmatpush.msra.mxu0 0.0
    %1674 = vmatpush.msra.mxu0 0.0
    %1675 = vmatpush.msra.mxu0 0.0
    %1676 = vmatpush.msra.mxu0 0.0
    %1677 = vmatpush.msra.mxu0 %v1660
    %1678 = vmatmul.f32.gmra.mxu0 %v1657
    %v1679 = vpop.f32.mrf.mxu0
    %v1680 = vadd.f32 0.0, %v1679
    %1681 = vdwg.mxu0
    %v1682 = vsub.f32 %v1498, %v1602
    %v1683 = vsub.f32 %v1524, %v1628
    %v1684 = vsub.f32 %v1550, %v1654
    %v1685 = vsub.f32 %v1576, %v1680
    %1686 = vmatpush.msra.mxu0 0.0
    %1687 = vmatpush.msra.mxu0 0.0
    %1688 = vmatpush.msra.mxu0 0.0
    %1689 = vmatpush.msra.mxu0 0.0
    %1690 = vmatpush.msra.mxu0 0.0
    %1691 = vmatpush.msra.mxu0 0.0
    %1692 = vmatpush.msra.mxu0 0.0
    %1693 = vmatpush.msra.mxu0 0.0
    %1694 = vmatpush.msra.mxu0 0.0
    %1695 = vmatpush.msra.mxu0 0.0
    %1696 = vmatpush.msra.mxu0 0.0
    %1697 = vmatpush.msra.mxu0 0.0
    %1698 = vmatpush.msra.mxu0 0.0
    %1699 = vmatpush.msra.mxu0 0.0
    %1700 = vmatpush.msra.mxu0 0.0
    %1701 = vmatpush.msra.mxu0 %v1478
    %1702 = vmatmul.f32.gmra.mxu0 %v1579
    %v1703 = vpop.f32.mrf.mxu0
    %v1704 = vadd.f32 0.0, %v1703
    %1705 = vdwg.mxu0
    %1706 = vmatpush.msra.mxu0 0.0
    %1707 = vmatpush.msra.mxu0 0.0
    %1708 = vmatpush.msra.mxu0 0.0
    %1709 = vmatpush.msra.mxu0 0.0
    %1710 = vmatpush.msra.mxu0 0.0
    %1711 = vmatpush.msra.mxu0 0.0
    %1712 = vmatpush.msra.mxu0 0.0
    %1713 = vmatpush.msra.mxu0 0.0
    %1714 = vmatpush.msra.mxu0 0.0
    %1715 = vmatpush.msra.mxu0 0.0
    %1716 = vmatpush.msra.mxu0 0.0
    %1717 = vmatpush.msra.mxu0 0.0
    %1718 = vmatpush.msra.mxu0 0.0
    %1719 = vmatpush.msra.mxu0 0.0
    %1720 = vmatpush.msra.mxu0 0.0
    %1721 = vmatpush.msra.mxu0 %v1504
    %1722 = vmatmul.f32.gmra.mxu0 %v1605
    %v1723 = vpop.f32.mrf.mxu0
    %v1724 = vadd.f32 0.0, %v1723
    %1725 = vdwg.mxu0
    %1726 = vmatpush.msra.mxu0 0.0
    %1727 = vmatpush.msra.mxu0 0.0
    %1728 = vmatpush.msra.mxu0 0.0
    %1729 = vmatpush.msra.mxu0 0.0
    %1730 = vmatpush.msra.mxu0 0.0
    %1731 = vmatpush.msra.mxu0 0.0
    %1732 = vmatpush.msra.mxu0 0.0
    %1733 = vmatpush.msra.mxu0 0.0
    %1734 = vmatpush.msra.mxu0 0.0
    %1735 = vmatpush.msra.mxu0 0.0
    %1736 = vmatpush.msra.mxu0 0.0
    %1737 = vmatpush.msra.mxu0 0.0
    %1738 = vmatpush.msra.mxu0 0.0
    %1739 = vmatpush.msra.mxu0 0.0
    %1740 = vmatpush.msra.mxu0 0.0
    %1741 = vmatpush.msra.mxu0 %v1530
    %1742 = vmatmul.f32.gmra.mxu0 %v1631
    %v1743 = vpop.f32.mrf.mxu0
    %v1744 = vadd.f32 0.0, %v1743
    %1745 = vdwg.mxu0
    %1746 = vmatpush.msra.mxu0 0.0
    %1747 = vmatpush.msra.mxu0 0.0
    %1748 = vmatpush.msra.mxu0 0.0
    %1749 = vmatpush.msra.mxu0 0.0
    %1750 = vmatpush.msra.mxu0 0.0
    %1751 = vmatpush.msra.mxu0 0.0
    %1752 = vmatpush.msra.mxu0 0.0
    %1753 = vmatpush.msra.mxu0 0.0
    %1754 = vmatpush.msra.mxu0 0.0
    %1755 = vmatpush.msra.mxu0 0.0
    %1756 = vmatpush.msra.mxu0 0.0
    %1757 = vmatpush.msra.mxu0 0.0
    %1758 = vmatpush.msra.mxu0 0.0
    %1759 = vmatpush.msra.mxu0 0.0
    %1760 = vmatpush.msra.mxu0 0.0
    %1761 = vmatpush.msra.mxu0 %v1556
    %1762 = vmatmul.f32.gmra.mxu0 %v1657
    %v1763 = vpop.f32.mrf.mxu0
    %v1764 = vadd.f32 0.0, %v1763
    %1765 = vdwg.mxu0
    %1766 = vmatpush.msra.mxu0 0.0
    %1767 = vmatpush.msra.mxu0 0.0
    %1768 = vmatpush.msra.mxu0 0.0
    %1769 = vmatpush.msra.mxu0 0.0
    %1770 = vmatpush.msra.mxu0 0.0
    %1771 = vmatpush.msra.mxu0 0.0
    %1772 = vmatpush.msra.mxu0 0.0
    %1773 = vmatpush.msra.mxu0 0.0
    %1774 = vmatpush.msra.mxu0 0.0
    %1775 = vmatpush.msra.mxu0 0.0
    %1776 = vmatpush.msra.mxu0 0.0
    %1777 = vmatpush.msra.mxu0 0.0
    %1778 = vmatpush.msra.mxu0 0.0
    %1779 = vmatpush.msra.mxu0 0.0
    %1780 = vmatpush.msra.mxu0 0.0
    %1781 = vmatpush.msra.mxu0 %v1582
    %1782 = vmatmul.f32.gmra.mxu0 %v1475
    %v1783 = vpop.f32.mrf.mxu0
    %v1784 = vadd.f32 %v1704, %v1783
    %1785 = vdwg.mxu0
    %1786 = vmatpush.msra.mxu0 0.0
    %1787 = vmatpush.msra.mxu0 0.0
    %1788 = vmatpush.msra.mxu0 0.0
    %1789 = vmatpush.msra.mxu0 0.0
    %1790 = vmatpush.msra.mxu0 0.0
    %1791 = vmatpush.msra.mxu0 0.0
    %1792 = vmatpush.msra.mxu0 0.0
    %1793 = vmatpush.msra.mxu0 0.0
    %1794 = vmatpush.msra.mxu0 0.0
    %1795 = vmatpush.msra.mxu0 0.0
    %1796 = vmatpush.msra.mxu0 0.0
    %1797 = vmatpush.msra.mxu0 0.0
    %1798 = vmatpush.msra.mxu0 0.0
    %1799 = vmatpush.msra.mxu0 0.0
    %1800 = vmatpush.msra.mxu0 0.0
    %1801 = vmatpush.msra.mxu0 %v1608
    %1802 = vmatmul.f32.gmra.mxu0 %v1501
    %v1803 = vpop.f32.mrf.mxu0
    %v1804 = vadd.f32 %v1724, %v1803
    %1805 = vdwg.mxu0
    %1806 = vmatpush.msra.mxu0 0.0
    %1807 = vmatpush.msra.mxu0 0.0
    %1808 = vmatpush.msra.mxu0 0.0
    %1809 = vmatpush.msra.mxu0 0.0
    %1810 = vmatpush.msra.mxu0 0.0
    %1811 = vmatpush.msra.mxu0 0.0
    %1812 = vmatpush.msra.mxu0 0.0
    %1813 = vmatpush.msra.mxu0 0.0
    %1814 = vmatpush.msra.mxu0 0.0
    %1815 = vmatpush.msra.mxu0 0.0
    %1816 = vmatpush.msra.mxu0 0.0
    %1817 = vmatpush.msra.mxu0 0.0
    %1818 = vmatpush.msra.mxu0 0.0
    %1819 = vmatpush.msra.mxu0 0.0
    %1820 = vmatpush.msra.mxu0 0.0
    %1821 = vmatpush.msra.mxu0 %v1634
    %1822 = vmatmul.f32.gmra.mxu0 %v1527
    %v1823 = vpop.f32.mrf.mxu0
    %v1824 = vadd.f32 %v1744, %v1823
    %1825 = vdwg.mxu0
    %1826 = vmatpush.msra.mxu0 0.0
    %1827 = vmatpush.msra.mxu0 0.0
    %1828 = vmatpush.msra.mxu0 0.0
    %1829 = vmatpush.msra.mxu0 0.0
    %1830 = vmatpush.msra.mxu0 0.0
    %1831 = vmatpush.msra.mxu0 0.0
    %1832 = vmatpush.msra.mxu0 0.0
    %1833 = vmatpush.msra.mxu0 0.0
    %1834 = vmatpush.msra.mxu0 0.0
    %1835 = vmatpush.msra.mxu0 0.0
    %1836 = vmatpush.msra.mxu0 0.0
    %1837 = vmatpush.msra.mxu0 0.0
    %1838 = vmatpush.msra.mxu0 0.0
    %1839 = vmatpush.msra.mxu0 0.0
    %1840 = vmatpush.msra.mxu0 0.0
    %1841 = vmatpush.msra.mxu0 %v1660
    %1842 = vmatmul.f32.gmra.mxu0 %v1553
    %v1843 = vpop.f32.mrf.mxu0
    %v1844 = vadd.f32 %v1764, %v1843
    %1845 = vdwg.mxu0
    %vm1846 = vcmask 25600
    %1847 = vst.msk [vmem:[#allocation4] sm:$0x3] %vm1846, %v1682
    %1848 = vst.msk [vmem:[#allocation4 + $0x2] sm:$0x3] %vm1846, %v1683
    %1849 = vst.msk [vmem:[#allocation4 + $0x4] sm:$0x3] %vm1846, %v1684
    %1850 = vst.msk [vmem:[#allocation4 + $0x6] sm:$0x3] %vm1846, %v1685
    %1851 = vst.msk [vmem:[#allocation5] sm:$0x3] %vm1846, %v1784
    %1852 = vst.msk [vmem:[#allocation5 + $0x2] sm:$0x3] %vm1846, %v1804
    %1853 = vst.msk [vmem:[#allocation5 + $0x4] sm:$0x3] %vm1846, %v1824
    %1854 = vst.msk [vmem:[#allocation5 + $0x6] sm:$0x3] %vm1846, %v1844
    %v1855 = vld [vmem:[#allocation4] sm:$0x1]
    %v1856 = vld [vmem:[#allocation4 + $0x2] sm:$0x1]
    %v1857 = vld [vmem:[#allocation4 + $0x4] sm:$0x1]
    %v1858 = vld [vmem:[#allocation4 + $0x6] sm:$0x1]
    %v1863 = vrot.slane %v1856, 7
    %v1864 = vsel %vm111, %v1863, %v1855
    %v1865 = vrot.slane %v1857, 6
    %v1866 = vsel %vm114, %v1865, %v1864
    %v1867 = vrot.slane %v1858, 5
    %v1868 = vsel %vm117, %v1867, %v1866
    %1870 = vxpose.xlu0.b32.start [1/16] %v1868, 128
    %1871 = vxpose.xlu0.b32.cont [2/16] 0.0, 128
    %1872 = vxpose.xlu0.b32.cont [3/16] 0.0, 128
    %1873 = vxpose.xlu0.b32.cont [4/16] 0.0, 128
    %1874 = vxpose.xlu0.b32.cont [5/16] 0.0, 128
    %1875 = vxpose.xlu0.b32.cont [6/16] 0.0, 128
    %1876 = vxpose.xlu0.b32.cont [7/16] 0.0, 128
    %1877 = vxpose.xlu0.b32.cont [8/16] 0.0, 128
    %1878 = vxpose.xlu0.b32.cont [9/16] 0.0, 128
    %1879 = vxpose.xlu0.b32.cont [10/16] 0.0, 128
    %1880 = vxpose.xlu0.b32.cont [11/16] 0.0, 128
    %1881 = vxpose.xlu0.b32.cont [12/16] 0.0, 128
    %1882 = vxpose.xlu0.b32.cont [13/16] 0.0, 128
    %1883 = vxpose.xlu0.b32.cont [14/16] 0.0, 128
    %1884 = vxpose.xlu0.b32.cont [15/16] 0.0, 128
    %1885 = vxpose.xlu0.b32.end [16/16] 0.0, 128
    %v1886 = vpop.trf.xlu0
    %v1887 = vpop.trf.xlu0
    %v1888 = vpop.trf.xlu0
    %v1889 = vpop.trf.xlu0
    %v1890 = vpop.trf.xlu0
    %v1891 = vpop.trf.xlu0
    %v1892 = vpop.trf.xlu0
    %v1893 = vpop.trf.xlu0
    %v1894 = vpop.trf.xlu0
    %v1895 = vpop.trf.xlu0
    %v1896 = vpop.trf.xlu0
    %v1897 = vpop.trf.xlu0
    %v1898 = vpop.trf.xlu0
    %v1899 = vpop.trf.xlu0
    %v1900 = vpop.trf.xlu0
    %v1901 = vpop.trf.xlu0
    %vm1902 = vcmask 27648
    %1903 = vst.msk [vmem:[#allocation6] sm:$0xf] %vm1902, %v1886
    %v1904 = vld [vmem:[#allocation5] sm:$0x1]
    %v1905 = vld [vmem:[#allocation5 + $0x2] sm:$0x1]
    %v1906 = vld [vmem:[#allocation5 + $0x4] sm:$0x1]
    %v1907 = vld [vmem:[#allocation5 + $0x6] sm:$0x1]
    %v1912 = vrot.slane %v1905, 7
    %v1913 = vsel %vm111, %v1912, %v1904
    %v1914 = vrot.slane %v1906, 6
    %v1915 = vsel %vm114, %v1914, %v1913
    %v1916 = vrot.slane %v1907, 5
    %v1917 = vsel %vm117, %v1916, %v1915
    %1919 = vxpose.xlu0.b32.start [1/16] %v1917, 128
    %1920 = vxpose.xlu0.b32.cont [2/16] 0.0, 128
    %1921 = vxpose.xlu0.b32.cont [3/16] 0.0, 128
    %1922 = vxpose.xlu0.b32.cont [4/16] 0.0, 128
    %1923 = vxpose.xlu0.b32.cont [5/16] 0.0, 128
    %1924 = vxpose.xlu0.b32.cont [6/16] 0.0, 128
    %1925 = vxpose.xlu0.b32.cont [7/16] 0.0, 128
    %1926 = vxpose.xlu0.b32.cont [8/16] 0.0, 128
    %1927 = vxpose.xlu0.b32.cont [9/16] 0.0, 128
    %1928 = vxpose.xlu0.b32.cont [10/16] 0.0, 128
    %1929 = vxpose.xlu0.b32.cont [11/16] 0.0, 128
    %1930 = vxpose.xlu0.b32.cont [12/16] 0.0, 128
    %1931 = vxpose.xlu0.b32.cont [13/16] 0.0, 128
    %1932 = vxpose.xlu0.b32.cont [14/16] 0.0, 128
    %1933 = vxpose.xlu0.b32.cont [15/16] 0.0, 128
    %1934 = vxpose.xlu0.b32.end [16/16] 0.0, 128
    %v1935 = vpop.trf.xlu0
    %v1936 = vpop.trf.xlu0
    %v1937 = vpop.trf.xlu0
    %v1938 = vpop.trf.xlu0
    %v1939 = vpop.trf.xlu0
    %v1940 = vpop.trf.xlu0
    %v1941 = vpop.trf.xlu0
    %v1942 = vpop.trf.xlu0
    %v1943 = vpop.trf.xlu0
    %v1944 = vpop.trf.xlu0
    %v1945 = vpop.trf.xlu0
    %v1946 = vpop.trf.xlu0
    %v1947 = vpop.trf.xlu0
    %v1948 = vpop.trf.xlu0
    %v1949 = vpop.trf.xlu0
    %v1950 = vpop.trf.xlu0
    %1952 = vrot.lane.b32.xlu0 %v1935, 4
    %v1953 = vpop.permute.xlu0 %1952
    %vm1955 = vcmask 60448
    %1956 = vst.msk [vmem:[#allocation6] sm:$0xf] %vm1955, %v1953
    %v1957 = vld [vmem:[#allocation4 + $0x1] sm:$0x1]
    %v1958 = vld [vmem:[#allocation4 + $0x3] sm:$0x1]
    %v1959 = vld [vmem:[#allocation4 + $0x5] sm:$0x1]
    %v1960 = vld [vmem:[#allocation4 + $0x7] sm:$0x1]
    %v1965 = vrot.slane %v1958, 7
    %v1966 = vsel %vm111, %v1965, %v1957
    %v1967 = vrot.slane %v1959, 6
    %v1968 = vsel %vm114, %v1967, %v1966
    %v1969 = vrot.slane %v1960, 5
    %v1970 = vsel %vm117, %v1969, %v1968
    %1972 = vxpose.xlu0.b32.start [1/16] %v1970, 128
    %1973 = vxpose.xlu0.b32.cont [2/16] 0.0, 128
    %1974 = vxpose.xlu0.b32.cont [3/16] 0.0, 128
    %1975 = vxpose.xlu0.b32.cont [4/16] 0.0, 128
    %1976 = vxpose.xlu0.b32.cont [5/16] 0.0, 128
    %1977 = vxpose.xlu0.b32.cont [6/16] 0.0, 128
    %1978 = vxpose.xlu0.b32.cont [7/16] 0.0, 128
    %1979 = vxpose.xlu0.b32.cont [8/16] 0.0, 128
    %1980 = vxpose.xlu0.b32.cont [9/16] 0.0, 128
    %1981 = vxpose.xlu0.b32.cont [10/16] 0.0, 128
    %1982 = vxpose.xlu0.b32.cont [11/16] 0.0, 128
    %1983 = vxpose.xlu0.b32.cont [12/16] 0.0, 128
    %1984 = vxpose.xlu0.b32.cont [13/16] 0.0, 128
    %1985 = vxpose.xlu0.b32.cont [14/16] 0.0, 128
    %1986 = vxpose.xlu0.b32.cont [15/16] 0.0, 128
    %1987 = vxpose.xlu0.b32.end [16/16] 0.0, 128
    %v1988 = vpop.trf.xlu0
    %v1989 = vpop.trf.xlu0
    %v1990 = vpop.trf.xlu0
    %v1991 = vpop.trf.xlu0
    %v1992 = vpop.trf.xlu0
    %v1993 = vpop.trf.xlu0
    %v1994 = vpop.trf.xlu0
    %v1995 = vpop.trf.xlu0
    %v1996 = vpop.trf.xlu0
    %v1997 = vpop.trf.xlu0
    %v1998 = vpop.trf.xlu0
    %v1999 = vpop.trf.xlu0
    %v2000 = vpop.trf.xlu0
    %v2001 = vpop.trf.xlu0
    %v2002 = vpop.trf.xlu0
    %v2003 = vpop.trf.xlu0
    %s2004 = scalar_lea.vmem [#allocation6], 4
    %2005 = vst.msk [vmem:[%s2004] sm:$0xf] %vm1902, %v1988
    %v2006 = vld [vmem:[#allocation5 + $0x1] sm:$0x1]
    %v2007 = vld [vmem:[#allocation5 + $0x3] sm:$0x1]
    %v2008 = vld [vmem:[#allocation5 + $0x5] sm:$0x1]
    %v2009 = vld [vmem:[#allocation5 + $0x7] sm:$0x1]
    %v2014 = vrot.slane %v2007, 7
    %v2015 = vsel %vm111, %v2014, %v2006
    %v2016 = vrot.slane %v2008, 6
    %v2017 = vsel %vm114, %v2016, %v2015
    %v2018 = vrot.slane %v2009, 5
    %v2019 = vsel %vm117, %v2018, %v2017
    %2021 = vxpose.xlu0.b32.start [1/16] %v2019, 128
    %2022 = vxpose.xlu0.b32.cont [2/16] 0.0, 128
    %2023 = vxpose.xlu0.b32.cont [3/16] 0.0, 128
    %2024 = vxpose.xlu0.b32.cont [4/16] 0.0, 128
    %2025 = vxpose.xlu0.b32.cont [5/16] 0.0, 128
    %2026 = vxpose.xlu0.b32.cont [6/16] 0.0, 128
    %2027 = vxpose.xlu0.b32.cont [7/16] 0.0, 128
    %2028 = vxpose.xlu0.b32.cont [8/16] 0.0, 128
    %2029 = vxpose.xlu0.b32.cont [9/16] 0.0, 128
    %2030 = vxpose.xlu0.b32.cont [10/16] 0.0, 128
    %2031 = vxpose.xlu0.b32.cont [11/16] 0.0, 128
    %2032 = vxpose.xlu0.b32.cont [12/16] 0.0, 128
    %2033 = vxpose.xlu0.b32.cont [13/16] 0.0, 128
    %2034 = vxpose.xlu0.b32.cont [14/16] 0.0, 128
    %2035 = vxpose.xlu0.b32.cont [15/16] 0.0, 128
    %2036 = vxpose.xlu0.b32.end [16/16] 0.0, 128
    %v2037 = vpop.trf.xlu0
    %v2038 = vpop.trf.xlu0
    %v2039 = vpop.trf.xlu0
    %v2040 = vpop.trf.xlu0
    %v2041 = vpop.trf.xlu0
    %v2042 = vpop.trf.xlu0
    %v2043 = vpop.trf.xlu0
    %v2044 = vpop.trf.xlu0
    %v2045 = vpop.trf.xlu0
    %v2046 = vpop.trf.xlu0
    %v2047 = vpop.trf.xlu0
    %v2048 = vpop.trf.xlu0
    %v2049 = vpop.trf.xlu0
    %v2050 = vpop.trf.xlu0
    %v2051 = vpop.trf.xlu0
    %v2052 = vpop.trf.xlu0
    %2054 = vrot.lane.b32.xlu0 %v2037, 4
    %v2055 = vpop.permute.xlu0 %2054
    %2057 = vst.msk [vmem:[%s2004] sm:$0xf] %vm1955, %v2055
    %v2058 = vld [vmem:[#allocation6] sm:$0xf]
    %v2059 = vld [vmem:[#allocation6 + $0x4] sm:$0xf]
    %2062 = vst [vmem:[#allocation1] ss:$2 sm:$0xff] %v2058
    %s2063 = scalar_lea.vmem [#allocation1], 1
    %2064 = vst [vmem:[%s2063] ss:$2 sm:$0xff] %v2059
    %v2065 = vld.sshfl [vmem:[#allocation1] sm:$0xff pattern:$0x75316420]
    %v2067 = vpack.c.bf16 %v2065, %v2065
    %vm2068 = vcmask 64512
    %v2070 = vsel %vm2068, %v2067, 0
    %v2073 = vsel %vm356, %v61, 0
    %2075 = vmatpush.bf16.msra.mxu0 0
    %2076 = vmatpush.bf16.msra.mxu0 0
    %2077 = vmatpush.bf16.msra.mxu0 0
    %2078 = vmatpush.bf16.msra.mxu0 0
    %2079 = vmatpush.bf16.msra.mxu0 0
    %2080 = vmatpush.bf16.msra.mxu0 0
    %2081 = vmatpush.bf16.msra.mxu0 0
    %2082 = vmatpush.bf16.msra.mxu0 %v2073
    %2083 = vmatmul.bf16.gmra.mxu0 %v2070
    %v2084 = vpop.f32.mrf.mxu0
    %v2085 = vadd.f32 0.0, %v2084
    %v2086 = vpop.f32.mrf.mxu0
    %2087 = vdwg.mxu0
    %v2089 = vrot.slane %v2085, 1
    %v2090 = vrot.slane %v2085, 2
    %v2091 = vrot.slane %v2085, 3
    %v2092 = vrot.slane %v2085, 4
    %v2093 = vrot.slane %v2085, 5
    %v2094 = vrot.slane %v2085, 6
    %v2095 = vrot.slane %v2085, 7
    %vm2103 = vcmask 122880
    %2104 = vst.msk [vmem:[#allocation12] sm:$0x1] %vm2103, %v2085
    %2105 = vst.msk [vmem:[#allocation12 + $0x2] sm:$0x1] %vm2103, %v2089
    %2106 = vst.msk [vmem:[#allocation12 + $0x4] sm:$0x1] %vm2103, %v2090
    %2107 = vst.msk [vmem:[#allocation12 + $0x6] sm:$0x1] %vm2103, %v2091
    %2108 = vst.msk [vmem:[#allocation12 + $0x8] sm:$0x1] %vm2103, %v2092
    %2109 = vst.msk [vmem:[#allocation12 + $0xa] sm:$0x1] %vm2103, %v2093
    %2110 = vst.msk [vmem:[#allocation12 + $0xc] sm:$0x1] %vm2103, %v2094
    %2111 = vst.msk [vmem:[#allocation12 + $0xe] sm:$0x1] %vm2103, %v2095
    %v2112 = vld [vmem:[%s0 + $0x1] sm:$0x1]
    %v2113 = vld [vmem:[%s0 + $0x3] sm:$0x1]
    %v2114 = vld [vmem:[%s0 + $0x5] sm:$0x1]
    %v2115 = vld [vmem:[%s0 + $0x7] sm:$0x1]
    %v2116 = vld [vmem:[%s0 + $0x9] sm:$0x1]
    %v2117 = vld [vmem:[%s0 + $0xb] sm:$0x1]
    %v2118 = vld [vmem:[%s0 + $0xd] sm:$0x1]
    %v2119 = vld [vmem:[%s0 + $0xf] sm:$0x1]
    %v2120 = vpack.c.bf16 %v2112, %v2112
    %v2121 = vpack.c.bf16 %v2113, %v2113
    %v2122 = vpack.c.bf16 %v2114, %v2114
    %v2123 = vpack.c.bf16 %v2115, %v2115
    %v2124 = vpack.c.bf16 %v2116, %v2116
    %v2125 = vpack.c.bf16 %v2117, %v2117
    %v2126 = vpack.c.bf16 %v2118, %v2118
    %v2127 = vpack.c.bf16 %v2119, %v2119
    %v2128 = vld [vmem:[#allocation7 + $0x1] sm:$0x1]
    %v2129 = vld [vmem:[#allocation7 + $0x3] sm:$0x1]
    %v2130 = vld [vmem:[#allocation7 + $0x5] sm:$0x1]
    %v2131 = vld [vmem:[#allocation7 + $0x7] sm:$0x1]
    %v2132 = vld [vmem:[#allocation7 + $0x9] sm:$0x1]
    %v2133 = vld [vmem:[#allocation7 + $0xb] sm:$0x1]
    %v2134 = vld [vmem:[#allocation7 + $0xd] sm:$0x1]
    %v2135 = vld [vmem:[#allocation7 + $0xf] sm:$0x1]
    %v2136 = vpack.c.bf16 %v2128, %v2128
    %v2137 = vpack.c.bf16 %v2129, %v2129
    %v2138 = vpack.c.bf16 %v2130, %v2130
    %v2139 = vpack.c.bf16 %v2131, %v2131
    %v2140 = vpack.c.bf16 %v2132, %v2132
    %v2141 = vpack.c.bf16 %v2133, %v2133
    %v2142 = vpack.c.bf16 %v2134, %v2134
    %v2143 = vpack.c.bf16 %v2135, %v2135
    %v2152 = vunpack.c.l.b16 %v2120
    %v2153 = vunpack.c.l.b16 %v2121
    %v2154 = vunpack.c.l.b16 %v2122
    %v2155 = vunpack.c.l.b16 %v2123
    %v2156 = vunpack.c.l.b16 %v2124
    %v2157 = vunpack.c.l.b16 %v2125
    %v2158 = vunpack.c.l.b16 %v2126
    %v2159 = vunpack.c.l.b16 %v2127
    %v2160 = vrot.slane %v2153, 7
    %v2161 = vsel %vm111, %v2160, %v2152
    %v2162 = vrot.slane %v2154, 6
    %v2163 = vsel %vm114, %v2162, %v2161
    %v2164 = vrot.slane %v2155, 5
    %v2165 = vsel %vm117, %v2164, %v2163
    %v2166 = vrot.slane %v2156, 4
    %v2167 = vsel %vm120, %v2166, %v2165
    %v2168 = vrot.slane %v2157, 3
    %v2169 = vsel %vm123, %v2168, %v2167
    %v2170 = vrot.slane %v2158, 2
    %v2171 = vsel %vm126, %v2170, %v2169
    %v2172 = vrot.slane %v2159, 1
    %v2173 = vsel %vm129, %v2172, %v2171
    %v2174 = vpack.c.b16 %v2173, %v2173
    %v2176 = vsel %vm138, %v2174, 0
    %2178 = vmatpush.bf16.msra.mxu0 0
    %2179 = vmatpush.bf16.msra.mxu0 0
    %2180 = vmatpush.bf16.msra.mxu0 0
    %2181 = vmatpush.bf16.msra.mxu0 0
    %2182 = vmatpush.bf16.msra.mxu0 0
    %2183 = vmatpush.bf16.msra.mxu0 0
    %2184 = vmatpush.bf16.msra.mxu0 0
    %2185 = vmatpush.bf16.msra.mxu0 %v136
    %2186 = vmatmul.bf16.gmra.mxu0 %v2176
    %v2187 = vpop.f32.mrf.mxu0
    %v2188 = vadd.f32 0.0, %v2187
    %v2189 = vpop.f32.mrf.mxu0
    %2190 = vdwg.mxu0
    %v2192 = vrot.slane %v2188, 4
    %v2202 = vunpack.c.l.b16 %v2136
    %v2203 = vunpack.c.l.b16 %v2137
    %v2204 = vunpack.c.l.b16 %v2138
    %v2205 = vunpack.c.l.b16 %v2139
    %v2206 = vunpack.c.l.b16 %v2140
    %v2207 = vunpack.c.l.b16 %v2141
    %v2208 = vunpack.c.l.b16 %v2142
    %v2209 = vunpack.c.l.b16 %v2143
    %v2210 = vrot.slane %v2203, 7
    %v2211 = vsel %vm111, %v2210, %v2202
    %v2212 = vrot.slane %v2204, 6
    %v2213 = vsel %vm114, %v2212, %v2211
    %v2214 = vrot.slane %v2205, 5
    %v2215 = vsel %vm117, %v2214, %v2213
    %v2216 = vrot.slane %v2206, 4
    %v2217 = vsel %vm120, %v2216, %v2215
    %v2218 = vrot.slane %v2207, 3
    %v2219 = vsel %vm123, %v2218, %v2217
    %v2220 = vrot.slane %v2208, 2
    %v2221 = vsel %vm126, %v2220, %v2219
    %v2222 = vrot.slane %v2209, 1
    %v2223 = vsel %vm129, %v2222, %v2221
    %v2224 = vpack.c.b16 %v2223, %v2223
    %v2226 = vsel %vm138, %v2224, 0
    %2228 = vmatpush.bf16.msra.mxu0 0
    %2229 = vmatpush.bf16.msra.mxu0 0
    %2230 = vmatpush.bf16.msra.mxu0 0
    %2231 = vmatpush.bf16.msra.mxu0 0
    %2232 = vmatpush.bf16.msra.mxu0 0
    %2233 = vmatpush.bf16.msra.mxu0 0
    %2234 = vmatpush.bf16.msra.mxu0 0
    %2235 = vmatpush.bf16.msra.mxu0 %v193
    %2236 = vmatmul.bf16.gmra.mxu0 %v2226
    %v2237 = vpop.f32.mrf.mxu0
    %v2238 = vadd.f32 0.0, %v2237
    %v2239 = vpop.f32.mrf.mxu0
    %2240 = vdwg.mxu0
    %v2242 = vrot.slane %v2238, 4
    %2243 = vxpose.xlu0.b32.start [1/16] %v2188, 128
    %2244 = vxpose.xlu0.b32.cont [2/16] 0.0, 128
    %2245 = vxpose.xlu0.b32.cont [3/16] 0.0, 128
    %2246 = vxpose.xlu0.b32.cont [4/16] 0.0, 128
    %2247 = vxpose.xlu0.b32.cont [5/16] 0.0, 128
    %2248 = vxpose.xlu0.b32.cont [6/16] 0.0, 128
    %2249 = vxpose.xlu0.b32.cont [7/16] 0.0, 128
    %2250 = vxpose.xlu0.b32.cont [8/16] 0.0, 128
    %2251 = vxpose.xlu0.b32.cont [9/16] 0.0, 128
    %2252 = vxpose.xlu0.b32.cont [10/16] 0.0, 128
    %2253 = vxpose.xlu0.b32.cont [11/16] 0.0, 128
    %2254 = vxpose.xlu0.b32.cont [12/16] 0.0, 128
    %2255 = vxpose.xlu0.b32.cont [13/16] 0.0, 128
    %2256 = vxpose.xlu0.b32.cont [14/16] 0.0, 128
    %2257 = vxpose.xlu0.b32.cont [15/16] 0.0, 128
    %2258 = vxpose.xlu0.b32.end [16/16] 0.0, 128
    %v2259 = vpop.trf.xlu0
    %v2260 = vpop.trf.xlu0
    %v2261 = vpop.trf.xlu0
    %v2262 = vpop.trf.xlu0
    %v2263 = vpop.trf.xlu0
    %v2264 = vpop.trf.xlu0
    %v2265 = vpop.trf.xlu0
    %v2266 = vpop.trf.xlu0
    %v2267 = vpop.trf.xlu0
    %v2268 = vpop.trf.xlu0
    %v2269 = vpop.trf.xlu0
    %v2270 = vpop.trf.xlu0
    %v2271 = vpop.trf.xlu0
    %v2272 = vpop.trf.xlu0
    %v2273 = vpop.trf.xlu0
    %v2274 = vpop.trf.xlu0
    %2275 = vxpose.xlu0.b32.start [1/16] %v2192, 128
    %2276 = vxpose.xlu0.b32.cont [2/16] 0.0, 128
    %2277 = vxpose.xlu0.b32.cont [3/16] 0.0, 128
    %2278 = vxpose.xlu0.b32.cont [4/16] 0.0, 128
    %2279 = vxpose.xlu0.b32.cont [5/16] 0.0, 128
    %2280 = vxpose.xlu0.b32.cont [6/16] 0.0, 128
    %2281 = vxpose.xlu0.b32.cont [7/16] 0.0, 128
    %2282 = vxpose.xlu0.b32.cont [8/16] 0.0, 128
    %2283 = vxpose.xlu0.b32.cont [9/16] 0.0, 128
    %2284 = vxpose.xlu0.b32.cont [10/16] 0.0, 128
    %2285 = vxpose.xlu0.b32.cont [11/16] 0.0, 128
    %2286 = vxpose.xlu0.b32.cont [12/16] 0.0, 128
    %2287 = vxpose.xlu0.b32.cont [13/16] 0.0, 128
    %2288 = vxpose.xlu0.b32.cont [14/16] 0.0, 128
    %2289 = vxpose.xlu0.b32.cont [15/16] 0.0, 128
    %2290 = vxpose.xlu0.b32.end [16/16] 0.0, 128
    %v2291 = vpop.trf.xlu0
    %v2292 = vpop.trf.xlu0
    %v2293 = vpop.trf.xlu0
    %v2294 = vpop.trf.xlu0
    %v2295 = vpop.trf.xlu0
    %v2296 = vpop.trf.xlu0
    %v2297 = vpop.trf.xlu0
    %v2298 = vpop.trf.xlu0
    %v2299 = vpop.trf.xlu0
    %v2300 = vpop.trf.xlu0
    %v2301 = vpop.trf.xlu0
    %v2302 = vpop.trf.xlu0
    %v2303 = vpop.trf.xlu0
    %v2304 = vpop.trf.xlu0
    %v2305 = vpop.trf.xlu0
    %v2306 = vpop.trf.xlu0
    %2307 = vst [vmem:[#allocation1] ss:$2 sm:$0xff] %v2188
    %v2308 = vld.sshfl [vmem:[#allocation1] sm:$0xff pattern:$0x75316420]
    %s2309 = scalar_lea.vmem [#allocation1], 16
    %2310 = vst [vmem:[%s2309] ss:$2 sm:$0xff] %v2192
    %v2311 = vld.sshfl [vmem:[#allocation1 + $0x10] sm:$0xff pattern:$0x75316420]
    %2312 = vrot.lane.b32.xlu0 %v2308, 124
    %v2313 = vpop.permute.xlu0 %2312
    %2314 = vrot.lane.b32.xlu0 %v2311, 124
    %v2315 = vpop.permute.xlu0 %2314
    %2318 = vxpose.xlu0.b32.start [1/16] %v2313, 128
    %2319 = vxpose.xlu0.b32.cont [2/16] 0.0, 128
    %2320 = vxpose.xlu0.b32.cont [3/16] 0.0, 128
    %2321 = vxpose.xlu0.b32.cont [4/16] 0.0, 128
    %2322 = vxpose.xlu0.b32.cont [5/16] 0.0, 128
    %2323 = vxpose.xlu0.b32.cont [6/16] 0.0, 128
    %2324 = vxpose.xlu0.b32.cont [7/16] 0.0, 128
    %2325 = vxpose.xlu0.b32.cont [8/16] 0.0, 128
    %2326 = vxpose.xlu0.b32.cont [9/16] 0.0, 128
    %2327 = vxpose.xlu0.b32.cont [10/16] 0.0, 128
    %2328 = vxpose.xlu0.b32.cont [11/16] 0.0, 128
    %2329 = vxpose.xlu0.b32.cont [12/16] 0.0, 128
    %2330 = vxpose.xlu0.b32.cont [13/16] 0.0, 128
    %2331 = vxpose.xlu0.b32.cont [14/16] 0.0, 128
    %2332 = vxpose.xlu0.b32.cont [15/16] 0.0, 128
    %2333 = vxpose.xlu0.b32.end [16/16] 0.0, 128
    %v2334 = vpop.trf.xlu0
    %v2335 = vpop.trf.xlu0
    %v2336 = vpop.trf.xlu0
    %v2337 = vpop.trf.xlu0
    %v2338 = vpop.trf.xlu0
    %v2339 = vpop.trf.xlu0
    %v2340 = vpop.trf.xlu0
    %v2341 = vpop.trf.xlu0
    %v2342 = vpop.trf.xlu0
    %v2343 = vpop.trf.xlu0
    %v2344 = vpop.trf.xlu0
    %v2345 = vpop.trf.xlu0
    %v2346 = vpop.trf.xlu0
    %v2347 = vpop.trf.xlu0
    %v2348 = vpop.trf.xlu0
    %v2349 = vpop.trf.xlu0
    %2350 = vxpose.xlu0.b32.start [1/16] %v2315, 128
    %2351 = vxpose.xlu0.b32.cont [2/16] 0.0, 128
    %2352 = vxpose.xlu0.b32.cont [3/16] 0.0, 128
    %2353 = vxpose.xlu0.b32.cont [4/16] 0.0, 128
    %2354 = vxpose.xlu0.b32.cont [5/16] 0.0, 128
    %2355 = vxpose.xlu0.b32.cont [6/16] 0.0, 128
    %2356 = vxpose.xlu0.b32.cont [7/16] 0.0, 128
    %2357 = vxpose.xlu0.b32.cont [8/16] 0.0, 128
    %2358 = vxpose.xlu0.b32.cont [9/16] 0.0, 128
    %2359 = vxpose.xlu0.b32.cont [10/16] 0.0, 128
    %2360 = vxpose.xlu0.b32.cont [11/16] 0.0, 128
    %2361 = vxpose.xlu0.b32.cont [12/16] 0.0, 128
    %2362 = vxpose.xlu0.b32.cont [13/16] 0.0, 128
    %2363 = vxpose.xlu0.b32.cont [14/16] 0.0, 128
    %2364 = vxpose.xlu0.b32.cont [15/16] 0.0, 128
    %2365 = vxpose.xlu0.b32.end [16/16] 0.0, 128
    %v2366 = vpop.trf.xlu0
    %v2367 = vpop.trf.xlu0
    %v2368 = vpop.trf.xlu0
    %v2369 = vpop.trf.xlu0
    %v2370 = vpop.trf.xlu0
    %v2371 = vpop.trf.xlu0
    %v2372 = vpop.trf.xlu0
    %v2373 = vpop.trf.xlu0
    %v2374 = vpop.trf.xlu0
    %v2375 = vpop.trf.xlu0
    %v2376 = vpop.trf.xlu0
    %v2377 = vpop.trf.xlu0
    %v2378 = vpop.trf.xlu0
    %v2379 = vpop.trf.xlu0
    %v2380 = vpop.trf.xlu0
    %v2381 = vpop.trf.xlu0
    %v2383 = vsel %vm352, %v2259, 0
    %v2385 = vsel %vm356, %v2238, 0
    %2387 = vmatpush.msra.mxu0 0.0
    %2388 = vmatpush.msra.mxu0 0.0
    %2389 = vmatpush.msra.mxu0 0.0
    %2390 = vmatpush.msra.mxu0 0.0
    %2391 = vmatpush.msra.mxu0 0.0
    %2392 = vmatpush.msra.mxu0 0.0
    %2393 = vmatpush.msra.mxu0 0.0
    %2394 = vmatpush.msra.mxu0 0.0
    %2395 = vmatpush.msra.mxu0 0.0
    %2396 = vmatpush.msra.mxu0 0.0
    %2397 = vmatpush.msra.mxu0 0.0
    %2398 = vmatpush.msra.mxu0 0.0
    %2399 = vmatpush.msra.mxu0 0.0
    %2400 = vmatpush.msra.mxu0 0.0
    %2401 = vmatpush.msra.mxu0 0.0
    %2402 = vmatpush.msra.mxu0 %v2385
    %2403 = vmatmul.f32.gmra.mxu0 %v2383
    %v2404 = vpop.f32.mrf.mxu0
    %v2405 = vadd.f32 0.0, %v2404
    %2406 = vdwg.mxu0
    %v2408 = vsel %vm352, %v2291, 0
    %v2410 = vsel %vm356, %v2242, 0
    %2412 = vmatpush.msra.mxu0 0.0
    %2413 = vmatpush.msra.mxu0 0.0
    %2414 = vmatpush.msra.mxu0 0.0
    %2415 = vmatpush.msra.mxu0 0.0
    %2416 = vmatpush.msra.mxu0 0.0
    %2417 = vmatpush.msra.mxu0 0.0
    %2418 = vmatpush.msra.mxu0 0.0
    %2419 = vmatpush.msra.mxu0 0.0
    %2420 = vmatpush.msra.mxu0 0.0
    %2421 = vmatpush.msra.mxu0 0.0
    %2422 = vmatpush.msra.mxu0 0.0
    %2423 = vmatpush.msra.mxu0 0.0
    %2424 = vmatpush.msra.mxu0 0.0
    %2425 = vmatpush.msra.mxu0 0.0
    %2426 = vmatpush.msra.mxu0 0.0
    %2427 = vmatpush.msra.mxu0 %v2410
    %2428 = vmatmul.f32.gmra.mxu0 %v2408
    %v2429 = vpop.f32.mrf.mxu0
    %v2430 = vadd.f32 0.0, %v2429
    %2431 = vdwg.mxu0
    %2432 = vst [vmem:[#allocation1] ss:$2 sm:$0xff] %v2238
    %v2433 = vld.sshfl [vmem:[#allocation1] sm:$0xff pattern:$0x75316420]
    %2434 = vrot.lane.b32.xlu0 %v2433, 124
    %v2435 = vpop.permute.xlu0 %2434
    %v2437 = vsel %vm352, %v2334, 0
    %v2439 = vsel %vm356, %v2435, 0
    %2441 = vmatpush.msra.mxu0 0.0
    %2442 = vmatpush.msra.mxu0 0.0
    %2443 = vmatpush.msra.mxu0 0.0
    %2444 = vmatpush.msra.mxu0 0.0
    %2445 = vmatpush.msra.mxu0 0.0
    %2446 = vmatpush.msra.mxu0 0.0
    %2447 = vmatpush.msra.mxu0 0.0
    %2448 = vmatpush.msra.mxu0 0.0
    %2449 = vmatpush.msra.mxu0 0.0
    %2450 = vmatpush.msra.mxu0 0.0
    %2451 = vmatpush.msra.mxu0 0.0
    %2452 = vmatpush.msra.mxu0 0.0
    %2453 = vmatpush.msra.mxu0 0.0
    %2454 = vmatpush.msra.mxu0 0.0
    %2455 = vmatpush.msra.mxu0 0.0
    %2456 = vmatpush.msra.mxu0 %v2439
    %2457 = vmatmul.f32.gmra.mxu0 %v2437
    %v2458 = vpop.f32.mrf.mxu0
    %v2459 = vadd.f32 0.0, %v2458
    %2460 = vdwg.mxu0
    %2461 = vst [vmem:[#allocation1] ss:$2 sm:$0xff] %v2242
    %v2462 = vld.sshfl [vmem:[#allocation1] sm:$0xff pattern:$0x75316420]
    %2463 = vrot.lane.b32.xlu0 %v2462, 124
    %v2464 = vpop.permute.xlu0 %2463
    %v2466 = vsel %vm352, %v2366, 0
    %v2468 = vsel %vm356, %v2464, 0
    %2470 = vmatpush.msra.mxu0 0.0
    %2471 = vmatpush.msra.mxu0 0.0
    %2472 = vmatpush.msra.mxu0 0.0
    %2473 = vmatpush.msra.mxu0 0.0
    %2474 = vmatpush.msra.mxu0 0.0
    %2475 = vmatpush.msra.mxu0 0.0
    %2476 = vmatpush.msra.mxu0 0.0
    %2477 = vmatpush.msra.mxu0 0.0
    %2478 = vmatpush.msra.mxu0 0.0
    %2479 = vmatpush.msra.mxu0 0.0
    %2480 = vmatpush.msra.mxu0 0.0
    %2481 = vmatpush.msra.mxu0 0.0
    %2482 = vmatpush.msra.mxu0 0.0
    %2483 = vmatpush.msra.mxu0 0.0
    %2484 = vmatpush.msra.mxu0 0.0
    %2485 = vmatpush.msra.mxu0 %v2468
    %2486 = vmatmul.f32.gmra.mxu0 %v2466
    %v2487 = vpop.f32.mrf.mxu0
    %v2488 = vadd.f32 0.0, %v2487
    %2489 = vdwg.mxu0
    %v2490 = vsub.f32 %v2405, %v2459
    %v2491 = vsub.f32 %v2430, %v2488
    %2492 = vmatpush.msra.mxu0 0.0
    %2493 = vmatpush.msra.mxu0 0.0
    %2494 = vmatpush.msra.mxu0 0.0
    %2495 = vmatpush.msra.mxu0 0.0
    %2496 = vmatpush.msra.mxu0 0.0
    %2497 = vmatpush.msra.mxu0 0.0
    %2498 = vmatpush.msra.mxu0 0.0
    %2499 = vmatpush.msra.mxu0 0.0
    %2500 = vmatpush.msra.mxu0 0.0
    %2501 = vmatpush.msra.mxu0 0.0
    %2502 = vmatpush.msra.mxu0 0.0
    %2503 = vmatpush.msra.mxu0 0.0
    %2504 = vmatpush.msra.mxu0 0.0
    %2505 = vmatpush.msra.mxu0 0.0
    %2506 = vmatpush.msra.mxu0 0.0
    %2507 = vmatpush.msra.mxu0 %v2385
    %2508 = vmatmul.f32.gmra.mxu0 %v2437
    %v2509 = vpop.f32.mrf.mxu0
    %v2510 = vadd.f32 0.0, %v2509
    %2511 = vdwg.mxu0
    %2512 = vmatpush.msra.mxu0 0.0
    %2513 = vmatpush.msra.mxu0 0.0
    %2514 = vmatpush.msra.mxu0 0.0
    %2515 = vmatpush.msra.mxu0 0.0
    %2516 = vmatpush.msra.mxu0 0.0
    %2517 = vmatpush.msra.mxu0 0.0
    %2518 = vmatpush.msra.mxu0 0.0
    %2519 = vmatpush.msra.mxu0 0.0
    %2520 = vmatpush.msra.mxu0 0.0
    %2521 = vmatpush.msra.mxu0 0.0
    %2522 = vmatpush.msra.mxu0 0.0
    %2523 = vmatpush.msra.mxu0 0.0
    %2524 = vmatpush.msra.mxu0 0.0
    %2525 = vmatpush.msra.mxu0 0.0
    %2526 = vmatpush.msra.mxu0 0.0
    %2527 = vmatpush.msra.mxu0 %v2410
    %2528 = vmatmul.f32.gmra.mxu0 %v2466
    %v2529 = vpop.f32.mrf.mxu0
    %v2530 = vadd.f32 0.0, %v2529
    %2531 = vdwg.mxu0
    %2532 = vst [vmem:[#allocation1] ss:$2 sm:$0xff] %v2238
    %v2533 = vld.sshfl [vmem:[#allocation1] sm:$0xff pattern:$0x75316420]
    %2534 = vrot.lane.b32.xlu0 %v2533, 124
    %v2535 = vpop.permute.xlu0 %2534
    %v2536 = vsel %vm356, %v2535, 0
    %2538 = vmatpush.msra.mxu0 0.0
    %2539 = vmatpush.msra.mxu0 0.0
    %2540 = vmatpush.msra.mxu0 0.0
    %2541 = vmatpush.msra.mxu0 0.0
    %2542 = vmatpush.msra.mxu0 0.0
    %2543 = vmatpush.msra.mxu0 0.0
    %2544 = vmatpush.msra.mxu0 0.0
    %2545 = vmatpush.msra.mxu0 0.0
    %2546 = vmatpush.msra.mxu0 0.0
    %2547 = vmatpush.msra.mxu0 0.0
    %2548 = vmatpush.msra.mxu0 0.0
    %2549 = vmatpush.msra.mxu0 0.0
    %2550 = vmatpush.msra.mxu0 0.0
    %2551 = vmatpush.msra.mxu0 0.0
    %2552 = vmatpush.msra.mxu0 0.0
    %2553 = vmatpush.msra.mxu0 %v2536
    %2554 = vmatmul.f32.gmra.mxu0 %v2383
    %v2555 = vpop.f32.mrf.mxu0
    %v2556 = vadd.f32 %v2510, %v2555
    %2557 = vdwg.mxu0
    %2558 = vst [vmem:[#allocation1] ss:$2 sm:$0xff] %v2242
    %v2559 = vld.sshfl [vmem:[#allocation1] sm:$0xff pattern:$0x75316420]
    %2560 = vrot.lane.b32.xlu0 %v2559, 124
    %v2561 = vpop.permute.xlu0 %2560
    %v2562 = vsel %vm356, %v2561, 0
    %2564 = vmatpush.msra.mxu0 0.0
    %2565 = vmatpush.msra.mxu0 0.0
    %2566 = vmatpush.msra.mxu0 0.0
    %2567 = vmatpush.msra.mxu0 0.0
    %2568 = vmatpush.msra.mxu0 0.0
    %2569 = vmatpush.msra.mxu0 0.0
    %2570 = vmatpush.msra.mxu0 0.0
    %2571 = vmatpush.msra.mxu0 0.0
    %2572 = vmatpush.msra.mxu0 0.0
    %2573 = vmatpush.msra.mxu0 0.0
    %2574 = vmatpush.msra.mxu0 0.0
    %2575 = vmatpush.msra.mxu0 0.0
    %2576 = vmatpush.msra.mxu0 0.0
    %2577 = vmatpush.msra.mxu0 0.0
    %2578 = vmatpush.msra.mxu0 0.0
    %2579 = vmatpush.msra.mxu0 %v2562
    %2580 = vmatmul.f32.gmra.mxu0 %v2408
    %v2581 = vpop.f32.mrf.mxu0
    %v2582 = vadd.f32 %v2530, %v2581
    %2583 = vdwg.mxu0
    %v2584 = vand.u32 2147483647, %v2490
    %v2585 = vand.u32 2147483647, %v2491
    %v2586 = vmul.f32 %v2584, -2.0
    %v2587 = vmul.f32 %v2585, -2.0
    %v2588 = vmul.f32 %v2586, 1.442695
    %v2589 = vpow.pop %v2588
    %v2590 = vmul.f32 %v2587, 1.442695
    %v2591 = vpow.pop %v2590
    %v2592 = vmul.f32 %v2556, 2.0
    %v2593 = vmul.f32 %v2582, 2.0
    %v2594 = vand.u32 2147483647, %v2592
    %vm2595 = vcmp.le.f32.partialorder %v2594, 0.7853982
    %vm2596 = vcmp.lt.s32.totalorder %v2592, 0
    %v2597 = vand.u32 %v2592, 2139095040
    %v2598 = vshrl.u32 %v2597, 23
    %v2599 = vsub.s32 %v2598, 127
    %v2600 = vand.u32 2147483647, %v2592
    %v2601 = vand.u32 %v2600, 8388607
    %v2602 = vor.u32 %v2601, 8388608
    %v2603 = vsub.s32 0, %v2602
    %v2604 = vadd.s32 %v2599, 1
    %vm2605 = vcmp.gt.s32.totalorder %v2604, 0
    %v2606 = vsel %vm2605, %v2604, 0
    %v2607 = vshrl.u32 %v2606, 5
    %v2608 = vand.u32 %v2606, 31
    %v2609 = vsub.s32 32, %v2608
    %v2610 = vshrl.u32 683565275, %v2609
    %v2611 = vshll.u32 683565275, %v2608
    %v2612 = vshrl.u32 2475754826, %v2609
    %v2613 = vor.u32 %v2611, %v2612
    %v2614 = vshll.u32 2475754826, %v2608
    %v2615 = vshrl.u32 2131351028, %v2609
    %v2616 = vor.u32 %v2614, %v2615
    %v2617 = vshll.u32 2131351028, %v2608
    %v2618 = vshrl.u32 2102212464, %v2609
    %v2619 = vor.u32 %v2617, %v2618
    %v2620 = vshll.u32 2102212464, %v2608
    %v2621 = vshrl.u32 920167782, %v2609
    %v2622 = vor.u32 %v2620, %v2621
    %v2623 = vshll.u32 920167782, %v2608
    %v2624 = vshrl.u32 1326507024, %v2609
    %v2625 = vor.u32 %v2623, %v2624
    %vm2626 = vcmp.lt.s32.totalorder %v2607, 1
    %vm2627 = vcmp.lt.s32.totalorder %v2607, 2
    %vm2628 = vcmp.lt.s32.totalorder %v2607, 3
    %vm2629 = vcmp.lt.s32.totalorder %v2607, 4
    %v2630 = vsel %vm2626, %v2610, %v2613
    %v2631 = vsel %vm2629, %v2619, 2102212464
    %v2632 = vsel %vm2628, %v2616, %v2631
    %v2633 = vsel %vm2627, %v2630, %v2632
    %v2634 = vsel %vm2626, %v2613, %v2616
    %v2635 = vsel %vm2629, %v2622, 920167782
    %v2636 = vsel %vm2628, %v2619, %v2635
    %v2637 = vsel %vm2627, %v2634, %v2636
    %v2638 = vsel %vm2626, %v2616, %v2619
    %v2639 = vsel %vm2629, %v2625, 1326507024
    %v2640 = vsel %vm2628, %v2622, %v2639
    %v2641 = vsel %vm2627, %v2638, %v2640
    %v2642 = vshll.u32 %v2602, 8
    %v2643 = vand.u32 %v2642, 65535
    %v2644 = vshrl.u32 %v2642, 16
    %v2645 = vand.u32 %v2641, 65535
    %v2646 = vshrl.u32 %v2641, 16
    %v2647 = vmul.u32 %v2643, %v2645
    %v2648 = vmul.u32 %v2643, %v2646
    %v2649 = vmul.u32 %v2644, %v2645
    %v2650 = vmul.u32 %v2644, %v2646
    %v2651 = vshll.u32 %v2648, 16
    %v2652 = vshrl.u32 %v2648, 16
    %v2653 = vshll.u32 %v2649, 16
    %v2654 = vshrl.u32 %v2649, 16
    %vm2655 = vc.u32 %v2647, %v2651
    %v2656 = vsel %vm2655, 1, 0
    %v2657 = vadd.s32 %v2647, %v2651
    %v2658 = vadd.s32 %v2650, %v2656
    %vm2659 = vc.u32 %v2657, %v2653
    %v2660 = vsel %vm2659, 1, 0
    %v2661 = vadd.s32 %v2657, %v2653
    %v2662 = vadd.s32 %v2658, %v2660
    %v2663 = vadd.s32 %v2662, %v2652
    %v2664 = vadd.s32 %v2663, %v2654
    %v2665 = vand.u32 %v2642, 65535
    %v2666 = vshrl.u32 %v2642, 16
    %v2667 = vand.u32 %v2637, 65535
    %v2668 = vshrl.u32 %v2637, 16
    %v2669 = vmul.u32 %v2665, %v2667
    %v2670 = vmul.u32 %v2665, %v2668
    %v2671 = vmul.u32 %v2666, %v2667
    %v2672 = vmul.u32 %v2666, %v2668
    %v2673 = vshll.u32 %v2670, 16
    %v2674 = vshrl.u32 %v2670, 16
    %v2675 = vshll.u32 %v2671, 16
    %v2676 = vshrl.u32 %v2671, 16
    %vm2677 = vc.u32 %v2669, %v2673
    %v2678 = vsel %vm2677, 1, 0
    %v2679 = vadd.s32 %v2669, %v2673
    %v2680 = vadd.s32 %v2672, %v2678
    %vm2681 = vc.u32 %v2679, %v2675
    %v2682 = vsel %vm2681, 1, 0
    %v2683 = vadd.s32 %v2679, %v2675
    %v2684 = vadd.s32 %v2680, %v2682
    %v2685 = vadd.s32 %v2684, %v2674
    %v2686 = vadd.s32 %v2685, %v2676
    %v2687 = vmul.u32 %v2642, %v2633
    %v2688 = vadd.s32 %v2664, %v2683
    %vm2689 = vc.u32 %v2664, %v2683
    %v2690 = vadd.s32 %v2686, 1
    %v2691 = vsel %vm2689, %v2690, %v2686
    %v2692 = vadd.s32 %v2687, %v2691
    %v2693 = vadd.s32 %v2692, 536870912
    %v2694 = vshrl.u32 %v2693, 30
    %v2695 = vshll.u32 %v2694, 30
    %v2696 = vsub.s32 %v2692, %v2695
    %vm2697 = vcmp.lt.s32.totalorder %v2696, 0
    %v2698 = vsub.s32 0, %v2696
    %v2699 = vsel %vm2697, %v2698, %v2696
    %v2700 = vclz %v2699
    %v2701 = vsub.s32 %v2700, 2
    %vm2702 = vcmp.gt.s32.totalorder 0, %v2701
    %v2703 = vsel %vm2702, 0, %v2701
    %v2704 = vsub.s32 32, %v2703
    %v2705 = vshll.u32 %v2696, %v2703
    %v2706 = vshrl.u32 %v2688, %v2704
    %v2707 = vor.u32 %v2705, %v2706
    %v2708 = vsub.s32 4294967266, %v2703
    %v2709 = vadd.s32 %v2708, 127
    %v2710 = vshll.u32 %v2709, 23
    %v2711 = vor.u32 4788187, %v2710
    %v2712 = vand.u32 2147483647, %v2711
    %v2714 = vcvt.s32.f32 %v2707
    %v2715 = vmul.f32 %v2714, %v2712
    %v2716 = vxor.u32 %v2715, 2147483648
    %v2717 = vsel %vm2596, %v2716, %v2715
    %v2718 = vsub.s32 4, %v2694
    %v2719 = vsel %vm2596, %v2718, %v2694
    %v2720 = vsel %vm2595, %v2592, %v2717
    %v2721 = vsel %vm2595, 0, %v2719
    %v2722 = vmul.f32 %v2720, %v2720
    %v2723 = vmul.f32 %v2722, -0.001358992
    %v2724 = vadd.f32 %v2723, 0.041655596
    %v2725 = vmul.f32 %v2722, %v2724
    %v2726 = vadd.f32 %v2725, -0.4999988
    %v2727 = vmul.f32 %v2722, %v2726
    %v2728 = vadd.f32 1.0, %v2727
    %v2729 = vmul.f32 %v2720, %v2720
    %v2730 = vmul.f32 %v2729, -0.00019511016
    %v2731 = vadd.f32 %v2730, 0.008332121
    %v2732 = vmul.f32 %v2729, %v2731
    %v2733 = vadd.f32 %v2732, -0.16666654
    %v2734 = vmul.f32 %v2729, %v2733
    %v2735 = vadd.f32 %v2734, 1.0
    %v2736 = vmul.f32 %v2735, %v2720
    %vm2737 = vweird.f32 %v2592
    %v2738 = vand.u32 %v2721, 3
    %vm2739 = vcmp.lt.s32.totalorder %v2738, 2
    %vm2740 = vcmp.eq.s32.totalorder %v2738, 0
    %v2741 = vxor.u32 %v2736, 2147483648
    %v2742 = vsel %vm2740, %v2728, %v2741
    %vm2743 = vcmp.eq.s32.totalorder %v2738, 2
    %v2744 = vxor.u32 %v2728, 2147483648
    %v2745 = vsel %vm2743, %v2744, %v2736
    %v2746 = vsel %vm2739, %v2742, %v2745
    %v2747 = vsel %vm2737, nan, %v2746
    %v2748 = vand.u32 2147483647, %v2593
    %vm2749 = vcmp.le.f32.partialorder %v2748, 0.7853982
    %vm2750 = vcmp.lt.s32.totalorder %v2593, 0
    %v2751 = vand.u32 %v2593, 2139095040
    %v2752 = vshrl.u32 %v2751, 23
    %v2753 = vsub.s32 %v2752, 127
    %v2754 = vand.u32 2147483647, %v2593
    %v2755 = vand.u32 %v2754, 8388607
    %v2756 = vor.u32 %v2755, 8388608
    %v2757 = vsub.s32 0, %v2756
    %v2758 = vadd.s32 %v2753, 1
    %vm2759 = vcmp.gt.s32.totalorder %v2758, 0
    %v2760 = vsel %vm2759, %v2758, 0
    %v2761 = vshrl.u32 %v2760, 5
    %v2762 = vand.u32 %v2760, 31
    %v2763 = vsub.s32 32, %v2762
    %v2764 = vshrl.u32 683565275, %v2763
    %v2765 = vshll.u32 683565275, %v2762
    %v2766 = vshrl.u32 2475754826, %v2763
    %v2767 = vor.u32 %v2765, %v2766
    %v2768 = vshll.u32 2475754826, %v2762
    %v2769 = vshrl.u32 2131351028, %v2763
    %v2770 = vor.u32 %v2768, %v2769
    %v2771 = vshll.u32 2131351028, %v2762
    %v2772 = vshrl.u32 2102212464, %v2763
    %v2773 = vor.u32 %v2771, %v2772
    %v2774 = vshll.u32 2102212464, %v2762
    %v2775 = vshrl.u32 920167782, %v2763
    %v2776 = vor.u32 %v2774, %v2775
    %v2777 = vshll.u32 920167782, %v2762
    %v2778 = vshrl.u32 1326507024, %v2763
    %v2779 = vor.u32 %v2777, %v2778
    %vm2780 = vcmp.lt.s32.totalorder %v2761, 1
    %vm2781 = vcmp.lt.s32.totalorder %v2761, 2
    %vm2782 = vcmp.lt.s32.totalorder %v2761, 3
    %vm2783 = vcmp.lt.s32.totalorder %v2761, 4
    %v2784 = vsel %vm2780, %v2764, %v2767
    %v2785 = vsel %vm2783, %v2773, 2102212464
    %v2786 = vsel %vm2782, %v2770, %v2785
    %v2787 = vsel %vm2781, %v2784, %v2786
    %v2788 = vsel %vm2780, %v2767, %v2770
    %v2789 = vsel %vm2783, %v2776, 920167782
    %v2790 = vsel %vm2782, %v2773, %v2789
    %v2791 = vsel %vm2781, %v2788, %v2790
    %v2792 = vsel %vm2780, %v2770, %v2773
    %v2793 = vsel %vm2783, %v2779, 1326507024
    %v2794 = vsel %vm2782, %v2776, %v2793
    %v2795 = vsel %vm2781, %v2792, %v2794
    %v2796 = vshll.u32 %v2756, 8
    %v2797 = vand.u32 %v2796, 65535
    %v2798 = vshrl.u32 %v2796, 16
    %v2799 = vand.u32 %v2795, 65535
    %v2800 = vshrl.u32 %v2795, 16
    %v2801 = vmul.u32 %v2797, %v2799
    %v2802 = vmul.u32 %v2797, %v2800
    %v2803 = vmul.u32 %v2798, %v2799
    %v2804 = vmul.u32 %v2798, %v2800
    %v2805 = vshll.u32 %v2802, 16
    %v2806 = vshrl.u32 %v2802, 16
    %v2807 = vshll.u32 %v2803, 16
    %v2808 = vshrl.u32 %v2803, 16
    %vm2809 = vc.u32 %v2801, %v2805
    %v2810 = vsel %vm2809, 1, 0
    %v2811 = vadd.s32 %v2801, %v2805
    %v2812 = vadd.s32 %v2804, %v2810
    %vm2813 = vc.u32 %v2811, %v2807
    %v2814 = vsel %vm2813, 1, 0
    %v2815 = vadd.s32 %v2811, %v2807
    %v2816 = vadd.s32 %v2812, %v2814
    %v2817 = vadd.s32 %v2816, %v2806
    %v2818 = vadd.s32 %v2817, %v2808
    %v2819 = vand.u32 %v2796, 65535
    %v2820 = vshrl.u32 %v2796, 16
    %v2821 = vand.u32 %v2791, 65535
    %v2822 = vshrl.u32 %v2791, 16
    %v2823 = vmul.u32 %v2819, %v2821
    %v2824 = vmul.u32 %v2819, %v2822
    %v2825 = vmul.u32 %v2820, %v2821
    %v2826 = vmul.u32 %v2820, %v2822
    %v2827 = vshll.u32 %v2824, 16
    %v2828 = vshrl.u32 %v2824, 16
    %v2829 = vshll.u32 %v2825, 16
    %v2830 = vshrl.u32 %v2825, 16
    %vm2831 = vc.u32 %v2823, %v2827
    %v2832 = vsel %vm2831, 1, 0
    %v2833 = vadd.s32 %v2823, %v2827
    %v2834 = vadd.s32 %v2826, %v2832
    %vm2835 = vc.u32 %v2833, %v2829
    %v2836 = vsel %vm2835, 1, 0
    %v2837 = vadd.s32 %v2833, %v2829
    %v2838 = vadd.s32 %v2834, %v2836
    %v2839 = vadd.s32 %v2838, %v2828
    %v2840 = vadd.s32 %v2839, %v2830
    %v2841 = vmul.u32 %v2796, %v2787
    %v2842 = vadd.s32 %v2818, %v2837
    %vm2843 = vc.u32 %v2818, %v2837
    %v2844 = vadd.s32 %v2840, 1
    %v2845 = vsel %vm2843, %v2844, %v2840
    %v2846 = vadd.s32 %v2841, %v2845
    %v2847 = vadd.s32 %v2846, 536870912
    %v2848 = vshrl.u32 %v2847, 30
    %v2849 = vshll.u32 %v2848, 30
    %v2850 = vsub.s32 %v2846, %v2849
    %vm2851 = vcmp.lt.s32.totalorder %v2850, 0
    %v2852 = vsub.s32 0, %v2850
    %v2853 = vsel %vm2851, %v2852, %v2850
    %v2854 = vclz %v2853
    %v2855 = vsub.s32 %v2854, 2
    %vm2856 = vcmp.gt.s32.totalorder 0, %v2855
    %v2857 = vsel %vm2856, 0, %v2855
    %v2858 = vsub.s32 32, %v2857
    %v2859 = vshll.u32 %v2850, %v2857
    %v2860 = vshrl.u32 %v2842, %v2858
    %v2861 = vor.u32 %v2859, %v2860
    %v2862 = vsub.s32 4294967266, %v2857
    %v2863 = vadd.s32 %v2862, 127
    %v2864 = vshll.u32 %v2863, 23
    %v2865 = vor.u32 4788187, %v2864
    %v2866 = vand.u32 2147483647, %v2865
    %v2868 = vcvt.s32.f32 %v2861
    %v2869 = vmul.f32 %v2868, %v2866
    %v2870 = vxor.u32 %v2869, 2147483648
    %v2871 = vsel %vm2750, %v2870, %v2869
    %v2872 = vsub.s32 4, %v2848
    %v2873 = vsel %vm2750, %v2872, %v2848
    %v2874 = vsel %vm2749, %v2593, %v2871
    %v2875 = vsel %vm2749, 0, %v2873
    %v2876 = vmul.f32 %v2874, %v2874
    %v2877 = vmul.f32 %v2876, -0.001358992
    %v2878 = vadd.f32 %v2877, 0.041655596
    %v2879 = vmul.f32 %v2876, %v2878
    %v2880 = vadd.f32 %v2879, -0.4999988
    %v2881 = vmul.f32 %v2876, %v2880
    %v2882 = vadd.f32 1.0, %v2881
    %v2883 = vmul.f32 %v2874, %v2874
    %v2884 = vmul.f32 %v2883, -0.00019511016
    %v2885 = vadd.f32 %v2884, 0.008332121
    %v2886 = vmul.f32 %v2883, %v2885
    %v2887 = vadd.f32 %v2886, -0.16666654
    %v2888 = vmul.f32 %v2883, %v2887
    %v2889 = vadd.f32 %v2888, 1.0
    %v2890 = vmul.f32 %v2889, %v2874
    %vm2891 = vweird.f32 %v2593
    %v2892 = vand.u32 %v2875, 3
    %vm2893 = vcmp.lt.s32.totalorder %v2892, 2
    %vm2894 = vcmp.eq.s32.totalorder %v2892, 0
    %v2895 = vxor.u32 %v2890, 2147483648
    %v2896 = vsel %vm2894, %v2882, %v2895
    %vm2897 = vcmp.eq.s32.totalorder %v2892, 2
    %v2898 = vxor.u32 %v2882, 2147483648
    %v2899 = vsel %vm2897, %v2898, %v2890
    %v2900 = vsel %vm2893, %v2896, %v2899
    %v2901 = vsel %vm2891, nan, %v2900
    %v2902 = vand.u32 2147483647, %v2592
    %vm2903 = vcmp.le.f32.partialorder %v2902, 0.7853982
    %vm2904 = vcmp.lt.s32.totalorder %v2592, 0
    %v2905 = vand.u32 %v2592, 2139095040
    %v2906 = vshrl.u32 %v2905, 23
    %v2907 = vsub.s32 %v2906, 127
    %v2908 = vand.u32 2147483647, %v2592
    %v2909 = vand.u32 %v2908, 8388607
    %v2910 = vor.u32 %v2909, 8388608
    %v2911 = vsub.s32 0, %v2910
    %v2912 = vadd.s32 %v2907, 1
    %vm2913 = vcmp.gt.s32.totalorder %v2912, 0
    %v2914 = vsel %vm2913, %v2912, 0
    %v2915 = vshrl.u32 %v2914, 5
    %v2916 = vand.u32 %v2914, 31
    %v2917 = vsub.s32 32, %v2916
    %v2918 = vshrl.u32 683565275, %v2917
    %v2919 = vshll.u32 683565275, %v2916
    %v2920 = vshrl.u32 2475754826, %v2917
    %v2921 = vor.u32 %v2919, %v2920
    %v2922 = vshll.u32 2475754826, %v2916
    %v2923 = vshrl.u32 2131351028, %v2917
    %v2924 = vor.u32 %v2922, %v2923
    %v2925 = vshll.u32 2131351028, %v2916
    %v2926 = vshrl.u32 2102212464, %v2917
    %v2927 = vor.u32 %v2925, %v2926
    %v2928 = vshll.u32 2102212464, %v2916
    %v2929 = vshrl.u32 920167782, %v2917
    %v2930 = vor.u32 %v2928, %v2929
    %v2931 = vshll.u32 920167782, %v2916
    %v2932 = vshrl.u32 1326507024, %v2917
    %v2933 = vor.u32 %v2931, %v2932
    %vm2934 = vcmp.lt.s32.totalorder %v2915, 1
    %vm2935 = vcmp.lt.s32.totalorder %v2915, 2
    %vm2936 = vcmp.lt.s32.totalorder %v2915, 3
    %vm2937 = vcmp.lt.s32.totalorder %v2915, 4
    %v2938 = vsel %vm2934, %v2918, %v2921
    %v2939 = vsel %vm2937, %v2927, 2102212464
    %v2940 = vsel %vm2936, %v2924, %v2939
    %v2941 = vsel %vm2935, %v2938, %v2940
    %v2942 = vsel %vm2934, %v2921, %v2924
    %v2943 = vsel %vm2937, %v2930, 920167782
    %v2944 = vsel %vm2936, %v2927, %v2943
    %v2945 = vsel %vm2935, %v2942, %v2944
    %v2946 = vsel %vm2934, %v2924, %v2927
    %v2947 = vsel %vm2937, %v2933, 1326507024
    %v2948 = vsel %vm2936, %v2930, %v2947
    %v2949 = vsel %vm2935, %v2946, %v2948
    %v2950 = vshll.u32 %v2910, 8
    %v2951 = vand.u32 %v2950, 65535
    %v2952 = vshrl.u32 %v2950, 16
    %v2953 = vand.u32 %v2949, 65535
    %v2954 = vshrl.u32 %v2949, 16
    %v2955 = vmul.u32 %v2951, %v2953
    %v2956 = vmul.u32 %v2951, %v2954
    %v2957 = vmul.u32 %v2952, %v2953
    %v2958 = vmul.u32 %v2952, %v2954
    %v2959 = vshll.u32 %v2956, 16
    %v2960 = vshrl.u32 %v2956, 16
    %v2961 = vshll.u32 %v2957, 16
    %v2962 = vshrl.u32 %v2957, 16
    %vm2963 = vc.u32 %v2955, %v2959
    %v2964 = vsel %vm2963, 1, 0
    %v2965 = vadd.s32 %v2955, %v2959
    %v2966 = vadd.s32 %v2958, %v2964
    %vm2967 = vc.u32 %v2965, %v2961
    %v2968 = vsel %vm2967, 1, 0
    %v2969 = vadd.s32 %v2965, %v2961
    %v2970 = vadd.s32 %v2966, %v2968
    %v2971 = vadd.s32 %v2970, %v2960
    %v2972 = vadd.s32 %v2971, %v2962
    %v2973 = vand.u32 %v2950, 65535
    %v2974 = vshrl.u32 %v2950, 16
    %v2975 = vand.u32 %v2945, 65535
    %v2976 = vshrl.u32 %v2945, 16
    %v2977 = vmul.u32 %v2973, %v2975
    %v2978 = vmul.u32 %v2973, %v2976
    %v2979 = vmul.u32 %v2974, %v2975
    %v2980 = vmul.u32 %v2974, %v2976
    %v2981 = vshll.u32 %v2978, 16
    %v2982 = vshrl.u32 %v2978, 16
    %v2983 = vshll.u32 %v2979, 16
    %v2984 = vshrl.u32 %v2979, 16
    %vm2985 = vc.u32 %v2977, %v2981
    %v2986 = vsel %vm2985, 1, 0
    %v2987 = vadd.s32 %v2977, %v2981
    %v2988 = vadd.s32 %v2980, %v2986
    %vm2989 = vc.u32 %v2987, %v2983
    %v2990 = vsel %vm2989, 1, 0
    %v2991 = vadd.s32 %v2987, %v2983
    %v2992 = vadd.s32 %v2988, %v2990
    %v2993 = vadd.s32 %v2992, %v2982
    %v2994 = vadd.s32 %v2993, %v2984
    %v2995 = vmul.u32 %v2950, %v2941
    %v2996 = vadd.s32 %v2972, %v2991
    %vm2997 = vc.u32 %v2972, %v2991
    %v2998 = vadd.s32 %v2994, 1
    %v2999 = vsel %vm2997, %v2998, %v2994
    %v3000 = vadd.s32 %v2995, %v2999
    %v3001 = vadd.s32 %v3000, 536870912
    %v3002 = vshrl.u32 %v3001, 30
    %v3003 = vshll.u32 %v3002, 30
    %v3004 = vsub.s32 %v3000, %v3003
    %vm3005 = vcmp.lt.s32.totalorder %v3004, 0
    %v3006 = vsub.s32 0, %v3004
    %v3007 = vsel %vm3005, %v3006, %v3004
    %v3008 = vclz %v3007
    %v3009 = vsub.s32 %v3008, 2
    %vm3010 = vcmp.gt.s32.totalorder 0, %v3009
    %v3011 = vsel %vm3010, 0, %v3009
    %v3012 = vsub.s32 32, %v3011
    %v3013 = vshll.u32 %v3004, %v3011
    %v3014 = vshrl.u32 %v2996, %v3012
    %v3015 = vor.u32 %v3013, %v3014
    %v3016 = vsub.s32 4294967266, %v3011
    %v3017 = vadd.s32 %v3016, 127
    %v3018 = vshll.u32 %v3017, 23
    %v3019 = vor.u32 4788187, %v3018
    %v3020 = vand.u32 2147483647, %v3019
    %v3022 = vcvt.s32.f32 %v3015
    %v3023 = vmul.f32 %v3022, %v3020
    %v3024 = vxor.u32 %v3023, 2147483648
    %v3025 = vsel %vm2904, %v3024, %v3023
    %v3026 = vsub.s32 4, %v3002
    %v3027 = vsel %vm2904, %v3026, %v3002
    %v3028 = vsel %vm2903, %v2592, %v3025
    %v3029 = vsel %vm2903, 0, %v3027
    %v3030 = vmul.f32 %v3028, %v3028
    %v3031 = vmul.f32 %v3030, -0.001358992
    %v3032 = vadd.f32 %v3031, 0.041655596
    %v3033 = vmul.f32 %v3030, %v3032
    %v3034 = vadd.f32 %v3033, -0.4999988
    %v3035 = vmul.f32 %v3030, %v3034
    %v3036 = vadd.f32 1.0, %v3035
    %v3037 = vmul.f32 %v3028, %v3028
    %v3038 = vmul.f32 %v3037, -0.00019511016
    %v3039 = vadd.f32 %v3038, 0.008332121
    %v3040 = vmul.f32 %v3037, %v3039
    %v3041 = vadd.f32 %v3040, -0.16666654
    %v3042 = vmul.f32 %v3037, %v3041
    %v3043 = vadd.f32 %v3042, 1.0
    %v3044 = vmul.f32 %v3043, %v3028
    %vm3045 = vweird.f32 %v2592
    %v3046 = vadd.s32 %v3029, 3
    %v3047 = vand.u32 %v3046, 3
    %vm3048 = vcmp.lt.s32.totalorder %v3047, 2
    %vm3049 = vcmp.eq.s32.totalorder %v3047, 0
    %v3050 = vxor.u32 %v3044, 2147483648
    %v3051 = vsel %vm3049, %v3036, %v3050
    %vm3052 = vcmp.eq.s32.totalorder %v3047, 2
    %v3053 = vxor.u32 %v3036, 2147483648
    %v3054 = vsel %vm3052, %v3053, %v3044
    %v3055 = vsel %vm3048, %v3051, %v3054
    %v3056 = vsel %vm3045, nan, %v3055
    %v3057 = vand.u32 2147483647, %v2593
    %vm3058 = vcmp.le.f32.partialorder %v3057, 0.7853982
    %vm3059 = vcmp.lt.s32.totalorder %v2593, 0
    %v3060 = vand.u32 %v2593, 2139095040
    %v3061 = vshrl.u32 %v3060, 23
    %v3062 = vsub.s32 %v3061, 127
    %v3063 = vand.u32 2147483647, %v2593
    %v3064 = vand.u32 %v3063, 8388607
    %v3065 = vor.u32 %v3064, 8388608
    %v3066 = vsub.s32 0, %v3065
    %v3067 = vadd.s32 %v3062, 1
    %vm3068 = vcmp.gt.s32.totalorder %v3067, 0
    %v3069 = vsel %vm3068, %v3067, 0
    %v3070 = vshrl.u32 %v3069, 5
    %v3071 = vand.u32 %v3069, 31
    %v3072 = vsub.s32 32, %v3071
    %v3073 = vshrl.u32 683565275, %v3072
    %v3074 = vshll.u32 683565275, %v3071
    %v3075 = vshrl.u32 2475754826, %v3072
    %v3076 = vor.u32 %v3074, %v3075
    %v3077 = vshll.u32 2475754826, %v3071
    %v3078 = vshrl.u32 2131351028, %v3072
    %v3079 = vor.u32 %v3077, %v3078
    %v3080 = vshll.u32 2131351028, %v3071
    %v3081 = vshrl.u32 2102212464, %v3072
    %v3082 = vor.u32 %v3080, %v3081
    %v3083 = vshll.u32 2102212464, %v3071
    %v3084 = vshrl.u32 920167782, %v3072
    %v3085 = vor.u32 %v3083, %v3084
    %v3086 = vshll.u32 920167782, %v3071
    %v3087 = vshrl.u32 1326507024, %v3072
    %v3088 = vor.u32 %v3086, %v3087
    %vm3089 = vcmp.lt.s32.totalorder %v3070, 1
    %vm3090 = vcmp.lt.s32.totalorder %v3070, 2
    %vm3091 = vcmp.lt.s32.totalorder %v3070, 3
    %vm3092 = vcmp.lt.s32.totalorder %v3070, 4
    %v3093 = vsel %vm3089, %v3073, %v3076
    %v3094 = vsel %vm3092, %v3082, 2102212464
    %v3095 = vsel %vm3091, %v3079, %v3094
    %v3096 = vsel %vm3090, %v3093, %v3095
    %v3097 = vsel %vm3089, %v3076, %v3079
    %v3098 = vsel %vm3092, %v3085, 920167782
    %v3099 = vsel %vm3091, %v3082, %v3098
    %v3100 = vsel %vm3090, %v3097, %v3099
    %v3101 = vsel %vm3089, %v3079, %v3082
    %v3102 = vsel %vm3092, %v3088, 1326507024
    %v3103 = vsel %vm3091, %v3085, %v3102
    %v3104 = vsel %vm3090, %v3101, %v3103
    %v3105 = vshll.u32 %v3065, 8
    %v3106 = vand.u32 %v3105, 65535
    %v3107 = vshrl.u32 %v3105, 16
    %v3108 = vand.u32 %v3104, 65535
    %v3109 = vshrl.u32 %v3104, 16
    %v3110 = vmul.u32 %v3106, %v3108
    %v3111 = vmul.u32 %v3106, %v3109
    %v3112 = vmul.u32 %v3107, %v3108
    %v3113 = vmul.u32 %v3107, %v3109
    %v3114 = vshll.u32 %v3111, 16
    %v3115 = vshrl.u32 %v3111, 16
    %v3116 = vshll.u32 %v3112, 16
    %v3117 = vshrl.u32 %v3112, 16
    %vm3118 = vc.u32 %v3110, %v3114
    %v3119 = vsel %vm3118, 1, 0
    %v3120 = vadd.s32 %v3110, %v3114
    %v3121 = vadd.s32 %v3113, %v3119
    %vm3122 = vc.u32 %v3120, %v3116
    %v3123 = vsel %vm3122, 1, 0
    %v3124 = vadd.s32 %v3120, %v3116
    %v3125 = vadd.s32 %v3121, %v3123
    %v3126 = vadd.s32 %v3125, %v3115
    %v3127 = vadd.s32 %v3126, %v3117
    %v3128 = vand.u32 %v3105, 65535
    %v3129 = vshrl.u32 %v3105, 16
    %v3130 = vand.u32 %v3100, 65535
    %v3131 = vshrl.u32 %v3100, 16
    %v3132 = vmul.u32 %v3128, %v3130
    %v3133 = vmul.u32 %v3128, %v3131
    %v3134 = vmul.u32 %v3129, %v3130
    %v3135 = vmul.u32 %v3129, %v3131
    %v3136 = vshll.u32 %v3133, 16
    %v3137 = vshrl.u32 %v3133, 16
    %v3138 = vshll.u32 %v3134, 16
    %v3139 = vshrl.u32 %v3134, 16
    %vm3140 = vc.u32 %v3132, %v3136
    %v3141 = vsel %vm3140, 1, 0
    %v3142 = vadd.s32 %v3132, %v3136
    %v3143 = vadd.s32 %v3135, %v3141
    %vm3144 = vc.u32 %v3142, %v3138
    %v3145 = vsel %vm3144, 1, 0
    %v3146 = vadd.s32 %v3142, %v3138
    %v3147 = vadd.s32 %v3143, %v3145
    %v3148 = vadd.s32 %v3147, %v3137
    %v3149 = vadd.s32 %v3148, %v3139
    %v3150 = vmul.u32 %v3105, %v3096
    %v3151 = vadd.s32 %v3127, %v3146
    %vm3152 = vc.u32 %v3127, %v3146
    %v3153 = vadd.s32 %v3149, 1
    %v3154 = vsel %vm3152, %v3153, %v3149
    %v3155 = vadd.s32 %v3150, %v3154
    %v3156 = vadd.s32 %v3155, 536870912
    %v3157 = vshrl.u32 %v3156, 30
    %v3158 = vshll.u32 %v3157, 30
    %v3159 = vsub.s32 %v3155, %v3158
    %vm3160 = vcmp.lt.s32.totalorder %v3159, 0
    %v3161 = vsub.s32 0, %v3159
    %v3162 = vsel %vm3160, %v3161, %v3159
    %v3163 = vclz %v3162
    %v3164 = vsub.s32 %v3163, 2
    %vm3165 = vcmp.gt.s32.totalorder 0, %v3164
    %v3166 = vsel %vm3165, 0, %v3164
    %v3167 = vsub.s32 32, %v3166
    %v3168 = vshll.u32 %v3159, %v3166
    %v3169 = vshrl.u32 %v3151, %v3167
    %v3170 = vor.u32 %v3168, %v3169
    %v3171 = vsub.s32 4294967266, %v3166
    %v3172 = vadd.s32 %v3171, 127
    %v3173 = vshll.u32 %v3172, 23
    %v3174 = vor.u32 4788187, %v3173
    %v3175 = vand.u32 2147483647, %v3174
    %v3177 = vcvt.s32.f32 %v3170
    %v3178 = vmul.f32 %v3177, %v3175
    %v3179 = vxor.u32 %v3178, 2147483648
    %v3180 = vsel %vm3059, %v3179, %v3178
    %v3181 = vsub.s32 4, %v3157
    %v3182 = vsel %vm3059, %v3181, %v3157
    %v3183 = vsel %vm3058, %v2593, %v3180
    %v3184 = vsel %vm3058, 0, %v3182
    %v3185 = vmul.f32 %v3183, %v3183
    %v3186 = vmul.f32 %v3185, -0.001358992
    %v3187 = vadd.f32 %v3186, 0.041655596
    %v3188 = vmul.f32 %v3185, %v3187
    %v3189 = vadd.f32 %v3188, -0.4999988
    %v3190 = vmul.f32 %v3185, %v3189
    %v3191 = vadd.f32 1.0, %v3190
    %v3192 = vmul.f32 %v3183, %v3183
    %v3193 = vmul.f32 %v3192, -0.00019511016
    %v3194 = vadd.f32 %v3193, 0.008332121
    %v3195 = vmul.f32 %v3192, %v3194
    %v3196 = vadd.f32 %v3195, -0.16666654
    %v3197 = vmul.f32 %v3192, %v3196
    %v3198 = vadd.f32 %v3197, 1.0
    %v3199 = vmul.f32 %v3198, %v3183
    %vm3200 = vweird.f32 %v2593
    %v3201 = vadd.s32 %v3184, 3
    %v3202 = vand.u32 %v3201, 3
    %vm3203 = vcmp.lt.s32.totalorder %v3202, 2
    %vm3204 = vcmp.eq.s32.totalorder %v3202, 0
    %v3205 = vxor.u32 %v3199, 2147483648
    %v3206 = vsel %vm3204, %v3191, %v3205
    %vm3207 = vcmp.eq.s32.totalorder %v3202, 2
    %v3208 = vxor.u32 %v3191, 2147483648
    %v3209 = vsel %vm3207, %v3208, %v3199
    %v3210 = vsel %vm3203, %v3206, %v3209
    %v3211 = vsel %vm3200, nan, %v3210
    %v3212 = vmul.f32 %v2589, %v2589
    %v3213 = vmul.f32 %v2591, %v2591
    %v3214 = vadd.f32 %v3212, 1.0
    %v3215 = vadd.f32 %v3213, 1.0
    %v3216 = vmul.f32 %v2589, 2.0
    %v3217 = vmul.f32 %v2591, 2.0
    %v3218 = vmul.f32 %v3216, %v2747
    %v3219 = vmul.f32 %v3217, %v2901
    %v3220 = vadd.f32 %v3214, %v3218
    %v3221 = vadd.f32 %v3215, %v3219
    %v3222 = vrcp.pop %v3220
    %v3223 = vrcp.pop %v3221
    %vm3224 = vcmp.ge.f32.partialorder %v2490, 0.0
    %vm3225 = vcmp.ge.f32.partialorder %v2491, 0.0
    %v3226 = vsel %vm3224, 1.0, -1.0
    %v3227 = vsel %vm3225, 1.0, -1.0
    %v3228 = vsub.f32 1.0, %v3212
    %v3229 = vsub.f32 1.0, %v3213
    %v3230 = vmul.f32 %v3226, %v3228
    %v3231 = vmul.f32 %v3227, %v3229
    %v3232 = vmul.f32 %v3230, %v3222
    %v3233 = vmul.f32 %v3231, %v3223
    %v3234 = vmul.f32 %v3216, %v3056
    %v3235 = vmul.f32 %v3217, %v3211
    %v3236 = vmul.f32 %v3234, %v3222
    %v3237 = vmul.f32 %v3235, %v3223
    %v3239 = vsel %vm352, %v3232, 0
    %v3241 = vsel %vm352, %v2238, 0
    %3243 = vmatpush.xpose.msra.mxu0 0.0
    %3244 = vmatpush.xpose.msra.mxu0 0.0
    %3245 = vmatpush.xpose.msra.mxu0 0.0
    %3246 = vmatpush.xpose.msra.mxu0 0.0
    %3247 = vmatpush.xpose.msra.mxu0 0.0
    %3248 = vmatpush.xpose.msra.mxu0 0.0
    %3249 = vmatpush.xpose.msra.mxu0 0.0
    %3250 = vmatpush.xpose.msra.mxu0 0.0
    %3251 = vmatpush.xpose.msra.mxu0 0.0
    %3252 = vmatpush.xpose.msra.mxu0 0.0
    %3253 = vmatpush.xpose.msra.mxu0 0.0
    %3254 = vmatpush.xpose.msra.mxu0 0.0
    %3255 = vmatpush.xpose.msra.mxu0 0.0
    %3256 = vmatpush.xpose.msra.mxu0 0.0
    %3257 = vmatpush.xpose.msra.mxu0 0.0
    %3258 = vmatpush.xpose.msra.mxu0 %v3241
    %3259 = vmatmul.f32.gmra.mxu0 %v3239
    %v3260 = vpop.f32.mrf.mxu0
    %v3261 = vadd.f32 0.0, %v3260
    %3262 = vdwg.mxu0
    %v3264 = vsel %vm352, %v3233, 0
    %v3266 = vsel %vm352, %v2242, 0
    %3268 = vmatpush.xpose.msra.mxu0 0.0
    %3269 = vmatpush.xpose.msra.mxu0 0.0
    %3270 = vmatpush.xpose.msra.mxu0 0.0
    %3271 = vmatpush.xpose.msra.mxu0 0.0
    %3272 = vmatpush.xpose.msra.mxu0 0.0
    %3273 = vmatpush.xpose.msra.mxu0 0.0
    %3274 = vmatpush.xpose.msra.mxu0 0.0
    %3275 = vmatpush.xpose.msra.mxu0 0.0
    %3276 = vmatpush.xpose.msra.mxu0 0.0
    %3277 = vmatpush.xpose.msra.mxu0 0.0
    %3278 = vmatpush.xpose.msra.mxu0 0.0
    %3279 = vmatpush.xpose.msra.mxu0 0.0
    %3280 = vmatpush.xpose.msra.mxu0 0.0
    %3281 = vmatpush.xpose.msra.mxu0 0.0
    %3282 = vmatpush.xpose.msra.mxu0 0.0
    %3283 = vmatpush.xpose.msra.mxu0 %v3266
    %3284 = vmatmul.f32.gmra.mxu0 %v3264
    %v3285 = vpop.f32.mrf.mxu0
    %v3286 = vadd.f32 0.0, %v3285
    %3287 = vdwg.mxu0
    %3288 = vst [vmem:[#allocation1] ss:$2 sm:$0xff] %v2238
    %v3289 = vld.sshfl [vmem:[#allocation1] sm:$0xff pattern:$0x75316420]
    %3290 = vrot.lane.b32.xlu0 %v3289, 124
    %v3291 = vpop.permute.xlu0 %3290
    %v3293 = vsel %vm352, %v3236, 0
    %v3295 = vsel %vm352, %v3291, 0
    %3297 = vmatpush.xpose.msra.mxu0 0.0
    %3298 = vmatpush.xpose.msra.mxu0 0.0
    %3299 = vmatpush.xpose.msra.mxu0 0.0
    %3300 = vmatpush.xpose.msra.mxu0 0.0
    %3301 = vmatpush.xpose.msra.mxu0 0.0
    %3302 = vmatpush.xpose.msra.mxu0 0.0
    %3303 = vmatpush.xpose.msra.mxu0 0.0
    %3304 = vmatpush.xpose.msra.mxu0 0.0
    %3305 = vmatpush.xpose.msra.mxu0 0.0
    %3306 = vmatpush.xpose.msra.mxu0 0.0
    %3307 = vmatpush.xpose.msra.mxu0 0.0
    %3308 = vmatpush.xpose.msra.mxu0 0.0
    %3309 = vmatpush.xpose.msra.mxu0 0.0
    %3310 = vmatpush.xpose.msra.mxu0 0.0
    %3311 = vmatpush.xpose.msra.mxu0 0.0
    %3312 = vmatpush.xpose.msra.mxu0 %v3295
    %3313 = vmatmul.f32.gmra.mxu0 %v3293
    %v3314 = vpop.f32.mrf.mxu0
    %v3315 = vadd.f32 0.0, %v3314
    %3316 = vdwg.mxu0
    %3317 = vst [vmem:[#allocation1] ss:$2 sm:$0xff] %v2242
    %v3318 = vld.sshfl [vmem:[#allocation1] sm:$0xff pattern:$0x75316420]
    %3319 = vrot.lane.b32.xlu0 %v3318, 124
    %v3320 = vpop.permute.xlu0 %3319
    %v3322 = vsel %vm352, %v3237, 0
    %v3324 = vsel %vm352, %v3320, 0
    %3326 = vmatpush.xpose.msra.mxu0 0.0
    %3327 = vmatpush.xpose.msra.mxu0 0.0
    %3328 = vmatpush.xpose.msra.mxu0 0.0
    %3329 = vmatpush.xpose.msra.mxu0 0.0
    %3330 = vmatpush.xpose.msra.mxu0 0.0
    %3331 = vmatpush.xpose.msra.mxu0 0.0
    %3332 = vmatpush.xpose.msra.mxu0 0.0
    %3333 = vmatpush.xpose.msra.mxu0 0.0
    %3334 = vmatpush.xpose.msra.mxu0 0.0
    %3335 = vmatpush.xpose.msra.mxu0 0.0
    %3336 = vmatpush.xpose.msra.mxu0 0.0
    %3337 = vmatpush.xpose.msra.mxu0 0.0
    %3338 = vmatpush.xpose.msra.mxu0 0.0
    %3339 = vmatpush.xpose.msra.mxu0 0.0
    %3340 = vmatpush.xpose.msra.mxu0 0.0
    %3341 = vmatpush.xpose.msra.mxu0 %v3324
    %3342 = vmatmul.f32.gmra.mxu0 %v3322
    %v3343 = vpop.f32.mrf.mxu0
    %v3344 = vadd.f32 0.0, %v3343
    %3345 = vdwg.mxu0
    %v3346 = vsub.f32 %v3261, %v3315
    %v3347 = vsub.f32 %v3286, %v3344
    %3348 = vmatpush.xpose.msra.mxu0 0.0
    %3349 = vmatpush.xpose.msra.mxu0 0.0
    %3350 = vmatpush.xpose.msra.mxu0 0.0
    %3351 = vmatpush.xpose.msra.mxu0 0.0
    %3352 = vmatpush.xpose.msra.mxu0 0.0
    %3353 = vmatpush.xpose.msra.mxu0 0.0
    %3354 = vmatpush.xpose.msra.mxu0 0.0
    %3355 = vmatpush.xpose.msra.mxu0 0.0
    %3356 = vmatpush.xpose.msra.mxu0 0.0
    %3357 = vmatpush.xpose.msra.mxu0 0.0
    %3358 = vmatpush.xpose.msra.mxu0 0.0
    %3359 = vmatpush.xpose.msra.mxu0 0.0
    %3360 = vmatpush.xpose.msra.mxu0 0.0
    %3361 = vmatpush.xpose.msra.mxu0 0.0
    %3362 = vmatpush.xpose.msra.mxu0 0.0
    %3363 = vmatpush.xpose.msra.mxu0 %v3241
    %3364 = vmatmul.f32.gmra.mxu0 %v3293
    %v3365 = vpop.f32.mrf.mxu0
    %v3366 = vadd.f32 0.0, %v3365
    %3367 = vdwg.mxu0
    %3368 = vmatpush.xpose.msra.mxu0 0.0
    %3369 = vmatpush.xpose.msra.mxu0 0.0
    %3370 = vmatpush.xpose.msra.mxu0 0.0
    %3371 = vmatpush.xpose.msra.mxu0 0.0
    %3372 = vmatpush.xpose.msra.mxu0 0.0
    %3373 = vmatpush.xpose.msra.mxu0 0.0
    %3374 = vmatpush.xpose.msra.mxu0 0.0
    %3375 = vmatpush.xpose.msra.mxu0 0.0
    %3376 = vmatpush.xpose.msra.mxu0 0.0
    %3377 = vmatpush.xpose.msra.mxu0 0.0
    %3378 = vmatpush.xpose.msra.mxu0 0.0
    %3379 = vmatpush.xpose.msra.mxu0 0.0
    %3380 = vmatpush.xpose.msra.mxu0 0.0
    %3381 = vmatpush.xpose.msra.mxu0 0.0
    %3382 = vmatpush.xpose.msra.mxu0 0.0
    %3383 = vmatpush.xpose.msra.mxu0 %v3266
    %3384 = vmatmul.f32.gmra.mxu0 %v3322
    %v3385 = vpop.f32.mrf.mxu0
    %v3386 = vadd.f32 0.0, %v3385
    %3387 = vdwg.mxu0
    %3388 = vst [vmem:[#allocation1] ss:$2 sm:$0xff] %v2238
    %v3389 = vld.sshfl [vmem:[#allocation1] sm:$0xff pattern:$0x75316420]
    %3390 = vrot.lane.b32.xlu0 %v3389, 124
    %v3391 = vpop.permute.xlu0 %3390
    %v3392 = vsel %vm352, %v3391, 0
    %3394 = vmatpush.xpose.msra.mxu0 0.0
    %3395 = vmatpush.xpose.msra.mxu0 0.0
    %3396 = vmatpush.xpose.msra.mxu0 0.0
    %3397 = vmatpush.xpose.msra.mxu0 0.0
    %3398 = vmatpush.xpose.msra.mxu0 0.0
    %3399 = vmatpush.xpose.msra.mxu0 0.0
    %3400 = vmatpush.xpose.msra.mxu0 0.0
    %3401 = vmatpush.xpose.msra.mxu0 0.0
    %3402 = vmatpush.xpose.msra.mxu0 0.0
    %3403 = vmatpush.xpose.msra.mxu0 0.0
    %3404 = vmatpush.xpose.msra.mxu0 0.0
    %3405 = vmatpush.xpose.msra.mxu0 0.0
    %3406 = vmatpush.xpose.msra.mxu0 0.0
    %3407 = vmatpush.xpose.msra.mxu0 0.0
    %3408 = vmatpush.xpose.msra.mxu0 0.0
    %3409 = vmatpush.xpose.msra.mxu0 %v3392
    %3410 = vmatmul.f32.gmra.mxu0 %v3239
    %v3411 = vpop.f32.mrf.mxu0
    %v3412 = vadd.f32 %v3366, %v3411
    %3413 = vdwg.mxu0
    %3414 = vst [vmem:[#allocation1] ss:$2 sm:$0xff] %v2242
    %v3415 = vld.sshfl [vmem:[#allocation1] sm:$0xff pattern:$0x75316420]
    %3416 = vrot.lane.b32.xlu0 %v3415, 124
    %v3417 = vpop.permute.xlu0 %3416
    %v3418 = vsel %vm352, %v3417, 0
    %3420 = vmatpush.xpose.msra.mxu0 0.0
    %3421 = vmatpush.xpose.msra.mxu0 0.0
    %3422 = vmatpush.xpose.msra.mxu0 0.0
    %3423 = vmatpush.xpose.msra.mxu0 0.0
    %3424 = vmatpush.xpose.msra.mxu0 0.0
    %3425 = vmatpush.xpose.msra.mxu0 0.0
    %3426 = vmatpush.xpose.msra.mxu0 0.0
    %3427 = vmatpush.xpose.msra.mxu0 0.0
    %3428 = vmatpush.xpose.msra.mxu0 0.0
    %3429 = vmatpush.xpose.msra.mxu0 0.0
    %3430 = vmatpush.xpose.msra.mxu0 0.0
    %3431 = vmatpush.xpose.msra.mxu0 0.0
    %3432 = vmatpush.xpose.msra.mxu0 0.0
    %3433 = vmatpush.xpose.msra.mxu0 0.0
    %3434 = vmatpush.xpose.msra.mxu0 0.0
    %3435 = vmatpush.xpose.msra.mxu0 %v3418
    %3436 = vmatmul.f32.gmra.mxu0 %v3264
    %v3437 = vpop.f32.mrf.mxu0
    %v3438 = vadd.f32 %v3386, %v3437
    %3439 = vdwg.mxu0
    %v3441 = vrot.slane %v3346, 1
    %v3442 = vrot.slane %v3346, 2
    %v3443 = vrot.slane %v3346, 3
    %3447 = vst.msk [vmem:[#allocation2] sm:$0x1] %vm1419, %v3346
    %3448 = vst.msk [vmem:[#allocation2 + $0x2] sm:$0x1] %vm1419, %v3441
    %3449 = vst.msk [vmem:[#allocation2 + $0x4] sm:$0x1] %vm1419, %v3442
    %3450 = vst.msk [vmem:[#allocation2 + $0x6] sm:$0x1] %vm1419, %v3443
    %v3452 = vrot.slane %v3412, 1
    %v3453 = vrot.slane %v3412, 2
    %v3454 = vrot.slane %v3412, 3
    %3458 = vst.msk [vmem:[#allocation3] sm:$0x1] %vm1419, %v3412
    %3459 = vst.msk [vmem:[#allocation3 + $0x2] sm:$0x1] %vm1419, %v3452
    %3460 = vst.msk [vmem:[#allocation3 + $0x4] sm:$0x1] %vm1419, %v3453
    %3461 = vst.msk [vmem:[#allocation3 + $0x6] sm:$0x1] %vm1419, %v3454
    %v3463 = vrot.slane %v3347, 1
    %v3464 = vrot.slane %v3347, 2
    %v3465 = vrot.slane %v3347, 3
    %3469 = vst.msk [vmem:[#allocation2 + $0x1] sm:$0x1] %vm1419, %v3347
    %3470 = vst.msk [vmem:[#allocation2 + $0x3] sm:$0x1] %vm1419, %v3463
    %3471 = vst.msk [vmem:[#allocation2 + $0x5] sm:$0x1] %vm1419, %v3464
    %3472 = vst.msk [vmem:[#allocation2 + $0x7] sm:$0x1] %vm1419, %v3465
    %v3474 = vrot.slane %v3438, 1
    %v3475 = vrot.slane %v3438, 2
    %v3476 = vrot.slane %v3438, 3
    %3480 = vst.msk [vmem:[#allocation3 + $0x1] sm:$0x1] %vm1419, %v3438
    %3481 = vst.msk [vmem:[#allocation3 + $0x3] sm:$0x1] %vm1419, %v3474
    %3482 = vst.msk [vmem:[#allocation3 + $0x5] sm:$0x1] %vm1419, %v3475
    %3483 = vst.msk [vmem:[#allocation3 + $0x7] sm:$0x1] %vm1419, %v3476
    %v3484 = vld [vmem:[#allocation2] sm:$0x3]
    %v3485 = vld [vmem:[#allocation2 + $0x2] sm:$0x3]
    %v3486 = vld [vmem:[#allocation2 + $0x4] sm:$0x3]
    %v3487 = vld [vmem:[#allocation2 + $0x6] sm:$0x3]
    %v3488 = vld [vmem:[#allocation3] sm:$0x3]
    %v3489 = vld [vmem:[#allocation3 + $0x2] sm:$0x3]
    %v3490 = vld [vmem:[#allocation3 + $0x4] sm:$0x3]
    %v3491 = vld [vmem:[#allocation3 + $0x6] sm:$0x3]
    %s3492 = scalar_lea.vmem [#allocation10], 32
    %v3493 = vld [vmem:[%s3492] sm:$0xf]
    %v3494 = vld [vmem:[%s3492 + $0x4] sm:$0xf]
    %v3495 = vld [vmem:[%s3492 + $0x8] sm:$0xf]
    %v3496 = vld [vmem:[%s3492 + $0xc] sm:$0xf]
    %s3497 = scalar_lea.vmem [#allocation10], 48
    %v3498 = vld [vmem:[%s3497] sm:$0xf]
    %v3499 = vld [vmem:[%s3497 + $0x4] sm:$0xf]
    %v3500 = vld [vmem:[%s3497 + $0x8] sm:$0xf]
    %v3501 = vld [vmem:[%s3497 + $0xc] sm:$0xf]
    %v3503 = vsel %vm352, %v3484, 0
    %v3506 = vsel %vm356, %v3493, 0
    %3508 = vmatpush.msra.mxu0 0.0
    %3509 = vmatpush.msra.mxu0 0.0
    %3510 = vmatpush.msra.mxu0 0.0
    %3511 = vmatpush.msra.mxu0 0.0
    %3512 = vmatpush.msra.mxu0 0.0
    %3513 = vmatpush.msra.mxu0 0.0
    %3514 = vmatpush.msra.mxu0 0.0
    %3515 = vmatpush.msra.mxu0 0.0
    %3516 = vmatpush.msra.mxu0 0.0
    %3517 = vmatpush.msra.mxu0 0.0
    %3518 = vmatpush.msra.mxu0 0.0
    %3519 = vmatpush.msra.mxu0 0.0
    %3520 = vmatpush.msra.mxu0 0.0
    %3521 = vmatpush.msra.mxu0 0.0
    %3522 = vmatpush.msra.mxu0 0.0
    %3523 = vmatpush.msra.mxu0 %v3506
    %3524 = vmatmul.f32.gmra.mxu0 %v3503
    %v3525 = vpop.f32.mrf.mxu0
    %v3526 = vadd.f32 0.0, %v3525
    %3527 = vdwg.mxu0
    %v3529 = vsel %vm352, %v3485, 0
    %v3532 = vsel %vm356, %v3494, 0
    %3534 = vmatpush.msra.mxu0 0.0
    %3535 = vmatpush.msra.mxu0 0.0
    %3536 = vmatpush.msra.mxu0 0.0
    %3537 = vmatpush.msra.mxu0 0.0
    %3538 = vmatpush.msra.mxu0 0.0
    %3539 = vmatpush.msra.mxu0 0.0
    %3540 = vmatpush.msra.mxu0 0.0
    %3541 = vmatpush.msra.mxu0 0.0
    %3542 = vmatpush.msra.mxu0 0.0
    %3543 = vmatpush.msra.mxu0 0.0
    %3544 = vmatpush.msra.mxu0 0.0
    %3545 = vmatpush.msra.mxu0 0.0
    %3546 = vmatpush.msra.mxu0 0.0
    %3547 = vmatpush.msra.mxu0 0.0
    %3548 = vmatpush.msra.mxu0 0.0
    %3549 = vmatpush.msra.mxu0 %v3532
    %3550 = vmatmul.f32.gmra.mxu0 %v3529
    %v3551 = vpop.f32.mrf.mxu0
    %v3552 = vadd.f32 0.0, %v3551
    %3553 = vdwg.mxu0
    %v3555 = vsel %vm352, %v3486, 0
    %v3558 = vsel %vm356, %v3495, 0
    %3560 = vmatpush.msra.mxu0 0.0
    %3561 = vmatpush.msra.mxu0 0.0
    %3562 = vmatpush.msra.mxu0 0.0
    %3563 = vmatpush.msra.mxu0 0.0
    %3564 = vmatpush.msra.mxu0 0.0
    %3565 = vmatpush.msra.mxu0 0.0
    %3566 = vmatpush.msra.mxu0 0.0
    %3567 = vmatpush.msra.mxu0 0.0
    %3568 = vmatpush.msra.mxu0 0.0
    %3569 = vmatpush.msra.mxu0 0.0
    %3570 = vmatpush.msra.mxu0 0.0
    %3571 = vmatpush.msra.mxu0 0.0
    %3572 = vmatpush.msra.mxu0 0.0
    %3573 = vmatpush.msra.mxu0 0.0
    %3574 = vmatpush.msra.mxu0 0.0
    %3575 = vmatpush.msra.mxu0 %v3558
    %3576 = vmatmul.f32.gmra.mxu0 %v3555
    %v3577 = vpop.f32.mrf.mxu0
    %v3578 = vadd.f32 0.0, %v3577
    %3579 = vdwg.mxu0
    %v3581 = vsel %vm352, %v3487, 0
    %v3584 = vsel %vm356, %v3496, 0
    %3586 = vmatpush.msra.mxu0 0.0
    %3587 = vmatpush.msra.mxu0 0.0
    %3588 = vmatpush.msra.mxu0 0.0
    %3589 = vmatpush.msra.mxu0 0.0
    %3590 = vmatpush.msra.mxu0 0.0
    %3591 = vmatpush.msra.mxu0 0.0
    %3592 = vmatpush.msra.mxu0 0.0
    %3593 = vmatpush.msra.mxu0 0.0
    %3594 = vmatpush.msra.mxu0 0.0
    %3595 = vmatpush.msra.mxu0 0.0
    %3596 = vmatpush.msra.mxu0 0.0
    %3597 = vmatpush.msra.mxu0 0.0
    %3598 = vmatpush.msra.mxu0 0.0
    %3599 = vmatpush.msra.mxu0 0.0
    %3600 = vmatpush.msra.mxu0 0.0
    %3601 = vmatpush.msra.mxu0 %v3584
    %3602 = vmatmul.f32.gmra.mxu0 %v3581
    %v3603 = vpop.f32.mrf.mxu0
    %v3604 = vadd.f32 0.0, %v3603
    %3605 = vdwg.mxu0
    %v3607 = vsel %vm352, %v3488, 0
    %v3610 = vsel %vm356, %v3498, 0
    %3612 = vmatpush.msra.mxu0 0.0
    %3613 = vmatpush.msra.mxu0 0.0
    %3614 = vmatpush.msra.mxu0 0.0
    %3615 = vmatpush.msra.mxu0 0.0
    %3616 = vmatpush.msra.mxu0 0.0
    %3617 = vmatpush.msra.mxu0 0.0
    %3618 = vmatpush.msra.mxu0 0.0
    %3619 = vmatpush.msra.mxu0 0.0
    %3620 = vmatpush.msra.mxu0 0.0
    %3621 = vmatpush.msra.mxu0 0.0
    %3622 = vmatpush.msra.mxu0 0.0
    %3623 = vmatpush.msra.mxu0 0.0
    %3624 = vmatpush.msra.mxu0 0.0
    %3625 = vmatpush.msra.mxu0 0.0
    %3626 = vmatpush.msra.mxu0 0.0
    %3627 = vmatpush.msra.mxu0 %v3610
    %3628 = vmatmul.f32.gmra.mxu0 %v3607
    %v3629 = vpop.f32.mrf.mxu0
    %v3630 = vadd.f32 0.0, %v3629
    %3631 = vdwg.mxu0
    %v3633 = vsel %vm352, %v3489, 0
    %v3636 = vsel %vm356, %v3499, 0
    %3638 = vmatpush.msra.mxu0 0.0
    %3639 = vmatpush.msra.mxu0 0.0
    %3640 = vmatpush.msra.mxu0 0.0
    %3641 = vmatpush.msra.mxu0 0.0
    %3642 = vmatpush.msra.mxu0 0.0
    %3643 = vmatpush.msra.mxu0 0.0
    %3644 = vmatpush.msra.mxu0 0.0
    %3645 = vmatpush.msra.mxu0 0.0
    %3646 = vmatpush.msra.mxu0 0.0
    %3647 = vmatpush.msra.mxu0 0.0
    %3648 = vmatpush.msra.mxu0 0.0
    %3649 = vmatpush.msra.mxu0 0.0
    %3650 = vmatpush.msra.mxu0 0.0
    %3651 = vmatpush.msra.mxu0 0.0
    %3652 = vmatpush.msra.mxu0 0.0
    %3653 = vmatpush.msra.mxu0 %v3636
    %3654 = vmatmul.f32.gmra.mxu0 %v3633
    %v3655 = vpop.f32.mrf.mxu0
    %v3656 = vadd.f32 0.0, %v3655
    %3657 = vdwg.mxu0
    %v3659 = vsel %vm352, %v3490, 0
    %v3662 = vsel %vm356, %v3500, 0
    %3664 = vmatpush.msra.mxu0 0.0
    %3665 = vmatpush.msra.mxu0 0.0
    %3666 = vmatpush.msra.mxu0 0.0
    %3667 = vmatpush.msra.mxu0 0.0
    %3668 = vmatpush.msra.mxu0 0.0
    %3669 = vmatpush.msra.mxu0 0.0
    %3670 = vmatpush.msra.mxu0 0.0
    %3671 = vmatpush.msra.mxu0 0.0
    %3672 = vmatpush.msra.mxu0 0.0
    %3673 = vmatpush.msra.mxu0 0.0
    %3674 = vmatpush.msra.mxu0 0.0
    %3675 = vmatpush.msra.mxu0 0.0
    %3676 = vmatpush.msra.mxu0 0.0
    %3677 = vmatpush.msra.mxu0 0.0
    %3678 = vmatpush.msra.mxu0 0.0
    %3679 = vmatpush.msra.mxu0 %v3662
    %3680 = vmatmul.f32.gmra.mxu0 %v3659
    %v3681 = vpop.f32.mrf.mxu0
    %v3682 = vadd.f32 0.0, %v3681
    %3683 = vdwg.mxu0
    %v3685 = vsel %vm352, %v3491, 0
    %v3688 = vsel %vm356, %v3501, 0
    %3690 = vmatpush.msra.mxu0 0.0
    %3691 = vmatpush.msra.mxu0 0.0
    %3692 = vmatpush.msra.mxu0 0.0
    %3693 = vmatpush.msra.mxu0 0.0
    %3694 = vmatpush.msra.mxu0 0.0
    %3695 = vmatpush.msra.mxu0 0.0
    %3696 = vmatpush.msra.mxu0 0.0
    %3697 = vmatpush.msra.mxu0 0.0
    %3698 = vmatpush.msra.mxu0 0.0
    %3699 = vmatpush.msra.mxu0 0.0
    %3700 = vmatpush.msra.mxu0 0.0
    %3701 = vmatpush.msra.mxu0 0.0
    %3702 = vmatpush.msra.mxu0 0.0
    %3703 = vmatpush.msra.mxu0 0.0
    %3704 = vmatpush.msra.mxu0 0.0
    %3705 = vmatpush.msra.mxu0 %v3688
    %3706 = vmatmul.f32.gmra.mxu0 %v3685
    %v3707 = vpop.f32.mrf.mxu0
    %v3708 = vadd.f32 0.0, %v3707
    %3709 = vdwg.mxu0
    %v3710 = vsub.f32 %v3526, %v3630
    %v3711 = vsub.f32 %v3552, %v3656
    %v3712 = vsub.f32 %v3578, %v3682
    %v3713 = vsub.f32 %v3604, %v3708
    %3714 = vmatpush.msra.mxu0 0.0
    %3715 = vmatpush.msra.mxu0 0.0
    %3716 = vmatpush.msra.mxu0 0.0
    %3717 = vmatpush.msra.mxu0 0.0
    %3718 = vmatpush.msra.mxu0 0.0
    %3719 = vmatpush.msra.mxu0 0.0
    %3720 = vmatpush.msra.mxu0 0.0
    %3721 = vmatpush.msra.mxu0 0.0
    %3722 = vmatpush.msra.mxu0 0.0
    %3723 = vmatpush.msra.mxu0 0.0
    %3724 = vmatpush.msra.mxu0 0.0
    %3725 = vmatpush.msra.mxu0 0.0
    %3726 = vmatpush.msra.mxu0 0.0
    %3727 = vmatpush.msra.mxu0 0.0
    %3728 = vmatpush.msra.mxu0 0.0
    %3729 = vmatpush.msra.mxu0 %v3506
    %3730 = vmatmul.f32.gmra.mxu0 %v3607
    %v3731 = vpop.f32.mrf.mxu0
    %v3732 = vadd.f32 0.0, %v3731
    %3733 = vdwg.mxu0
    %3734 = vmatpush.msra.mxu0 0.0
    %3735 = vmatpush.msra.mxu0 0.0
    %3736 = vmatpush.msra.mxu0 0.0
    %3737 = vmatpush.msra.mxu0 0.0
    %3738 = vmatpush.msra.mxu0 0.0
    %3739 = vmatpush.msra.mxu0 0.0
    %3740 = vmatpush.msra.mxu0 0.0
    %3741 = vmatpush.msra.mxu0 0.0
    %3742 = vmatpush.msra.mxu0 0.0
    %3743 = vmatpush.msra.mxu0 0.0
    %3744 = vmatpush.msra.mxu0 0.0
    %3745 = vmatpush.msra.mxu0 0.0
    %3746 = vmatpush.msra.mxu0 0.0
    %3747 = vmatpush.msra.mxu0 0.0
    %3748 = vmatpush.msra.mxu0 0.0
    %3749 = vmatpush.msra.mxu0 %v3532
    %3750 = vmatmul.f32.gmra.mxu0 %v3633
    %v3751 = vpop.f32.mrf.mxu0
    %v3752 = vadd.f32 0.0, %v3751
    %3753 = vdwg.mxu0
    %3754 = vmatpush.msra.mxu0 0.0
    %3755 = vmatpush.msra.mxu0 0.0
    %3756 = vmatpush.msra.mxu0 0.0
    %3757 = vmatpush.msra.mxu0 0.0
    %3758 = vmatpush.msra.mxu0 0.0
    %3759 = vmatpush.msra.mxu0 0.0
    %3760 = vmatpush.msra.mxu0 0.0
    %3761 = vmatpush.msra.mxu0 0.0
    %3762 = vmatpush.msra.mxu0 0.0
    %3763 = vmatpush.msra.mxu0 0.0
    %3764 = vmatpush.msra.mxu0 0.0
    %3765 = vmatpush.msra.mxu0 0.0
    %3766 = vmatpush.msra.mxu0 0.0
    %3767 = vmatpush.msra.mxu0 0.0
    %3768 = vmatpush.msra.mxu0 0.0
    %3769 = vmatpush.msra.mxu0 %v3558
    %3770 = vmatmul.f32.gmra.mxu0 %v3659
    %v3771 = vpop.f32.mrf.mxu0
    %v3772 = vadd.f32 0.0, %v3771
    %3773 = vdwg.mxu0
    %3774 = vmatpush.msra.mxu0 0.0
    %3775 = vmatpush.msra.mxu0 0.0
    %3776 = vmatpush.msra.mxu0 0.0
    %3777 = vmatpush.msra.mxu0 0.0
    %3778 = vmatpush.msra.mxu0 0.0
    %3779 = vmatpush.msra.mxu0 0.0
    %3780 = vmatpush.msra.mxu0 0.0
    %3781 = vmatpush.msra.mxu0 0.0
    %3782 = vmatpush.msra.mxu0 0.0
    %3783 = vmatpush.msra.mxu0 0.0
    %3784 = vmatpush.msra.mxu0 0.0
    %3785 = vmatpush.msra.mxu0 0.0
    %3786 = vmatpush.msra.mxu0 0.0
    %3787 = vmatpush.msra.mxu0 0.0
    %3788 = vmatpush.msra.mxu0 0.0
    %3789 = vmatpush.msra.mxu0 %v3584
    %3790 = vmatmul.f32.gmra.mxu0 %v3685
    %v3791 = vpop.f32.mrf.mxu0
    %v3792 = vadd.f32 0.0, %v3791
    %3793 = vdwg.mxu0
    %3794 = vmatpush.msra.mxu0 0.0
    %3795 = vmatpush.msra.mxu0 0.0
    %3796 = vmatpush.msra.mxu0 0.0
    %3797 = vmatpush.msra.mxu0 0.0
    %3798 = vmatpush.msra.mxu0 0.0
    %3799 = vmatpush.msra.mxu0 0.0
    %3800 = vmatpush.msra.mxu0 0.0
    %3801 = vmatpush.msra.mxu0 0.0
    %3802 = vmatpush.msra.mxu0 0.0
    %3803 = vmatpush.msra.mxu0 0.0
    %3804 = vmatpush.msra.mxu0 0.0
    %3805 = vmatpush.msra.mxu0 0.0
    %3806 = vmatpush.msra.mxu0 0.0
    %3807 = vmatpush.msra.mxu0 0.0
    %3808 = vmatpush.msra.mxu0 0.0
    %3809 = vmatpush.msra.mxu0 %v3610
    %3810 = vmatmul.f32.gmra.mxu0 %v3503
    %v3811 = vpop.f32.mrf.mxu0
    %v3812 = vadd.f32 %v3732, %v3811
    %3813 = vdwg.mxu0
    %3814 = vmatpush.msra.mxu0 0.0
    %3815 = vmatpush.msra.mxu0 0.0
    %3816 = vmatpush.msra.mxu0 0.0
    %3817 = vmatpush.msra.mxu0 0.0
    %3818 = vmatpush.msra.mxu0 0.0
    %3819 = vmatpush.msra.mxu0 0.0
    %3820 = vmatpush.msra.mxu0 0.0
    %3821 = vmatpush.msra.mxu0 0.0
    %3822 = vmatpush.msra.mxu0 0.0
    %3823 = vmatpush.msra.mxu0 0.0
    %3824 = vmatpush.msra.mxu0 0.0
    %3825 = vmatpush.msra.mxu0 0.0
    %3826 = vmatpush.msra.mxu0 0.0
    %3827 = vmatpush.msra.mxu0 0.0
    %3828 = vmatpush.msra.mxu0 0.0
    %3829 = vmatpush.msra.mxu0 %v3636
    %3830 = vmatmul.f32.gmra.mxu0 %v3529
    %v3831 = vpop.f32.mrf.mxu0
    %v3832 = vadd.f32 %v3752, %v3831
    %3833 = vdwg.mxu0
    %3834 = vmatpush.msra.mxu0 0.0
    %3835 = vmatpush.msra.mxu0 0.0
    %3836 = vmatpush.msra.mxu0 0.0
    %3837 = vmatpush.msra.mxu0 0.0
    %3838 = vmatpush.msra.mxu0 0.0
    %3839 = vmatpush.msra.mxu0 0.0
    %3840 = vmatpush.msra.mxu0 0.0
    %3841 = vmatpush.msra.mxu0 0.0
    %3842 = vmatpush.msra.mxu0 0.0
    %3843 = vmatpush.msra.mxu0 0.0
    %3844 = vmatpush.msra.mxu0 0.0
    %3845 = vmatpush.msra.mxu0 0.0
    %3846 = vmatpush.msra.mxu0 0.0
    %3847 = vmatpush.msra.mxu0 0.0
    %3848 = vmatpush.msra.mxu0 0.0
    %3849 = vmatpush.msra.mxu0 %v3662
    %3850 = vmatmul.f32.gmra.mxu0 %v3555
    %v3851 = vpop.f32.mrf.mxu0
    %v3852 = vadd.f32 %v3772, %v3851
    %3853 = vdwg.mxu0
    %3854 = vmatpush.msra.mxu0 0.0
    %3855 = vmatpush.msra.mxu0 0.0
    %3856 = vmatpush.msra.mxu0 0.0
    %3857 = vmatpush.msra.mxu0 0.0
    %3858 = vmatpush.msra.mxu0 0.0
    %3859 = vmatpush.msra.mxu0 0.0
    %3860 = vmatpush.msra.mxu0 0.0
    %3861 = vmatpush.msra.mxu0 0.0
    %3862 = vmatpush.msra.mxu0 0.0
    %3863 = vmatpush.msra.mxu0 0.0
    %3864 = vmatpush.msra.mxu0 0.0
    %3865 = vmatpush.msra.mxu0 0.0
    %3866 = vmatpush.msra.mxu0 0.0
    %3867 = vmatpush.msra.mxu0 0.0
    %3868 = vmatpush.msra.mxu0 0.0
    %3869 = vmatpush.msra.mxu0 %v3688
    %3870 = vmatmul.f32.gmra.mxu0 %v3581
    %v3871 = vpop.f32.mrf.mxu0
    %v3872 = vadd.f32 %v3792, %v3871
    %3873 = vdwg.mxu0
    %3874 = vst.msk [vmem:[#allocation4] sm:$0x3] %vm1846, %v3710
    %3875 = vst.msk [vmem:[#allocation4 + $0x2] sm:$0x3] %vm1846, %v3711
    %3876 = vst.msk [vmem:[#allocation4 + $0x4] sm:$0x3] %vm1846, %v3712
    %3877 = vst.msk [vmem:[#allocation4 + $0x6] sm:$0x3] %vm1846, %v3713
    %3878 = vst.msk [vmem:[#allocation5] sm:$0x3] %vm1846, %v3812
    %3879 = vst.msk [vmem:[#allocation5 + $0x2] sm:$0x3] %vm1846, %v3832
    %3880 = vst.msk [vmem:[#allocation5 + $0x4] sm:$0x3] %vm1846, %v3852
    %3881 = vst.msk [vmem:[#allocation5 + $0x6] sm:$0x3] %vm1846, %v3872
    %v3882 = vld [vmem:[#allocation4] sm:$0x1]
    %v3883 = vld [vmem:[#allocation4 + $0x2] sm:$0x1]
    %v3884 = vld [vmem:[#allocation4 + $0x4] sm:$0x1]
    %v3885 = vld [vmem:[#allocation4 + $0x6] sm:$0x1]
    %v3890 = vrot.slane %v3883, 7
    %v3891 = vsel %vm111, %v3890, %v3882
    %v3892 = vrot.slane %v3884, 6
    %v3893 = vsel %vm114, %v3892, %v3891
    %v3894 = vrot.slane %v3885, 5
    %v3895 = vsel %vm117, %v3894, %v3893
    %3897 = vxpose.xlu0.b32.start [1/16] %v3895, 128
    %3898 = vxpose.xlu0.b32.cont [2/16] 0.0, 128
    %3899 = vxpose.xlu0.b32.cont [3/16] 0.0, 128
    %3900 = vxpose.xlu0.b32.cont [4/16] 0.0, 128
    %3901 = vxpose.xlu0.b32.cont [5/16] 0.0, 128
    %3902 = vxpose.xlu0.b32.cont [6/16] 0.0, 128
    %3903 = vxpose.xlu0.b32.cont [7/16] 0.0, 128
    %3904 = vxpose.xlu0.b32.cont [8/16] 0.0, 128
    %3905 = vxpose.xlu0.b32.cont [9/16] 0.0, 128
    %3906 = vxpose.xlu0.b32.cont [10/16] 0.0, 128
    %3907 = vxpose.xlu0.b32.cont [11/16] 0.0, 128
    %3908 = vxpose.xlu0.b32.cont [12/16] 0.0, 128
    %3909 = vxpose.xlu0.b32.cont [13/16] 0.0, 128
    %3910 = vxpose.xlu0.b32.cont [14/16] 0.0, 128
    %3911 = vxpose.xlu0.b32.cont [15/16] 0.0, 128
    %3912 = vxpose.xlu0.b32.end [16/16] 0.0, 128
    %v3913 = vpop.trf.xlu0
    %v3914 = vpop.trf.xlu0
    %v3915 = vpop.trf.xlu0
    %v3916 = vpop.trf.xlu0
    %v3917 = vpop.trf.xlu0
    %v3918 = vpop.trf.xlu0
    %v3919 = vpop.trf.xlu0
    %v3920 = vpop.trf.xlu0
    %v3921 = vpop.trf.xlu0
    %v3922 = vpop.trf.xlu0
    %v3923 = vpop.trf.xlu0
    %v3924 = vpop.trf.xlu0
    %v3925 = vpop.trf.xlu0
    %v3926 = vpop.trf.xlu0
    %v3927 = vpop.trf.xlu0
    %v3928 = vpop.trf.xlu0
    %3929 = vst.msk [vmem:[#allocation6] sm:$0xf] %vm1902, %v3913
    %v3930 = vld [vmem:[#allocation5] sm:$0x1]
    %v3931 = vld [vmem:[#allocation5 + $0x2] sm:$0x1]
    %v3932 = vld [vmem:[#allocation5 + $0x4] sm:$0x1]
    %v3933 = vld [vmem:[#allocation5 + $0x6] sm:$0x1]
    %v3938 = vrot.slane %v3931, 7
    %v3939 = vsel %vm111, %v3938, %v3930
    %v3940 = vrot.slane %v3932, 6
    %v3941 = vsel %vm114, %v3940, %v3939
    %v3942 = vrot.slane %v3933, 5
    %v3943 = vsel %vm117, %v3942, %v3941
    %3945 = vxpose.xlu0.b32.start [1/16] %v3943, 128
    %3946 = vxpose.xlu0.b32.cont [2/16] 0.0, 128
    %3947 = vxpose.xlu0.b32.cont [3/16] 0.0, 128
    %3948 = vxpose.xlu0.b32.cont [4/16] 0.0, 128
    %3949 = vxpose.xlu0.b32.cont [5/16] 0.0, 128
    %3950 = vxpose.xlu0.b32.cont [6/16] 0.0, 128
    %3951 = vxpose.xlu0.b32.cont [7/16] 0.0, 128
    %3952 = vxpose.xlu0.b32.cont [8/16] 0.0, 128
    %3953 = vxpose.xlu0.b32.cont [9/16] 0.0, 128
    %3954 = vxpose.xlu0.b32.cont [10/16] 0.0, 128
    %3955 = vxpose.xlu0.b32.cont [11/16] 0.0, 128
    %3956 = vxpose.xlu0.b32.cont [12/16] 0.0, 128
    %3957 = vxpose.xlu0.b32.cont [13/16] 0.0, 128
    %3958 = vxpose.xlu0.b32.cont [14/16] 0.0, 128
    %3959 = vxpose.xlu0.b32.cont [15/16] 0.0, 128
    %3960 = vxpose.xlu0.b32.end [16/16] 0.0, 128
    %v3961 = vpop.trf.xlu0
    %v3962 = vpop.trf.xlu0
    %v3963 = vpop.trf.xlu0
    %v3964 = vpop.trf.xlu0
    %v3965 = vpop.trf.xlu0
    %v3966 = vpop.trf.xlu0
    %v3967 = vpop.trf.xlu0
    %v3968 = vpop.trf.xlu0
    %v3969 = vpop.trf.xlu0
    %v3970 = vpop.trf.xlu0
    %v3971 = vpop.trf.xlu0
    %v3972 = vpop.trf.xlu0
    %v3973 = vpop.trf.xlu0
    %v3974 = vpop.trf.xlu0
    %v3975 = vpop.trf.xlu0
    %v3976 = vpop.trf.xlu0
    %3978 = vrot.lane.b32.xlu0 %v3961, 4
    %v3979 = vpop.permute.xlu0 %3978
    %3981 = vst.msk [vmem:[#allocation6] sm:$0xf] %vm1955, %v3979
    %v3982 = vld [vmem:[#allocation4 + $0x1] sm:$0x1]
    %v3983 = vld [vmem:[#allocation4 + $0x3] sm:$0x1]
    %v3984 = vld [vmem:[#allocation4 + $0x5] sm:$0x1]
    %v3985 = vld [vmem:[#allocation4 + $0x7] sm:$0x1]
    %v3990 = vrot.slane %v3983, 7
    %v3991 = vsel %vm111, %v3990, %v3982
    %v3992 = vrot.slane %v3984, 6
    %v3993 = vsel %vm114, %v3992, %v3991
    %v3994 = vrot.slane %v3985, 5
    %v3995 = vsel %vm117, %v3994, %v3993
    %3997 = vxpose.xlu0.b32.start [1/16] %v3995, 128
    %3998 = vxpose.xlu0.b32.cont [2/16] 0.0, 128
    %3999 = vxpose.xlu0.b32.cont [3/16] 0.0, 128
    %4000 = vxpose.xlu0.b32.cont [4/16] 0.0, 128
    %4001 = vxpose.xlu0.b32.cont [5/16] 0.0, 128
    %4002 = vxpose.xlu0.b32.cont [6/16] 0.0, 128
    %4003 = vxpose.xlu0.b32.cont [7/16] 0.0, 128
    %4004 = vxpose.xlu0.b32.cont [8/16] 0.0, 128
    %4005 = vxpose.xlu0.b32.cont [9/16] 0.0, 128
    %4006 = vxpose.xlu0.b32.cont [10/16] 0.0, 128
    %4007 = vxpose.xlu0.b32.cont [11/16] 0.0, 128
    %4008 = vxpose.xlu0.b32.cont [12/16] 0.0, 128
    %4009 = vxpose.xlu0.b32.cont [13/16] 0.0, 128
    %4010 = vxpose.xlu0.b32.cont [14/16] 0.0, 128
    %4011 = vxpose.xlu0.b32.cont [15/16] 0.0, 128
    %4012 = vxpose.xlu0.b32.end [16/16] 0.0, 128
    %v4013 = vpop.trf.xlu0
    %v4014 = vpop.trf.xlu0
    %v4015 = vpop.trf.xlu0
    %v4016 = vpop.trf.xlu0
    %v4017 = vpop.trf.xlu0
    %v4018 = vpop.trf.xlu0
    %v4019 = vpop.trf.xlu0
    %v4020 = vpop.trf.xlu0
    %v4021 = vpop.trf.xlu0
    %v4022 = vpop.trf.xlu0
    %v4023 = vpop.trf.xlu0
    %v4024 = vpop.trf.xlu0
    %v4025 = vpop.trf.xlu0
    %v4026 = vpop.trf.xlu0
    %v4027 = vpop.trf.xlu0
    %v4028 = vpop.trf.xlu0
    %4029 = vst.msk [vmem:[%s2004] sm:$0xf] %vm1902, %v4013
    %v4030 = vld [vmem:[#allocation5 + $0x1] sm:$0x1]
    %v4031 = vld [vmem:[#allocation5 + $0x3] sm:$0x1]
    %v4032 = vld [vmem:[#allocation5 + $0x5] sm:$0x1]
    %v4033 = vld [vmem:[#allocation5 + $0x7] sm:$0x1]
    %v4038 = vrot.slane %v4031, 7
    %v4039 = vsel %vm111, %v4038, %v4030
    %v4040 = vrot.slane %v4032, 6
    %v4041 = vsel %vm114, %v4040, %v4039
    %v4042 = vrot.slane %v4033, 5
    %v4043 = vsel %vm117, %v4042, %v4041
    %4045 = vxpose.xlu0.b32.start [1/16] %v4043, 128
    %4046 = vxpose.xlu0.b32.cont [2/16] 0.0, 128
    %4047 = vxpose.xlu0.b32.cont [3/16] 0.0, 128
    %4048 = vxpose.xlu0.b32.cont [4/16] 0.0, 128
    %4049 = vxpose.xlu0.b32.cont [5/16] 0.0, 128
    %4050 = vxpose.xlu0.b32.cont [6/16] 0.0, 128
    %4051 = vxpose.xlu0.b32.cont [7/16] 0.0, 128
    %4052 = vxpose.xlu0.b32.cont [8/16] 0.0, 128
    %4053 = vxpose.xlu0.b32.cont [9/16] 0.0, 128
    %4054 = vxpose.xlu0.b32.cont [10/16] 0.0, 128
    %4055 = vxpose.xlu0.b32.cont [11/16] 0.0, 128
    %4056 = vxpose.xlu0.b32.cont [12/16] 0.0, 128
    %4057 = vxpose.xlu0.b32.cont [13/16] 0.0, 128
    %4058 = vxpose.xlu0.b32.cont [14/16] 0.0, 128
    %4059 = vxpose.xlu0.b32.cont [15/16] 0.0, 128
    %4060 = vxpose.xlu0.b32.end [16/16] 0.0, 128
    %v4061 = vpop.trf.xlu0
    %v4062 = vpop.trf.xlu0
    %v4063 = vpop.trf.xlu0
    %v4064 = vpop.trf.xlu0
    %v4065 = vpop.trf.xlu0
    %v4066 = vpop.trf.xlu0
    %v4067 = vpop.trf.xlu0
    %v4068 = vpop.trf.xlu0
    %v4069 = vpop.trf.xlu0
    %v4070 = vpop.trf.xlu0
    %v4071 = vpop.trf.xlu0
    %v4072 = vpop.trf.xlu0
    %v4073 = vpop.trf.xlu0
    %v4074 = vpop.trf.xlu0
    %v4075 = vpop.trf.xlu0
    %v4076 = vpop.trf.xlu0
    %4078 = vrot.lane.b32.xlu0 %v4061, 4
    %v4079 = vpop.permute.xlu0 %4078
    %4081 = vst.msk [vmem:[%s2004] sm:$0xf] %vm1955, %v4079
    %v4082 = vld [vmem:[#allocation6] sm:$0xf]
    %v4083 = vld [vmem:[#allocation6 + $0x4] sm:$0xf]
    %4086 = vst [vmem:[#allocation1] ss:$2 sm:$0xff] %v4082
    %s4087 = scalar_lea.vmem [#allocation1], 1
    %4088 = vst [vmem:[%s4087] ss:$2 sm:$0xff] %v4083
    %v4089 = vld.sshfl [vmem:[#allocation1] sm:$0xff pattern:$0x75316420]
    %v4091 = vpack.c.bf16 %v4089, %v4089
    %v4093 = vsel %vm2068, %v4091, 0
    %4095 = vmatpush.bf16.msra.mxu0 0
    %4096 = vmatpush.bf16.msra.mxu0 0
    %4097 = vmatpush.bf16.msra.mxu0 0
    %4098 = vmatpush.bf16.msra.mxu0 0
    %4099 = vmatpush.bf16.msra.mxu0 0
    %4100 = vmatpush.bf16.msra.mxu0 0
    %4101 = vmatpush.bf16.msra.mxu0 0
    %4102 = vmatpush.bf16.msra.mxu0 %v2073
    %4103 = vmatmul.bf16.gmra.mxu0 %v4093
    %v4104 = vpop.f32.mrf.mxu0
    %v4105 = vadd.f32 0.0, %v4104
    %v4106 = vpop.f32.mrf.mxu0
    %4107 = vdwg.mxu0
    %v4109 = vrot.slane %v4105, 1
    %v4110 = vrot.slane %v4105, 2
    %v4111 = vrot.slane %v4105, 3
    %v4112 = vrot.slane %v4105, 4
    %v4113 = vrot.slane %v4105, 5
    %v4114 = vrot.slane %v4105, 6
    %v4115 = vrot.slane %v4105, 7
    %4123 = vst.msk [vmem:[#allocation12 + $0x1] sm:$0x1] %vm2103, %v4105
    %4124 = vst.msk [vmem:[#allocation12 + $0x3] sm:$0x1] %vm2103, %v4109
    %4125 = vst.msk [vmem:[#allocation12 + $0x5] sm:$0x1] %vm2103, %v4110
    %4126 = vst.msk [vmem:[#allocation12 + $0x7] sm:$0x1] %vm2103, %v4111
    %4127 = vst.msk [vmem:[#allocation12 + $0x9] sm:$0x1] %vm2103, %v4112
    %4128 = vst.msk [vmem:[#allocation12 + $0xb] sm:$0x1] %vm2103, %v4113
    %4129 = vst.msk [vmem:[#allocation12 + $0xd] sm:$0x1] %vm2103, %v4114
    %4130 = vst.msk [vmem:[#allocation12 + $0xf] sm:$0x1] %vm2103, %v4115
    // Predicated region
    $region34: #{tpu_custom_call.1} parent=1 // pred_check
      _
    $region35: #{tpu_custom_call.1} parent=1 // pred_check_branch
      %4132 = sbr.rel (0) target = $region37
    $region36: #{tpu_custom_call.1} parent=1 // pred_region
      %4134 = vsyncadd [#allocation9], 0
      %s4135 = sshll.u32 [#allocation12], 4
      %s4136 = int_to_ptr.vmem [resolvable:$true] %s4135
      %s4137 = sshll.u32 %s6, 4
      %s4138 = int_to_ptr.hbm [resolvable:$true] %s4137
      %4143 = dma.vmem_to_hbm [thread:$0]  %s4136, 256, %s4138, [#allocation9], 32, 32, 2
    $region37: #{tpu_custom_call.1} parent=1 // pred_fallthru
      _
    // Predicated region
    $region38: #{tpu_custom_call.1} parent=1 // pred_check
      _
    $region39: #{tpu_custom_call.1} parent=1 // pred_check_branch
      %4145 = sbr.rel (0) target = $region41
    $region40: #{tpu_custom_call.1} parent=1 // pred_region
      %4147 = dma.done [#allocation9], 256
    $region41: #{tpu_custom_call.1} parent=1 // pred_fallthru
      _
    %4148 = vsyncpa [#allocation8], 1
    %4149 = vsyncpa [#allocation11], 1
    %4150 = vsyncpa [#allocation9], 1

</llo_original>
